<compile_context>
chip_gen: v6e
topology: v6e:2x2x1
jax: 0.10.0
libtpu: 0.0.40
codegen_flags: <defaults>
</compile_context>

<pallas_src>
import jax
import jax.numpy as jnp
from jax import lax
from jax.experimental import pallas as pl
from jax.experimental.pallas import tpu as pltpu


_UNROLL_MAX_LEN = 32


def _make_fused_kernel(L, Bb, E, H2, T, unroll):
    """Masked BiLSTM + Linear + CRF Viterbi decode for one (Bb-row) batch block."""
    G = 4 * H2            # gates per direction (i, f, g, o)
    G2 = 2 * G            # both directions
    H = 2 * H2            # concatenated hidden

    def rows(i):
        base = i * Bb
        if not isinstance(base, int):
            base = pl.multiple_of(base, Bb)
        return pl.ds(base, Bb)

    def lstm_step(gx, h_cat, c_f, c_b, whh):
        # gx: (Bb, 2G) precomputed input gates [fwd i f g o | bwd i f g o].
        # Single block-diagonal recurrent matmul for both directions.
        gates = gx + jnp.dot(h_cat, whh, preferred_element_type=jnp.float32)
        # Full-width EUP passes over the whole gate slab, then lane slices.
        sig = jax.nn.sigmoid(gates)
        th = jnp.tanh(gates)
        c_f_new = sig[:, H2:2 * H2] * c_f + sig[:, 0:H2] * th[:, 2 * H2:3 * H2]
        c_b_new = (sig[:, G + H2:G + 2 * H2] * c_b
                   + sig[:, G:G + H2] * th[:, G + 2 * H2:G + 3 * H2])
        h_f_new = sig[:, 3 * H2:G] * jnp.tanh(c_f_new)
        h_b_new = sig[:, G + 3 * H2:G2] * jnp.tanh(c_b_new)
        return h_f_new, c_f_new, h_b_new, c_b_new

    def kernel(x_ref, m_ref, seq_end_ref,
               wih_ref, ball_ref, whh_ref, wlf_ref, wlb_ref, blin_ref,
               start_ref, end_ref, transT_ref,
               emis_ref, tags_ref, *scratch):
        whh = whh_ref[...]                                   # (2*H2, 2*G) block-diag

        # ----- hoisted input projection (both directions, biases folded) -----
        x2d = x_ref[...].reshape(L * Bb, E)
        gall = (jnp.dot(x2d, wih_ref[...], preferred_element_type=jnp.float32)
                + ball_ref[...])                             # (L*Bb, 2*G)

        zeros_h = jnp.zeros((Bb, H2), jnp.float32)

        if unroll:
            # Fused fwd/bwd recurrence, per-step outputs kept in registers.
            h_f = c_f = h_b = c_b = zeros_h
            h_cat = jnp.zeros((Bb, H), jnp.float32)
            hf_out = [None] * L
            hb_out = [None] * L
            for s in range(L):
                tb = L - 1 - s
                mf = m_ref[s] > 0.5                          # (Bb, 1)
                mb = m_ref[tb] > 0.5
                gx = jnp.concatenate(
                    [gall[s * Bb:(s + 1) * Bb, :G],
                     gall[tb * Bb:(tb + 1) * Bb, G:]], axis=1)
                h_f_new, c_f_new, h_b_new, c_b_new = lstm_step(gx, h_cat, c_f, c_b, whh)
                hf_out[s] = jnp.where(mf, h_f_new, 0.0)      # padded steps emit 0
                hb_out[tb] = jnp.where(mb, h_b_new, 0.0)
                h_f = jnp.where(mf, h_f_new, h_f)
                c_f = jnp.where(mf, c_f_new, c_f)
                h_b = jnp.where(mb, h_b_new, h_b)
                c_b = jnp.where(mb, c_b_new, c_b)
                h_cat = jnp.concatenate([h_f, h_b], axis=1)
            hf_all = jnp.concatenate(hf_out, axis=0)         # (L*Bb, H2), stored once
            hb_all = jnp.concatenate(hb_out, axis=0)
        else:
            gall_s, hf_s, hb_s, hist_s = scratch
            gall_s[...] = gall                               # one dense 128-lane store

            def step(s, carry):
                h_f, c_f, h_b, c_b = carry
                tb = L - 1 - s
                mf = m_ref[s] > 0.5
                mb = m_ref[tb] > 0.5
                ga = gall_s[rows(s), :]
                gb = gall_s[rows(tb), :]
                gx = jnp.concatenate([ga[:, :G], gb[:, G:]], axis=1)
                h_cat = jnp.concatenate([h_f, h_b], axis=1)
                h_f_new, c_f_new, h_b_new, c_b_new = lstm_step(gx, h_cat, c_f, c_b, whh)
                hf_s[rows(s), :] = jnp.where(mf, h_f_new, 0.0)
                hb_s[rows(tb), :] = jnp.where(mb, h_b_new, 0.0)
                return (jnp.where(mf, h_f_new, h_f), jnp.where(mf, c_f_new, c_f),
                        jnp.where(mb, h_b_new, h_b), jnp.where(mb, c_b_new, c_b))

            lax.fori_loop(0, L, step, (zeros_h, zeros_h, zeros_h, zeros_h))
            hf_all = hf_s[...]
            hb_all = hb_s[...]

        # ----- output Linear on concat([h_fwd, h_bwd]) in split-weight form -----
        out2d = (jnp.dot(hf_all, wlf_ref[...], preferred_element_type=jnp.float32)
                 + jnp.dot(hb_all, wlb_ref[...], preferred_element_type=jnp.float32)
                 + blin_ref[...])                            # (L*Bb, T)
        emis_ref[...] = out2d.reshape(L, Bb, T)

        # ---------------------- CRF Viterbi decode (fused) ----------------------
        transT = transT_ref[...]                             # transT[k, j] = trans[j, k]
        seq_end = seq_end_ref[...]                           # (Bb, 1) length-1 (-1 pad)
        iota3 = lax.broadcasted_iota(jnp.int32, (Bb, T, T), 2)
        lane_T = lax.broadcasted_iota(jnp.int32, (Bb, T), 1)
        neg1 = jnp.full((Bb, 1), -1, jnp.int32)

        def viterbi_fwd(score, emis_i, m_i):
            # cand[b, k, j] = score[b, j] + trans[j, k]; max/first-argmax over last axis.
            cand = score[:, None, :] + transT[None, :, :]    # (Bb, T, T)
            best = jnp.max(cand, axis=-1)                    # (Bb, T)
            idx = jnp.min(jnp.where(cand >= best[:, :, None], iota3, T), axis=-1)
            return jnp.where(m_i > 0.5, best + emis_i, score), idx

        if unroll:
            emis = [out2d[t * Bb:(t + 1) * Bb, :] for t in range(L)]
            score = start_ref[...] + emis[0]
            hist = [None] * L
            for i in range(1, L):
                score, hist[i] = viterbi_fwd(score, emis[i], m_ref[i])
            final = score + end_ref[...]
            best_val = jnp.max(final, axis=1, keepdims=True)
            best_last = jnp.min(jnp.where(final >= best_val, lane_T, T),
                                axis=1, keepdims=True)       # (Bb, 1) int32
            cols = [None] * L
            tag_next = jnp.where(seq_end == (L - 1), best_last, neg1)
            cols[L - 1] = tag_next
            for t in range(L - 2, -1, -1):
                gathered = jnp.sum(jnp.where(lane_T == tag_next, hist[t + 1], 0),
                                   axis=1, keepdims=True)
                tag_next = jnp.where(seq_end == t, best_last,
                                     jnp.where(t < seq_end, gathered, neg1))
                cols[t] = tag_next
            tags_ref[...] = jnp.concatenate(cols, axis=1)    # single (Bb, L) store
        else:
            def vfwd(i, score):
                score_new, idx = viterbi_fwd(score, emis_ref[i], m_ref[i])
                hist_s[i] = idx
                return score_new

            score = lax.fori_loop(1, L, vfwd, start_ref[...] + emis_ref[0])
            final = score + end_ref[...]
            best_val = jnp.max(final, axis=1, keepdims=True)
            best_last = jnp.min(jnp.where(final >= best_val, lane_T, T),
                                axis=1, keepdims=True)
            lane_L = lax.broadcasted_iota(jnp.int32, (Bb, L), 1)
            tag_last = jnp.where(seq_end == (L - 1), best_last, neg1)
            tags0 = jnp.where(lane_L == (L - 1), tag_last,
                              jnp.full((Bb, L), -1, jnp.int32))

            def vbwd(s, carry):
                tag_next, tags_mat = carry
                t = L - 1 - s
                gathered = jnp.sum(jnp.where(lane_T == tag_next, hist_s[t + 1], 0),
                                   axis=1, keepdims=True)
                tag_t = jnp.where(seq_end == t, best_last,
                                  jnp.where(t < seq_end, gathered, neg1))
                return tag_t, jnp.where(lane_L == t, tag_t, tags_mat)

            _, tags_mat = lax.fori_loop(1, L, vbwd, (tag_last, tags0))
            tags_ref[...] = tags_mat

    return kernel


def _fused_call(embeds_tm, mask_tm, seq_end, p, block_b):
    L, Bp, E = embeds_tm.shape
    assert Bp % block_b == 0
    nb = Bp // block_b
    H2 = p["whh_f"].shape[0]
    G = 4 * H2
    T = p["wlin"].shape[1]

    # Weight prep: fused input projection, block-diagonal recurrent weight,
    # split output Linear, transposed CRF transitions.
    wih_all = jnp.concatenate([p["wih_f"], p["wih_b"]], axis=1)        # (E, 2G)
    b_all = jnp.concatenate([p["b_f"], p["b_b"]], axis=1)              # (1, 2G)
    whh_blk = jnp.zeros((2 * H2, 2 * G), jnp.float32)
    whh_blk = whh_blk.at[:H2, :G].set(p["whh_f"])
    whh_blk = whh_blk.at[H2:, G:].set(p["whh_b"])
    wlin_f = p["wlin"][:H2, :]
    wlin_b = p["wlin"][H2:, :]
    transT = jnp.transpose(p["crf_trans"])

    unroll = L <= _UNROLL_MAX_LEN
    kernel = _make_fused_kernel(L, block_b, E, H2, T, unroll)
    scratch = [] if unroll else [
        pltpu.VMEM((L * block_b, 2 * G), jnp.float32),   # hoisted gates, both dirs
        pltpu.VMEM((L * block_b, H2), jnp.float32),      # fwd hidden outputs
        pltpu.VMEM((L * block_b, H2), jnp.float32),      # bwd hidden outputs
        pltpu.VMEM((L, block_b, T), jnp.int32),          # Viterbi backpointers
    ]

    # Keep per-invocation VMEM within the scoped budget (v7x: 64 MiB physical).
    # TODO(synk): for very long L, chunk the hoisted projection over L (or store
    # it in bf16) instead of relying on a raised vmem limit.
    est = 4 * (3 * L * block_b * (E + 1 + T)              # pipelined in/out blocks
               + L * block_b * (2 * G + 2 * H2 + T)       # gate / hidden slabs
               + E * 2 * G + 4 * H2 * G + 8 * T * T + block_b * (L + 4))
    cparams = dict(dimension_semantics=("parallel",))
    if est > 16 * 1024 * 1024:
        cparams["vmem_limit_bytes"] = int(min(max(2 * est, 32 << 20), 60 << 20))

    return pl.pallas_call(
        kernel,
        out_shape=(jax.ShapeDtypeStruct((L, Bp, T), jnp.float32),
                   jax.ShapeDtypeStruct((Bp, L), jnp.int32)),
        grid=(nb,),
        in_specs=[
            pl.BlockSpec((L, block_b, E), lambda b: (0, b, 0)),   # embeds (time-major)
            pl.BlockSpec((L, block_b, 1), lambda b: (0, b, 0)),   # mask
            pl.BlockSpec((block_b, 1), lambda b: (b, 0)),         # seq_end (len-1)
            pl.BlockSpec((E, 2 * G), lambda b: (0, 0)),           # W_ih both dirs
            pl.BlockSpec((1, 2 * G), lambda b: (0, 0)),           # bias both dirs
            pl.BlockSpec((2 * H2, 2 * G), lambda b: (0, 0)),      # W_hh block-diag
            pl.BlockSpec((H2, T), lambda b: (0, 0)),              # Linear (fwd half)
            pl.BlockSpec((H2, T), lambda b: (0, 0)),              # Linear (bwd half)
            pl.BlockSpec((1, T), lambda b: (0, 0)),               # Linear bias
            pl.BlockSpec((1, T), lambda b: (0, 0)),               # CRF start
            pl.BlockSpec((1, T), lambda b: (0, 0)),               # CRF end
            pl.BlockSpec((T, T), lambda b: (0, 0)),               # CRF trans^T
        ],
        out_specs=(pl.BlockSpec((L, block_b, T), lambda b: (0, b, 0)),
                   pl.BlockSpec((block_b, L), lambda b: (b, 0))),
        scratch_shapes=scratch,
        compiler_params=pltpu.CompilerParams(**cparams),
    )(embeds_tm, mask_tm, seq_end, wih_all, b_all, whh_blk,
      wlin_f, wlin_b, p["blin"], p["crf_start"], p["crf_end"], transT)


def bilstm_crf_forward(sentences, lengths, p, max_len):
    B = sentences.shape[0]
    L = max_len
    # Batch block: multiple of 8, grown up to 64 rows so each serial recurrence
    # step feeds more rows into the MXU; batch padded to a block multiple.
    # TODO(synk): with a single block (nb == 1) the second v7x TensorCore idles;
    # splitting fwd/bwd directions across cores is not implemented.
    block_b = min(64, 8 * ((B + 7) // 8))
    Bp = block_b * ((B + block_b - 1) // block_b)

    # Embedding gather directly in time-major order.
    sent_tm = jnp.transpose(sentences, (1, 0))                           # (L, B)
    embeds_tm = jnp.take(p["embedding"], sent_tm, axis=0).astype(jnp.float32)
    lengths = lengths.astype(jnp.int32)
    if Bp != B:
        embeds_tm = jnp.pad(embeds_tm, ((0, 0), (0, Bp - B), (0, 0)))
        lengths_p = jnp.pad(lengths, (0, Bp - B))                        # pad len 0
    else:
        lengths_p = lengths

    mask_tm = (jnp.arange(L, dtype=jnp.int32)[:, None]
               < lengths_p[None, :]).astype(jnp.float32)[:, :, None]     # (L, Bp, 1)
    seq_end = (lengths_p - 1).astype(jnp.int32)[:, None]                 # (Bp, 1)

    emissions_p, tags_p = _fused_call(embeds_tm, mask_tm, seq_end, p, block_b)
    # TODO(synk): torch CRF.decode returns variable-length Python lists; tags are
    # returned here as a (B, max_len) int32 array padded with -1 instead.
    return tags_p[:B], emissions_p[:, :B, :]


if __name__ == "__main__":
    vocab_size, num_tags, embed_dim, hidden_dim, max_len = 50, 5, 16, 32, 8
    B = 2
    H2 = hidden_dim // 2

    key = jax.random.PRNGKey(0)
    ks = jax.random.split(key, 16)
    s = 0.1
    p = {
        "embedding": jax.random.normal(ks[0], (vocab_size, embed_dim), jnp.float32) * s,
        "wih_f": jax.random.normal(ks[1], (embed_dim, 4 * H2), jnp.float32) * s,
        "whh_f": jax.random.normal(ks[2], (H2, 4 * H2), jnp.float32) * s,
        "b_f":   jax.random.normal(ks[3], (1, 4 * H2), jnp.float32) * s,
        "wih_b": jax.random.normal(ks[4], (embed_dim, 4 * H2), jnp.float32) * s,
        "whh_b": jax.random.normal(ks[5], (H2, 4 * H2), jnp.float32) * s,
        "b_b":   jax.random.normal(ks[6], (1, 4 * H2), jnp.float32) * s,
        "wlin":  jax.random.normal(ks[7], (hidden_dim, num_tags), jnp.float32) * s,
        "blin":  jax.random.normal(ks[8], (1, num_tags), jnp.float32) * s,
        "crf_start": jax.random.normal(ks[9], (1, num_tags), jnp.float32) * s,
        "crf_end":   jax.random.normal(ks[10], (1, num_tags), jnp.float32) * s,
        "crf_trans": jax.random.normal(ks[11], (num_tags, num_tags), jnp.float32) * s,
    }

    sentences = jax.random.randint(ks[12], (B, max_len), 0, vocab_size, dtype=jnp.int32)
    lengths = jnp.array([max_len, 5], dtype=jnp.int32)

    fwd = jax.jit(bilstm_crf_forward, static_argnums=(3,))
    tags, emissions = fwd(sentences, lengths, p, max_len)
    jax.block_until_ready((tags, emissions))

    assert tags.shape == (B, max_len) and emissions.shape == (max_len, B, num_tags)
    assert int(jnp.min(tags)) >= -1 and int(jnp.max(tags)) < num_tags
    print("KERNEL_OK")
</pallas_src>

<mosaic_0001>
module attributes {stable_mosaic.version = 11 : i64} {
  func.func @kernel(%arg0: i32, %arg1: memref<8x8x16xf32, #tpu.memory_space<vmem>>, %arg2: memref<8x8x1xf32, #tpu.memory_space<vmem>>, %arg3: memref<8x1xi32, #tpu.memory_space<vmem>>, %arg4: memref<16x128xf32, #tpu.memory_space<vmem>>, %arg5: memref<1x128xf32, #tpu.memory_space<vmem>>, %arg6: memref<32x128xf32, #tpu.memory_space<vmem>>, %arg7: memref<16x5xf32, #tpu.memory_space<vmem>>, %arg8: memref<16x5xf32, #tpu.memory_space<vmem>>, %arg9: memref<1x5xf32, #tpu.memory_space<vmem>>, %arg10: memref<1x5xf32, #tpu.memory_space<vmem>>, %arg11: memref<1x5xf32, #tpu.memory_space<vmem>>, %arg12: memref<5x5xf32, #tpu.memory_space<vmem>>, %arg13: memref<8x8x5xf32, #tpu.memory_space<vmem>>, %arg14: memref<8x8xi32, #tpu.memory_space<vmem>>) attributes {dimension_semantics = [#tpu.dimension_semantics<parallel>], iteration_bounds = array<i64: 1>, scalar_prefetch = 0 : i64, scratch_operands = 0 : i64, tpu.core_type = #tpu.core_type<tc>, window_params = [{transform_indices = @transform_0, window_bounds = array<i64: 8, 8, 16>}, {transform_indices = @transform_1, window_bounds = array<i64: 8, 8, 1>}, {transform_indices = @transform_2, window_bounds = array<i64: 8, 1>}, {pipeline_mode = #tpu.pipeline_mode<synchronous>, transform_indices = @transform_3, window_bounds = array<i64: 16, 128>}, {pipeline_mode = #tpu.pipeline_mode<synchronous>, transform_indices = @transform_4, window_bounds = array<i64: 1, 128>}, {pipeline_mode = #tpu.pipeline_mode<synchronous>, transform_indices = @transform_5, window_bounds = array<i64: 32, 128>}, {pipeline_mode = #tpu.pipeline_mode<synchronous>, transform_indices = @transform_6, window_bounds = array<i64: 16, 5>}, {pipeline_mode = #tpu.pipeline_mode<synchronous>, transform_indices = @transform_7, window_bounds = array<i64: 16, 5>}, {pipeline_mode = #tpu.pipeline_mode<synchronous>, transform_indices = @transform_8, window_bounds = array<i64: 1, 5>}, {pipeline_mode = #tpu.pipeline_mode<synchronous>, transform_indices = @transform_9, window_bounds = array<i64: 1, 5>}, {pipeline_mode = #tpu.pipeline_mode<synchronous>, transform_indices = @transform_10, window_bounds = array<i64: 1, 5>}, {pipeline_mode = #tpu.pipeline_mode<synchronous>, transform_indices = @transform_11, window_bounds = array<i64: 5, 5>}, {transform_indices = @transform_12, window_bounds = array<i64: 8, 8, 5>}, {transform_indices = @transform_13, window_bounds = array<i64: 8, 8>}]} {
    %c0 = arith.constant 0 : index
    %c0_0 = arith.constant 0 : index
    %0 = vector.load %arg6[%c0, %c0_0] : memref<32x128xf32, #tpu.memory_space<vmem>>, vector<32x128xf32>
    %c0_1 = arith.constant 0 : index
    %c0_2 = arith.constant 0 : index
    %c0_3 = arith.constant 0 : index
    %1 = vector.load %arg1[%c0_1, %c0_2, %c0_3] : memref<8x8x16xf32, #tpu.memory_space<vmem>>, vector<8x8x16xf32>
    %2 = vector.shape_cast %1 : vector<8x8x16xf32> to vector<64x16xf32>
    %c0_4 = arith.constant 0 : index
    %c0_5 = arith.constant 0 : index
    %3 = vector.load %arg4[%c0_4, %c0_5] : memref<16x128xf32, #tpu.memory_space<vmem>>, vector<16x128xf32>
    %cst = arith.constant dense<0.000000e+00> : vector<64x128xf32>
    %4 = tpu.matmul %2, %3, %cst {dimension_numbers = #tpu.dot_dimension_numbers<[1], [0], [0], [1], [0, 0, 1, 1], [], []>} : vector<64x16xf32>, vector<16x128xf32>, vector<64x128xf32> -> vector<64x128xf32>
    %c0_6 = arith.constant 0 : index
    %c0_7 = arith.constant 0 : index
    %5 = vector.load %arg5[%c0_6, %c0_7] : memref<1x128xf32, #tpu.memory_space<vmem>>, vector<1x128xf32>
    %6 = vector.broadcast %5 : vector<1x128xf32> to vector<64x128xf32>
    %7 = arith.addf %4, %6 : vector<64x128xf32>
    %cst_8 = arith.constant 0.000000e+00 : f32
    %8 = vector.broadcast %cst_8 : f32 to vector<8x16xf32>
    %cst_9 = arith.constant 0.000000e+00 : f32
    %9 = vector.broadcast %cst_9 : f32 to vector<8x32xf32>
    %c0_10 = arith.constant 0 : index
    %c0_11 = arith.constant 0 : index
    %c0_12 = arith.constant 0 : index
    %10 = vector.load %arg2[%c0_10, %c0_11, %c0_12] : memref<8x8x1xf32, #tpu.memory_space<vmem>>, vector<1x8x1xf32>
    %11 = vector.shape_cast %10 : vector<1x8x1xf32> to vector<8x1xf32>
    %cst_13 = arith.constant 5.000000e-01 : f32
    %12 = vector.broadcast %cst_13 : f32 to vector<8x1xf32>
    %13 = arith.cmpf ogt, %11, %12 : vector<8x1xf32>
    %c7 = arith.constant 7 : index
    %c0_14 = arith.constant 0 : index
    %c0_15 = arith.constant 0 : index
    %14 = vector.load %arg2[%c7, %c0_14, %c0_15] : memref<8x8x1xf32, #tpu.memory_space<vmem>>, vector<1x8x1xf32>
    %15 = vector.shape_cast %14 : vector<1x8x1xf32> to vector<8x1xf32>
    %cst_16 = arith.constant 5.000000e-01 : f32
    %16 = vector.broadcast %cst_16 : f32 to vector<8x1xf32>
    %17 = arith.cmpf ogt, %15, %16 : vector<8x1xf32>
    %18 = vector.extract_strided_slice %7 {offsets = [0, 0], sizes = [8, 64], strides = [1, 1]} : vector<64x128xf32> to vector<8x64xf32>
    %19 = vector.extract_strided_slice %7 {offsets = [56, 64], sizes = [8, 64], strides = [1, 1]} : vector<64x128xf32> to vector<8x64xf32>
    %20 = tpu.concatenate %18, %19 in 1 : vector<8x64xf32>, vector<8x64xf32> -> vector<8x128xf32>
    %cst_17 = arith.constant dense<0.000000e+00> : vector<8x128xf32>
    %21 = tpu.matmul %9, %0, %cst_17 {dimension_numbers = #tpu.dot_dimension_numbers<[1], [0], [0], [1], [0, 0, 1, 1], [], []>} : vector<8x32xf32>, vector<32x128xf32>, vector<8x128xf32> -> vector<8x128xf32>
    %22 = arith.addf %20, %21 : vector<8x128xf32>
    %23 = arith.negf %22 : vector<8x128xf32>
    %24 = math.exp %23 : vector<8x128xf32>
    %cst_18 = arith.constant 1.000000e+00 : f32
    %25 = vector.broadcast %cst_18 : f32 to vector<8x128xf32>
    %26 = arith.addf %25, %24 : vector<8x128xf32>
    %27 = arith.divf %25, %26 : vector<8x128xf32>
    %28 = math.tanh %22 : vector<8x128xf32>
    %29 = vector.extract_strided_slice %27 {offsets = [0, 16], sizes = [8, 16], strides = [1, 1]} : vector<8x128xf32> to vector<8x16xf32>
    %30 = arith.mulf %29, %8 : vector<8x16xf32>
    %31 = vector.extract_strided_slice %27 {offsets = [0, 0], sizes = [8, 16], strides = [1, 1]} : vector<8x128xf32> to vector<8x16xf32>
    %32 = vector.extract_strided_slice %28 {offsets = [0, 32], sizes = [8, 16], strides = [1, 1]} : vector<8x128xf32> to vector<8x16xf32>
    %33 = arith.mulf %31, %32 : vector<8x16xf32>
    %34 = arith.addf %30, %33 : vector<8x16xf32>
    %35 = vector.extract_strided_slice %27 {offsets = [0, 80], sizes = [8, 16], strides = [1, 1]} : vector<8x128xf32> to vector<8x16xf32>
    %36 = arith.mulf %35, %8 : vector<8x16xf32>
    %37 = vector.extract_strided_slice %27 {offsets = [0, 64], sizes = [8, 16], strides = [1, 1]} : vector<8x128xf32> to vector<8x16xf32>
    %38 = vector.extract_strided_slice %28 {offsets = [0, 96], sizes = [8, 16], strides = [1, 1]} : vector<8x128xf32> to vector<8x16xf32>
    %39 = arith.mulf %37, %38 : vector<8x16xf32>
    %40 = arith.addf %36, %39 : vector<8x16xf32>
    %41 = vector.extract_strided_slice %27 {offsets = [0, 48], sizes = [8, 16], strides = [1, 1]} : vector<8x128xf32> to vector<8x16xf32>
    %42 = math.tanh %34 : vector<8x16xf32>
    %43 = arith.mulf %41, %42 : vector<8x16xf32>
    %44 = vector.extract_strided_slice %27 {offsets = [0, 112], sizes = [8, 16], strides = [1, 1]} : vector<8x128xf32> to vector<8x16xf32>
    %45 = math.tanh %40 : vector<8x16xf32>
    %46 = arith.mulf %44, %45 : vector<8x16xf32>
    %cst_19 = arith.constant 0.000000e+00 : f32
    %47 = vector.shape_cast %13 : vector<8x1xi1> to vector<8x1xi1>
    %48 = vector.broadcast %47 : vector<8x1xi1> to vector<8x16xi1>
    %49 = vector.broadcast %cst_19 : f32 to vector<8x16xf32>
    %50 = arith.select %48, %43, %49 : vector<8x16xi1>, vector<8x16xf32>
    %cst_20 = arith.constant 0.000000e+00 : f32
    %51 = vector.shape_cast %17 : vector<8x1xi1> to vector<8x1xi1>
    %52 = vector.broadcast %51 : vector<8x1xi1> to vector<8x16xi1>
    %53 = vector.broadcast %cst_20 : f32 to vector<8x16xf32>
    %54 = arith.select %52, %46, %53 : vector<8x16xi1>, vector<8x16xf32>
    %55 = vector.shape_cast %13 : vector<8x1xi1> to vector<8x1xi1>
    %56 = vector.broadcast %55 : vector<8x1xi1> to vector<8x16xi1>
    %57 = arith.select %56, %43, %8 : vector<8x16xi1>, vector<8x16xf32>
    %58 = vector.shape_cast %13 : vector<8x1xi1> to vector<8x1xi1>
    %59 = vector.broadcast %58 : vector<8x1xi1> to vector<8x16xi1>
    %60 = arith.select %59, %34, %8 : vector<8x16xi1>, vector<8x16xf32>
    %61 = vector.shape_cast %17 : vector<8x1xi1> to vector<8x1xi1>
    %62 = vector.broadcast %61 : vector<8x1xi1> to vector<8x16xi1>
    %63 = arith.select %62, %46, %8 : vector<8x16xi1>, vector<8x16xf32>
    %64 = vector.shape_cast %17 : vector<8x1xi1> to vector<8x1xi1>
    %65 = vector.broadcast %64 : vector<8x1xi1> to vector<8x16xi1>
    %66 = arith.select %65, %40, %8 : vector<8x16xi1>, vector<8x16xf32>
    %67 = tpu.concatenate %57, %63 in 1 : vector<8x16xf32>, vector<8x16xf32> -> vector<8x32xf32>
    %c1 = arith.constant 1 : index
    %c0_21 = arith.constant 0 : index
    %c0_22 = arith.constant 0 : index
    %68 = vector.load %arg2[%c1, %c0_21, %c0_22] : memref<8x8x1xf32, #tpu.memory_space<vmem>>, vector<1x8x1xf32>
    %69 = vector.shape_cast %68 : vector<1x8x1xf32> to vector<8x1xf32>
    %cst_23 = arith.constant 5.000000e-01 : f32
    %70 = vector.broadcast %cst_23 : f32 to vector<8x1xf32>
    %71 = arith.cmpf ogt, %69, %70 : vector<8x1xf32>
    %c6 = arith.constant 6 : index
    %c0_24 = arith.constant 0 : index
    %c0_25 = arith.constant 0 : index
    %72 = vector.load %arg2[%c6, %c0_24, %c0_25] : memref<8x8x1xf32, #tpu.memory_space<vmem>>, vector<1x8x1xf32>
    %73 = vector.shape_cast %72 : vector<1x8x1xf32> to vector<8x1xf32>
    %cst_26 = arith.constant 5.000000e-01 : f32
    %74 = vector.broadcast %cst_26 : f32 to vector<8x1xf32>
    %75 = arith.cmpf ogt, %73, %74 : vector<8x1xf32>
    %76 = vector.extract_strided_slice %7 {offsets = [8, 0], sizes = [8, 64], strides = [1, 1]} : vector<64x128xf32> to vector<8x64xf32>
    %77 = vector.extract_strided_slice %7 {offsets = [48, 64], sizes = [8, 64], strides = [1, 1]} : vector<64x128xf32> to vector<8x64xf32>
    %78 = tpu.concatenate %76, %77 in 1 : vector<8x64xf32>, vector<8x64xf32> -> vector<8x128xf32>
    %cst_27 = arith.constant dense<0.000000e+00> : vector<8x128xf32>
    %79 = tpu.matmul %67, %0, %cst_27 {dimension_numbers = #tpu.dot_dimension_numbers<[1], [0], [0], [1], [0, 0, 1, 1], [], []>} : vector<8x32xf32>, vector<32x128xf32>, vector<8x128xf32> -> vector<8x128xf32>
    %80 = arith.addf %78, %79 : vector<8x128xf32>
    %81 = arith.negf %80 : vector<8x128xf32>
    %82 = math.exp %81 : vector<8x128xf32>
    %cst_28 = arith.constant 1.000000e+00 : f32
    %83 = vector.broadcast %cst_28 : f32 to vector<8x128xf32>
    %84 = arith.addf %83, %82 : vector<8x128xf32>
    %85 = arith.divf %83, %84 : vector<8x128xf32>
    %86 = math.tanh %80 : vector<8x128xf32>
    %87 = vector.extract_strided_slice %85 {offsets = [0, 16], sizes = [8, 16], strides = [1, 1]} : vector<8x128xf32> to vector<8x16xf32>
    %88 = arith.mulf %87, %60 : vector<8x16xf32>
    %89 = vector.extract_strided_slice %85 {offsets = [0, 0], sizes = [8, 16], strides = [1, 1]} : vector<8x128xf32> to vector<8x16xf32>
    %90 = vector.extract_strided_slice %86 {offsets = [0, 32], sizes = [8, 16], strides = [1, 1]} : vector<8x128xf32> to vector<8x16xf32>
    %91 = arith.mulf %89, %90 : vector<8x16xf32>
    %92 = arith.addf %88, %91 : vector<8x16xf32>
    %93 = vector.extract_strided_slice %85 {offsets = [0, 80], sizes = [8, 16], strides = [1, 1]} : vector<8x128xf32> to vector<8x16xf32>
    %94 = arith.mulf %93, %66 : vector<8x16xf32>
    %95 = vector.extract_strided_slice %85 {offsets = [0, 64], sizes = [8, 16], strides = [1, 1]} : vector<8x128xf32> to vector<8x16xf32>
    %96 = vector.extract_strided_slice %86 {offsets = [0, 96], sizes = [8, 16], strides = [1, 1]} : vector<8x128xf32> to vector<8x16xf32>
    %97 = arith.mulf %95, %96 : vector<8x16xf32>
    %98 = arith.addf %94, %97 : vector<8x16xf32>
    %99 = vector.extract_strided_slice %85 {offsets = [0, 48], sizes = [8, 16], strides = [1, 1]} : vector<8x128xf32> to vector<8x16xf32>
    %100 = math.tanh %92 : vector<8x16xf32>
    %101 = arith.mulf %99, %100 : vector<8x16xf32>
    %102 = vector.extract_strided_slice %85 {offsets = [0, 112], sizes = [8, 16], strides = [1, 1]} : vector<8x128xf32> to vector<8x16xf32>
    %103 = math.tanh %98 : vector<8x16xf32>
    %104 = arith.mulf %102, %103 : vector<8x16xf32>
    %cst_29 = arith.constant 0.000000e+00 : f32
    %105 = vector.shape_cast %71 : vector<8x1xi1> to vector<8x1xi1>
    %106 = vector.broadcast %105 : vector<8x1xi1> to vector<8x16xi1>
    %107 = vector.broadcast %cst_29 : f32 to vector<8x16xf32>
    %108 = arith.select %106, %101, %107 : vector<8x16xi1>, vector<8x16xf32>
    %cst_30 = arith.constant 0.000000e+00 : f32
    %109 = vector.shape_cast %75 : vector<8x1xi1> to vector<8x1xi1>
    %110 = vector.broadcast %109 : vector<8x1xi1> to vector<8x16xi1>
    %111 = vector.broadcast %cst_30 : f32 to vector<8x16xf32>
    %112 = arith.select %110, %104, %111 : vector<8x16xi1>, vector<8x16xf32>
    %113 = vector.shape_cast %71 : vector<8x1xi1> to vector<8x1xi1>
    %114 = vector.broadcast %113 : vector<8x1xi1> to vector<8x16xi1>
    %115 = arith.select %114, %101, %57 : vector<8x16xi1>, vector<8x16xf32>
    %116 = vector.shape_cast %71 : vector<8x1xi1> to vector<8x1xi1>
    %117 = vector.broadcast %116 : vector<8x1xi1> to vector<8x16xi1>
    %118 = arith.select %117, %92, %60 : vector<8x16xi1>, vector<8x16xf32>
    %119 = vector.shape_cast %75 : vector<8x1xi1> to vector<8x1xi1>
    %120 = vector.broadcast %119 : vector<8x1xi1> to vector<8x16xi1>
    %121 = arith.select %120, %104, %63 : vector<8x16xi1>, vector<8x16xf32>
    %122 = vector.shape_cast %75 : vector<8x1xi1> to vector<8x1xi1>
    %123 = vector.broadcast %122 : vector<8x1xi1> to vector<8x16xi1>
    %124 = arith.select %123, %98, %66 : vector<8x16xi1>, vector<8x16xf32>
    %125 = tpu.concatenate %115, %121 in 1 : vector<8x16xf32>, vector<8x16xf32> -> vector<8x32xf32>
    %c2 = arith.constant 2 : index
    %c0_31 = arith.constant 0 : index
    %c0_32 = arith.constant 0 : index
    %126 = vector.load %arg2[%c2, %c0_31, %c0_32] : memref<8x8x1xf32, #tpu.memory_space<vmem>>, vector<1x8x1xf32>
    %127 = vector.shape_cast %126 : vector<1x8x1xf32> to vector<8x1xf32>
    %cst_33 = arith.constant 5.000000e-01 : f32
    %128 = vector.broadcast %cst_33 : f32 to vector<8x1xf32>
    %129 = arith.cmpf ogt, %127, %128 : vector<8x1xf32>
    %c5 = arith.constant 5 : index
    %c0_34 = arith.constant 0 : index
    %c0_35 = arith.constant 0 : index
    %130 = vector.load %arg2[%c5, %c0_34, %c0_35] : memref<8x8x1xf32, #tpu.memory_space<vmem>>, vector<1x8x1xf32>
    %131 = vector.shape_cast %130 : vector<1x8x1xf32> to vector<8x1xf32>
    %cst_36 = arith.constant 5.000000e-01 : f32
    %132 = vector.broadcast %cst_36 : f32 to vector<8x1xf32>
    %133 = arith.cmpf ogt, %131, %132 : vector<8x1xf32>
    %134 = vector.extract_strided_slice %7 {offsets = [16, 0], sizes = [8, 64], strides = [1, 1]} : vector<64x128xf32> to vector<8x64xf32>
    %135 = vector.extract_strided_slice %7 {offsets = [40, 64], sizes = [8, 64], strides = [1, 1]} : vector<64x128xf32> to vector<8x64xf32>
    %136 = tpu.concatenate %134, %135 in 1 : vector<8x64xf32>, vector<8x64xf32> -> vector<8x128xf32>
    %cst_37 = arith.constant dense<0.000000e+00> : vector<8x128xf32>
    %137 = tpu.matmul %125, %0, %cst_37 {dimension_numbers = #tpu.dot_dimension_numbers<[1], [0], [0], [1], [0, 0, 1, 1], [], []>} : vector<8x32xf32>, vector<32x128xf32>, vector<8x128xf32> -> vector<8x128xf32>
    %138 = arith.addf %136, %137 : vector<8x128xf32>
    %139 = arith.negf %138 : vector<8x128xf32>
    %140 = math.exp %139 : vector<8x128xf32>
    %cst_38 = arith.constant 1.000000e+00 : f32
    %141 = vector.broadcast %cst_38 : f32 to vector<8x128xf32>
    %142 = arith.addf %141, %140 : vector<8x128xf32>
    %143 = arith.divf %141, %142 : vector<8x128xf32>
    %144 = math.tanh %138 : vector<8x128xf32>
    %145 = vector.extract_strided_slice %143 {offsets = [0, 16], sizes = [8, 16], strides = [1, 1]} : vector<8x128xf32> to vector<8x16xf32>
    %146 = arith.mulf %145, %118 : vector<8x16xf32>
    %147 = vector.extract_strided_slice %143 {offsets = [0, 0], sizes = [8, 16], strides = [1, 1]} : vector<8x128xf32> to vector<8x16xf32>
    %148 = vector.extract_strided_slice %144 {offsets = [0, 32], sizes = [8, 16], strides = [1, 1]} : vector<8x128xf32> to vector<8x16xf32>
    %149 = arith.mulf %147, %148 : vector<8x16xf32>
    %150 = arith.addf %146, %149 : vector<8x16xf32>
    %151 = vector.extract_strided_slice %143 {offsets = [0, 80], sizes = [8, 16], strides = [1, 1]} : vector<8x128xf32> to vector<8x16xf32>
    %152 = arith.mulf %151, %124 : vector<8x16xf32>
    %153 = vector.extract_strided_slice %143 {offsets = [0, 64], sizes = [8, 16], strides = [1, 1]} : vector<8x128xf32> to vector<8x16xf32>
    %154 = vector.extract_strided_slice %144 {offsets = [0, 96], sizes = [8, 16], strides = [1, 1]} : vector<8x128xf32> to vector<8x16xf32>
    %155 = arith.mulf %153, %154 : vector<8x16xf32>
    %156 = arith.addf %152, %155 : vector<8x16xf32>
    %157 = vector.extract_strided_slice %143 {offsets = [0, 48], sizes = [8, 16], strides = [1, 1]} : vector<8x128xf32> to vector<8x16xf32>
    %158 = math.tanh %150 : vector<8x16xf32>
    %159 = arith.mulf %157, %158 : vector<8x16xf32>
    %160 = vector.extract_strided_slice %143 {offsets = [0, 112], sizes = [8, 16], strides = [1, 1]} : vector<8x128xf32> to vector<8x16xf32>
    %161 = math.tanh %156 : vector<8x16xf32>
    %162 = arith.mulf %160, %161 : vector<8x16xf32>
    %cst_39 = arith.constant 0.000000e+00 : f32
    %163 = vector.shape_cast %129 : vector<8x1xi1> to vector<8x1xi1>
    %164 = vector.broadcast %163 : vector<8x1xi1> to vector<8x16xi1>
    %165 = vector.broadcast %cst_39 : f32 to vector<8x16xf32>
    %166 = arith.select %164, %159, %165 : vector<8x16xi1>, vector<8x16xf32>
    %cst_40 = arith.constant 0.000000e+00 : f32
    %167 = vector.shape_cast %133 : vector<8x1xi1> to vector<8x1xi1>
    %168 = vector.broadcast %167 : vector<8x1xi1> to vector<8x16xi1>
    %169 = vector.broadcast %cst_40 : f32 to vector<8x16xf32>
    %170 = arith.select %168, %162, %169 : vector<8x16xi1>, vector<8x16xf32>
    %171 = vector.shape_cast %129 : vector<8x1xi1> to vector<8x1xi1>
    %172 = vector.broadcast %171 : vector<8x1xi1> to vector<8x16xi1>
    %173 = arith.select %172, %159, %115 : vector<8x16xi1>, vector<8x16xf32>
    %174 = vector.shape_cast %129 : vector<8x1xi1> to vector<8x1xi1>
    %175 = vector.broadcast %174 : vector<8x1xi1> to vector<8x16xi1>
    %176 = arith.select %175, %150, %118 : vector<8x16xi1>, vector<8x16xf32>
    %177 = vector.shape_cast %133 : vector<8x1xi1> to vector<8x1xi1>
    %178 = vector.broadcast %177 : vector<8x1xi1> to vector<8x16xi1>
    %179 = arith.select %178, %162, %121 : vector<8x16xi1>, vector<8x16xf32>
    %180 = vector.shape_cast %133 : vector<8x1xi1> to vector<8x1xi1>
    %181 = vector.broadcast %180 : vector<8x1xi1> to vector<8x16xi1>
    %182 = arith.select %181, %156, %124 : vector<8x16xi1>, vector<8x16xf32>
    %183 = tpu.concatenate %173, %179 in 1 : vector<8x16xf32>, vector<8x16xf32> -> vector<8x32xf32>
    %c3 = arith.constant 3 : index
    %c0_41 = arith.constant 0 : index
    %c0_42 = arith.constant 0 : index
    %184 = vector.load %arg2[%c3, %c0_41, %c0_42] : memref<8x8x1xf32, #tpu.memory_space<vmem>>, vector<1x8x1xf32>
    %185 = vector.shape_cast %184 : vector<1x8x1xf32> to vector<8x1xf32>
    %cst_43 = arith.constant 5.000000e-01 : f32
    %186 = vector.broadcast %cst_43 : f32 to vector<8x1xf32>
    %187 = arith.cmpf ogt, %185, %186 : vector<8x1xf32>
    %c4 = arith.constant 4 : index
    %c0_44 = arith.constant 0 : index
    %c0_45 = arith.constant 0 : index
    %188 = vector.load %arg2[%c4, %c0_44, %c0_45] : memref<8x8x1xf32, #tpu.memory_space<vmem>>, vector<1x8x1xf32>
    %189 = vector.shape_cast %188 : vector<1x8x1xf32> to vector<8x1xf32>
    %cst_46 = arith.constant 5.000000e-01 : f32
    %190 = vector.broadcast %cst_46 : f32 to vector<8x1xf32>
    %191 = arith.cmpf ogt, %189, %190 : vector<8x1xf32>
    %192 = vector.extract_strided_slice %7 {offsets = [24, 0], sizes = [8, 64], strides = [1, 1]} : vector<64x128xf32> to vector<8x64xf32>
    %193 = vector.extract_strided_slice %7 {offsets = [32, 64], sizes = [8, 64], strides = [1, 1]} : vector<64x128xf32> to vector<8x64xf32>
    %194 = tpu.concatenate %192, %193 in 1 : vector<8x64xf32>, vector<8x64xf32> -> vector<8x128xf32>
    %cst_47 = arith.constant dense<0.000000e+00> : vector<8x128xf32>
    %195 = tpu.matmul %183, %0, %cst_47 {dimension_numbers = #tpu.dot_dimension_numbers<[1], [0], [0], [1], [0, 0, 1, 1], [], []>} : vector<8x32xf32>, vector<32x128xf32>, vector<8x128xf32> -> vector<8x128xf32>
    %196 = arith.addf %194, %195 : vector<8x128xf32>
    %197 = arith.negf %196 : vector<8x128xf32>
    %198 = math.exp %197 : vector<8x128xf32>
    %cst_48 = arith.constant 1.000000e+00 : f32
    %199 = vector.broadcast %cst_48 : f32 to vector<8x128xf32>
    %200 = arith.addf %199, %198 : vector<8x128xf32>
    %201 = arith.divf %199, %200 : vector<8x128xf32>
    %202 = math.tanh %196 : vector<8x128xf32>
    %203 = vector.extract_strided_slice %201 {offsets = [0, 16], sizes = [8, 16], strides = [1, 1]} : vector<8x128xf32> to vector<8x16xf32>
    %204 = arith.mulf %203, %176 : vector<8x16xf32>
    %205 = vector.extract_strided_slice %201 {offsets = [0, 0], sizes = [8, 16], strides = [1, 1]} : vector<8x128xf32> to vector<8x16xf32>
    %206 = vector.extract_strided_slice %202 {offsets = [0, 32], sizes = [8, 16], strides = [1, 1]} : vector<8x128xf32> to vector<8x16xf32>
    %207 = arith.mulf %205, %206 : vector<8x16xf32>
    %208 = arith.addf %204, %207 : vector<8x16xf32>
    %209 = vector.extract_strided_slice %201 {offsets = [0, 80], sizes = [8, 16], strides = [1, 1]} : vector<8x128xf32> to vector<8x16xf32>
    %210 = arith.mulf %209, %182 : vector<8x16xf32>
    %211 = vector.extract_strided_slice %201 {offsets = [0, 64], sizes = [8, 16], strides = [1, 1]} : vector<8x128xf32> to vector<8x16xf32>
    %212 = vector.extract_strided_slice %202 {offsets = [0, 96], sizes = [8, 16], strides = [1, 1]} : vector<8x128xf32> to vector<8x16xf32>
    %213 = arith.mulf %211, %212 : vector<8x16xf32>
    %214 = arith.addf %210, %213 : vector<8x16xf32>
    %215 = vector.extract_strided_slice %201 {offsets = [0, 48], sizes = [8, 16], strides = [1, 1]} : vector<8x128xf32> to vector<8x16xf32>
    %216 = math.tanh %208 : vector<8x16xf32>
    %217 = arith.mulf %215, %216 : vector<8x16xf32>
    %218 = vector.extract_strided_slice %201 {offsets = [0, 112], sizes = [8, 16], strides = [1, 1]} : vector<8x128xf32> to vector<8x16xf32>
    %219 = math.tanh %214 : vector<8x16xf32>
    %220 = arith.mulf %218, %219 : vector<8x16xf32>
    %cst_49 = arith.constant 0.000000e+00 : f32
    %221 = vector.shape_cast %187 : vector<8x1xi1> to vector<8x1xi1>
    %222 = vector.broadcast %221 : vector<8x1xi1> to vector<8x16xi1>
    %223 = vector.broadcast %cst_49 : f32 to vector<8x16xf32>
    %224 = arith.select %222, %217, %223 : vector<8x16xi1>, vector<8x16xf32>
    %cst_50 = arith.constant 0.000000e+00 : f32
    %225 = vector.shape_cast %191 : vector<8x1xi1> to vector<8x1xi1>
    %226 = vector.broadcast %225 : vector<8x1xi1> to vector<8x16xi1>
    %227 = vector.broadcast %cst_50 : f32 to vector<8x16xf32>
    %228 = arith.select %226, %220, %227 : vector<8x16xi1>, vector<8x16xf32>
    %229 = vector.shape_cast %187 : vector<8x1xi1> to vector<8x1xi1>
    %230 = vector.broadcast %229 : vector<8x1xi1> to vector<8x16xi1>
    %231 = arith.select %230, %217, %173 : vector<8x16xi1>, vector<8x16xf32>
    %232 = vector.shape_cast %187 : vector<8x1xi1> to vector<8x1xi1>
    %233 = vector.broadcast %232 : vector<8x1xi1> to vector<8x16xi1>
    %234 = arith.select %233, %208, %176 : vector<8x16xi1>, vector<8x16xf32>
    %235 = vector.shape_cast %191 : vector<8x1xi1> to vector<8x1xi1>
    %236 = vector.broadcast %235 : vector<8x1xi1> to vector<8x16xi1>
    %237 = arith.select %236, %220, %179 : vector<8x16xi1>, vector<8x16xf32>
    %238 = vector.shape_cast %191 : vector<8x1xi1> to vector<8x1xi1>
    %239 = vector.broadcast %238 : vector<8x1xi1> to vector<8x16xi1>
    %240 = arith.select %239, %214, %182 : vector<8x16xi1>, vector<8x16xf32>
    %241 = tpu.concatenate %231, %237 in 1 : vector<8x16xf32>, vector<8x16xf32> -> vector<8x32xf32>
    %c4_51 = arith.constant 4 : index
    %c0_52 = arith.constant 0 : index
    %c0_53 = arith.constant 0 : index
    %242 = vector.load %arg2[%c4_51, %c0_52, %c0_53] : memref<8x8x1xf32, #tpu.memory_space<vmem>>, vector<1x8x1xf32>
    %243 = vector.shape_cast %242 : vector<1x8x1xf32> to vector<8x1xf32>
    %cst_54 = arith.constant 5.000000e-01 : f32
    %244 = vector.broadcast %cst_54 : f32 to vector<8x1xf32>
    %245 = arith.cmpf ogt, %243, %244 : vector<8x1xf32>
    %c3_55 = arith.constant 3 : index
    %c0_56 = arith.constant 0 : index
    %c0_57 = arith.constant 0 : index
    %246 = vector.load %arg2[%c3_55, %c0_56, %c0_57] : memref<8x8x1xf32, #tpu.memory_space<vmem>>, vector<1x8x1xf32>
    %247 = vector.shape_cast %246 : vector<1x8x1xf32> to vector<8x1xf32>
    %cst_58 = arith.constant 5.000000e-01 : f32
    %248 = vector.broadcast %cst_58 : f32 to vector<8x1xf32>
    %249 = arith.cmpf ogt, %247, %248 : vector<8x1xf32>
    %250 = vector.extract_strided_slice %7 {offsets = [32, 0], sizes = [8, 64], strides = [1, 1]} : vector<64x128xf32> to vector<8x64xf32>
    %251 = vector.extract_strided_slice %7 {offsets = [24, 64], sizes = [8, 64], strides = [1, 1]} : vector<64x128xf32> to vector<8x64xf32>
    %252 = tpu.concatenate %250, %251 in 1 : vector<8x64xf32>, vector<8x64xf32> -> vector<8x128xf32>
    %cst_59 = arith.constant dense<0.000000e+00> : vector<8x128xf32>
    %253 = tpu.matmul %241, %0, %cst_59 {dimension_numbers = #tpu.dot_dimension_numbers<[1], [0], [0], [1], [0, 0, 1, 1], [], []>} : vector<8x32xf32>, vector<32x128xf32>, vector<8x128xf32> -> vector<8x128xf32>
    %254 = arith.addf %252, %253 : vector<8x128xf32>
    %255 = arith.negf %254 : vector<8x128xf32>
    %256 = math.exp %255 : vector<8x128xf32>
    %cst_60 = arith.constant 1.000000e+00 : f32
    %257 = vector.broadcast %cst_60 : f32 to vector<8x128xf32>
    %258 = arith.addf %257, %256 : vector<8x128xf32>
    %259 = arith.divf %257, %258 : vector<8x128xf32>
    %260 = math.tanh %254 : vector<8x128xf32>
    %261 = vector.extract_strided_slice %259 {offsets = [0, 16], sizes = [8, 16], strides = [1, 1]} : vector<8x128xf32> to vector<8x16xf32>
    %262 = arith.mulf %261, %234 : vector<8x16xf32>
    %263 = vector.extract_strided_slice %259 {offsets = [0, 0], sizes = [8, 16], strides = [1, 1]} : vector<8x128xf32> to vector<8x16xf32>
    %264 = vector.extract_strided_slice %260 {offsets = [0, 32], sizes = [8, 16], strides = [1, 1]} : vector<8x128xf32> to vector<8x16xf32>
    %265 = arith.mulf %263, %264 : vector<8x16xf32>
    %266 = arith.addf %262, %265 : vector<8x16xf32>
    %267 = vector.extract_strided_slice %259 {offsets = [0, 80], sizes = [8, 16], strides = [1, 1]} : vector<8x128xf32> to vector<8x16xf32>
    %268 = arith.mulf %267, %240 : vector<8x16xf32>
    %269 = vector.extract_strided_slice %259 {offsets = [0, 64], sizes = [8, 16], strides = [1, 1]} : vector<8x128xf32> to vector<8x16xf32>
    %270 = vector.extract_strided_slice %260 {offsets = [0, 96], sizes = [8, 16], strides = [1, 1]} : vector<8x128xf32> to vector<8x16xf32>
    %271 = arith.mulf %269, %270 : vector<8x16xf32>
    %272 = arith.addf %268, %271 : vector<8x16xf32>
    %273 = vector.extract_strided_slice %259 {offsets = [0, 48], sizes = [8, 16], strides = [1, 1]} : vector<8x128xf32> to vector<8x16xf32>
    %274 = math.tanh %266 : vector<8x16xf32>
    %275 = arith.mulf %273, %274 : vector<8x16xf32>
    %276 = vector.extract_strided_slice %259 {offsets = [0, 112], sizes = [8, 16], strides = [1, 1]} : vector<8x128xf32> to vector<8x16xf32>
    %277 = math.tanh %272 : vector<8x16xf32>
    %278 = arith.mulf %276, %277 : vector<8x16xf32>
    %cst_61 = arith.constant 0.000000e+00 : f32
    %279 = vector.shape_cast %245 : vector<8x1xi1> to vector<8x1xi1>
    %280 = vector.broadcast %279 : vector<8x1xi1> to vector<8x16xi1>
    %281 = vector.broadcast %cst_61 : f32 to vector<8x16xf32>
    %282 = arith.select %280, %275, %281 : vector<8x16xi1>, vector<8x16xf32>
    %cst_62 = arith.constant 0.000000e+00 : f32
    %283 = vector.shape_cast %249 : vector<8x1xi1> to vector<8x1xi1>
    %284 = vector.broadcast %283 : vector<8x1xi1> to vector<8x16xi1>
    %285 = vector.broadcast %cst_62 : f32 to vector<8x16xf32>
    %286 = arith.select %284, %278, %285 : vector<8x16xi1>, vector<8x16xf32>
    %287 = vector.shape_cast %245 : vector<8x1xi1> to vector<8x1xi1>
    %288 = vector.broadcast %287 : vector<8x1xi1> to vector<8x16xi1>
    %289 = arith.select %288, %275, %231 : vector<8x16xi1>, vector<8x16xf32>
    %290 = vector.shape_cast %245 : vector<8x1xi1> to vector<8x1xi1>
    %291 = vector.broadcast %290 : vector<8x1xi1> to vector<8x16xi1>
    %292 = arith.select %291, %266, %234 : vector<8x16xi1>, vector<8x16xf32>
    %293 = vector.shape_cast %249 : vector<8x1xi1> to vector<8x1xi1>
    %294 = vector.broadcast %293 : vector<8x1xi1> to vector<8x16xi1>
    %295 = arith.select %294, %278, %237 : vector<8x16xi1>, vector<8x16xf32>
    %296 = vector.shape_cast %249 : vector<8x1xi1> to vector<8x1xi1>
    %297 = vector.broadcast %296 : vector<8x1xi1> to vector<8x16xi1>
    %298 = arith.select %297, %272, %240 : vector<8x16xi1>, vector<8x16xf32>
    %299 = tpu.concatenate %289, %295 in 1 : vector<8x16xf32>, vector<8x16xf32> -> vector<8x32xf32>
    %c5_63 = arith.constant 5 : index
    %c0_64 = arith.constant 0 : index
    %c0_65 = arith.constant 0 : index
    %300 = vector.load %arg2[%c5_63, %c0_64, %c0_65] : memref<8x8x1xf32, #tpu.memory_space<vmem>>, vector<1x8x1xf32>
    %301 = vector.shape_cast %300 : vector<1x8x1xf32> to vector<8x1xf32>
    %cst_66 = arith.constant 5.000000e-01 : f32
    %302 = vector.broadcast %cst_66 : f32 to vector<8x1xf32>
    %303 = arith.cmpf ogt, %301, %302 : vector<8x1xf32>
    %c2_67 = arith.constant 2 : index
    %c0_68 = arith.constant 0 : index
    %c0_69 = arith.constant 0 : index
    %304 = vector.load %arg2[%c2_67, %c0_68, %c0_69] : memref<8x8x1xf32, #tpu.memory_space<vmem>>, vector<1x8x1xf32>
    %305 = vector.shape_cast %304 : vector<1x8x1xf32> to vector<8x1xf32>
    %cst_70 = arith.constant 5.000000e-01 : f32
    %306 = vector.broadcast %cst_70 : f32 to vector<8x1xf32>
    %307 = arith.cmpf ogt, %305, %306 : vector<8x1xf32>
    %308 = vector.extract_strided_slice %7 {offsets = [40, 0], sizes = [8, 64], strides = [1, 1]} : vector<64x128xf32> to vector<8x64xf32>
    %309 = vector.extract_strided_slice %7 {offsets = [16, 64], sizes = [8, 64], strides = [1, 1]} : vector<64x128xf32> to vector<8x64xf32>
    %310 = tpu.concatenate %308, %309 in 1 : vector<8x64xf32>, vector<8x64xf32> -> vector<8x128xf32>
    %cst_71 = arith.constant dense<0.000000e+00> : vector<8x128xf32>
    %311 = tpu.matmul %299, %0, %cst_71 {dimension_numbers = #tpu.dot_dimension_numbers<[1], [0], [0], [1], [0, 0, 1, 1], [], []>} : vector<8x32xf32>, vector<32x128xf32>, vector<8x128xf32> -> vector<8x128xf32>
    %312 = arith.addf %310, %311 : vector<8x128xf32>
    %313 = arith.negf %312 : vector<8x128xf32>
    %314 = math.exp %313 : vector<8x128xf32>
    %cst_72 = arith.constant 1.000000e+00 : f32
    %315 = vector.broadcast %cst_72 : f32 to vector<8x128xf32>
    %316 = arith.addf %315, %314 : vector<8x128xf32>
    %317 = arith.divf %315, %316 : vector<8x128xf32>
    %318 = math.tanh %312 : vector<8x128xf32>
    %319 = vector.extract_strided_slice %317 {offsets = [0, 16], sizes = [8, 16], strides = [1, 1]} : vector<8x128xf32> to vector<8x16xf32>
    %320 = arith.mulf %319, %292 : vector<8x16xf32>
    %321 = vector.extract_strided_slice %317 {offsets = [0, 0], sizes = [8, 16], strides = [1, 1]} : vector<8x128xf32> to vector<8x16xf32>
    %322 = vector.extract_strided_slice %318 {offsets = [0, 32], sizes = [8, 16], strides = [1, 1]} : vector<8x128xf32> to vector<8x16xf32>
    %323 = arith.mulf %321, %322 : vector<8x16xf32>
    %324 = arith.addf %320, %323 : vector<8x16xf32>
    %325 = vector.extract_strided_slice %317 {offsets = [0, 80], sizes = [8, 16], strides = [1, 1]} : vector<8x128xf32> to vector<8x16xf32>
    %326 = arith.mulf %325, %298 : vector<8x16xf32>
    %327 = vector.extract_strided_slice %317 {offsets = [0, 64], sizes = [8, 16], strides = [1, 1]} : vector<8x128xf32> to vector<8x16xf32>
    %328 = vector.extract_strided_slice %318 {offsets = [0, 96], sizes = [8, 16], strides = [1, 1]} : vector<8x128xf32> to vector<8x16xf32>
    %329 = arith.mulf %327, %328 : vector<8x16xf32>
    %330 = arith.addf %326, %329 : vector<8x16xf32>
    %331 = vector.extract_strided_slice %317 {offsets = [0, 48], sizes = [8, 16], strides = [1, 1]} : vector<8x128xf32> to vector<8x16xf32>
    %332 = math.tanh %324 : vector<8x16xf32>
    %333 = arith.mulf %331, %332 : vector<8x16xf32>
    %334 = vector.extract_strided_slice %317 {offsets = [0, 112], sizes = [8, 16], strides = [1, 1]} : vector<8x128xf32> to vector<8x16xf32>
    %335 = math.tanh %330 : vector<8x16xf32>
    %336 = arith.mulf %334, %335 : vector<8x16xf32>
    %cst_73 = arith.constant 0.000000e+00 : f32
    %337 = vector.shape_cast %303 : vector<8x1xi1> to vector<8x1xi1>
    %338 = vector.broadcast %337 : vector<8x1xi1> to vector<8x16xi1>
    %339 = vector.broadcast %cst_73 : f32 to vector<8x16xf32>
    %340 = arith.select %338, %333, %339 : vector<8x16xi1>, vector<8x16xf32>
    %cst_74 = arith.constant 0.000000e+00 : f32
    %341 = vector.shape_cast %307 : vector<8x1xi1> to vector<8x1xi1>
    %342 = vector.broadcast %341 : vector<8x1xi1> to vector<8x16xi1>
    %343 = vector.broadcast %cst_74 : f32 to vector<8x16xf32>
    %344 = arith.select %342, %336, %343 : vector<8x16xi1>, vector<8x16xf32>
    %345 = vector.shape_cast %303 : vector<8x1xi1> to vector<8x1xi1>
    %346 = vector.broadcast %345 : vector<8x1xi1> to vector<8x16xi1>
    %347 = arith.select %346, %333, %289 : vector<8x16xi1>, vector<8x16xf32>
    %348 = vector.shape_cast %303 : vector<8x1xi1> to vector<8x1xi1>
    %349 = vector.broadcast %348 : vector<8x1xi1> to vector<8x16xi1>
    %350 = arith.select %349, %324, %292 : vector<8x16xi1>, vector<8x16xf32>
    %351 = vector.shape_cast %307 : vector<8x1xi1> to vector<8x1xi1>
    %352 = vector.broadcast %351 : vector<8x1xi1> to vector<8x16xi1>
    %353 = arith.select %352, %336, %295 : vector<8x16xi1>, vector<8x16xf32>
    %354 = vector.shape_cast %307 : vector<8x1xi1> to vector<8x1xi1>
    %355 = vector.broadcast %354 : vector<8x1xi1> to vector<8x16xi1>
    %356 = arith.select %355, %330, %298 : vector<8x16xi1>, vector<8x16xf32>
    %357 = tpu.concatenate %347, %353 in 1 : vector<8x16xf32>, vector<8x16xf32> -> vector<8x32xf32>
    %c6_75 = arith.constant 6 : index
    %c0_76 = arith.constant 0 : index
    %c0_77 = arith.constant 0 : index
    %358 = vector.load %arg2[%c6_75, %c0_76, %c0_77] : memref<8x8x1xf32, #tpu.memory_space<vmem>>, vector<1x8x1xf32>
    %359 = vector.shape_cast %358 : vector<1x8x1xf32> to vector<8x1xf32>
    %cst_78 = arith.constant 5.000000e-01 : f32
    %360 = vector.broadcast %cst_78 : f32 to vector<8x1xf32>
    %361 = arith.cmpf ogt, %359, %360 : vector<8x1xf32>
    %c1_79 = arith.constant 1 : index
    %c0_80 = arith.constant 0 : index
    %c0_81 = arith.constant 0 : index
    %362 = vector.load %arg2[%c1_79, %c0_80, %c0_81] : memref<8x8x1xf32, #tpu.memory_space<vmem>>, vector<1x8x1xf32>
    %363 = vector.shape_cast %362 : vector<1x8x1xf32> to vector<8x1xf32>
    %cst_82 = arith.constant 5.000000e-01 : f32
    %364 = vector.broadcast %cst_82 : f32 to vector<8x1xf32>
    %365 = arith.cmpf ogt, %363, %364 : vector<8x1xf32>
    %366 = vector.extract_strided_slice %7 {offsets = [48, 0], sizes = [8, 64], strides = [1, 1]} : vector<64x128xf32> to vector<8x64xf32>
    %367 = vector.extract_strided_slice %7 {offsets = [8, 64], sizes = [8, 64], strides = [1, 1]} : vector<64x128xf32> to vector<8x64xf32>
    %368 = tpu.concatenate %366, %367 in 1 : vector<8x64xf32>, vector<8x64xf32> -> vector<8x128xf32>
    %cst_83 = arith.constant dense<0.000000e+00> : vector<8x128xf32>
    %369 = tpu.matmul %357, %0, %cst_83 {dimension_numbers = #tpu.dot_dimension_numbers<[1], [0], [0], [1], [0, 0, 1, 1], [], []>} : vector<8x32xf32>, vector<32x128xf32>, vector<8x128xf32> -> vector<8x128xf32>
    %370 = arith.addf %368, %369 : vector<8x128xf32>
    %371 = arith.negf %370 : vector<8x128xf32>
    %372 = math.exp %371 : vector<8x128xf32>
    %cst_84 = arith.constant 1.000000e+00 : f32
    %373 = vector.broadcast %cst_84 : f32 to vector<8x128xf32>
    %374 = arith.addf %373, %372 : vector<8x128xf32>
    %375 = arith.divf %373, %374 : vector<8x128xf32>
    %376 = math.tanh %370 : vector<8x128xf32>
    %377 = vector.extract_strided_slice %375 {offsets = [0, 16], sizes = [8, 16], strides = [1, 1]} : vector<8x128xf32> to vector<8x16xf32>
    %378 = arith.mulf %377, %350 : vector<8x16xf32>
    %379 = vector.extract_strided_slice %375 {offsets = [0, 0], sizes = [8, 16], strides = [1, 1]} : vector<8x128xf32> to vector<8x16xf32>
    %380 = vector.extract_strided_slice %376 {offsets = [0, 32], sizes = [8, 16], strides = [1, 1]} : vector<8x128xf32> to vector<8x16xf32>
    %381 = arith.mulf %379, %380 : vector<8x16xf32>
    %382 = arith.addf %378, %381 : vector<8x16xf32>
    %383 = vector.extract_strided_slice %375 {offsets = [0, 80], sizes = [8, 16], strides = [1, 1]} : vector<8x128xf32> to vector<8x16xf32>
    %384 = arith.mulf %383, %356 : vector<8x16xf32>
    %385 = vector.extract_strided_slice %375 {offsets = [0, 64], sizes = [8, 16], strides = [1, 1]} : vector<8x128xf32> to vector<8x16xf32>
    %386 = vector.extract_strided_slice %376 {offsets = [0, 96], sizes = [8, 16], strides = [1, 1]} : vector<8x128xf32> to vector<8x16xf32>
    %387 = arith.mulf %385, %386 : vector<8x16xf32>
    %388 = arith.addf %384, %387 : vector<8x16xf32>
    %389 = vector.extract_strided_slice %375 {offsets = [0, 48], sizes = [8, 16], strides = [1, 1]} : vector<8x128xf32> to vector<8x16xf32>
    %390 = math.tanh %382 : vector<8x16xf32>
    %391 = arith.mulf %389, %390 : vector<8x16xf32>
    %392 = vector.extract_strided_slice %375 {offsets = [0, 112], sizes = [8, 16], strides = [1, 1]} : vector<8x128xf32> to vector<8x16xf32>
    %393 = math.tanh %388 : vector<8x16xf32>
    %394 = arith.mulf %392, %393 : vector<8x16xf32>
    %cst_85 = arith.constant 0.000000e+00 : f32
    %395 = vector.shape_cast %361 : vector<8x1xi1> to vector<8x1xi1>
    %396 = vector.broadcast %395 : vector<8x1xi1> to vector<8x16xi1>
    %397 = vector.broadcast %cst_85 : f32 to vector<8x16xf32>
    %398 = arith.select %396, %391, %397 : vector<8x16xi1>, vector<8x16xf32>
    %cst_86 = arith.constant 0.000000e+00 : f32
    %399 = vector.shape_cast %365 : vector<8x1xi1> to vector<8x1xi1>
    %400 = vector.broadcast %399 : vector<8x1xi1> to vector<8x16xi1>
    %401 = vector.broadcast %cst_86 : f32 to vector<8x16xf32>
    %402 = arith.select %400, %394, %401 : vector<8x16xi1>, vector<8x16xf32>
    %403 = vector.shape_cast %361 : vector<8x1xi1> to vector<8x1xi1>
    %404 = vector.broadcast %403 : vector<8x1xi1> to vector<8x16xi1>
    %405 = arith.select %404, %391, %347 : vector<8x16xi1>, vector<8x16xf32>
    %406 = vector.shape_cast %361 : vector<8x1xi1> to vector<8x1xi1>
    %407 = vector.broadcast %406 : vector<8x1xi1> to vector<8x16xi1>
    %408 = arith.select %407, %382, %350 : vector<8x16xi1>, vector<8x16xf32>
    %409 = vector.shape_cast %365 : vector<8x1xi1> to vector<8x1xi1>
    %410 = vector.broadcast %409 : vector<8x1xi1> to vector<8x16xi1>
    %411 = arith.select %410, %394, %353 : vector<8x16xi1>, vector<8x16xf32>
    %412 = vector.shape_cast %365 : vector<8x1xi1> to vector<8x1xi1>
    %413 = vector.broadcast %412 : vector<8x1xi1> to vector<8x16xi1>
    %414 = arith.select %413, %388, %356 : vector<8x16xi1>, vector<8x16xf32>
    %415 = tpu.concatenate %405, %411 in 1 : vector<8x16xf32>, vector<8x16xf32> -> vector<8x32xf32>
    %c7_87 = arith.constant 7 : index
    %c0_88 = arith.constant 0 : index
    %c0_89 = arith.constant 0 : index
    %416 = vector.load %arg2[%c7_87, %c0_88, %c0_89] : memref<8x8x1xf32, #tpu.memory_space<vmem>>, vector<1x8x1xf32>
    %417 = vector.shape_cast %416 : vector<1x8x1xf32> to vector<8x1xf32>
    %cst_90 = arith.constant 5.000000e-01 : f32
    %418 = vector.broadcast %cst_90 : f32 to vector<8x1xf32>
    %419 = arith.cmpf ogt, %417, %418 : vector<8x1xf32>
    %c0_91 = arith.constant 0 : index
    %c0_92 = arith.constant 0 : index
    %c0_93 = arith.constant 0 : index
    %420 = vector.load %arg2[%c0_91, %c0_92, %c0_93] : memref<8x8x1xf32, #tpu.memory_space<vmem>>, vector<1x8x1xf32>
    %421 = vector.shape_cast %420 : vector<1x8x1xf32> to vector<8x1xf32>
    %cst_94 = arith.constant 5.000000e-01 : f32
    %422 = vector.broadcast %cst_94 : f32 to vector<8x1xf32>
    %423 = arith.cmpf ogt, %421, %422 : vector<8x1xf32>
    %424 = vector.extract_strided_slice %7 {offsets = [56, 0], sizes = [8, 64], strides = [1, 1]} : vector<64x128xf32> to vector<8x64xf32>
    %425 = vector.extract_strided_slice %7 {offsets = [0, 64], sizes = [8, 64], strides = [1, 1]} : vector<64x128xf32> to vector<8x64xf32>
    %426 = tpu.concatenate %424, %425 in 1 : vector<8x64xf32>, vector<8x64xf32> -> vector<8x128xf32>
    %cst_95 = arith.constant dense<0.000000e+00> : vector<8x128xf32>
    %427 = tpu.matmul %415, %0, %cst_95 {dimension_numbers = #tpu.dot_dimension_numbers<[1], [0], [0], [1], [0, 0, 1, 1], [], []>} : vector<8x32xf32>, vector<32x128xf32>, vector<8x128xf32> -> vector<8x128xf32>
    %428 = arith.addf %426, %427 : vector<8x128xf32>
    %429 = arith.negf %428 : vector<8x128xf32>
    %430 = math.exp %429 : vector<8x128xf32>
    %cst_96 = arith.constant 1.000000e+00 : f32
    %431 = vector.broadcast %cst_96 : f32 to vector<8x128xf32>
    %432 = arith.addf %431, %430 : vector<8x128xf32>
    %433 = arith.divf %431, %432 : vector<8x128xf32>
    %434 = math.tanh %428 : vector<8x128xf32>
    %435 = vector.extract_strided_slice %433 {offsets = [0, 16], sizes = [8, 16], strides = [1, 1]} : vector<8x128xf32> to vector<8x16xf32>
    %436 = arith.mulf %435, %408 : vector<8x16xf32>
    %437 = vector.extract_strided_slice %433 {offsets = [0, 0], sizes = [8, 16], strides = [1, 1]} : vector<8x128xf32> to vector<8x16xf32>
    %438 = vector.extract_strided_slice %434 {offsets = [0, 32], sizes = [8, 16], strides = [1, 1]} : vector<8x128xf32> to vector<8x16xf32>
    %439 = arith.mulf %437, %438 : vector<8x16xf32>
    %440 = arith.addf %436, %439 : vector<8x16xf32>
    %441 = vector.extract_strided_slice %433 {offsets = [0, 80], sizes = [8, 16], strides = [1, 1]} : vector<8x128xf32> to vector<8x16xf32>
    %442 = arith.mulf %441, %414 : vector<8x16xf32>
    %443 = vector.extract_strided_slice %433 {offsets = [0, 64], sizes = [8, 16], strides = [1, 1]} : vector<8x128xf32> to vector<8x16xf32>
    %444 = vector.extract_strided_slice %434 {offsets = [0, 96], sizes = [8, 16], strides = [1, 1]} : vector<8x128xf32> to vector<8x16xf32>
    %445 = arith.mulf %443, %444 : vector<8x16xf32>
    %446 = arith.addf %442, %445 : vector<8x16xf32>
    %447 = vector.extract_strided_slice %433 {offsets = [0, 48], sizes = [8, 16], strides = [1, 1]} : vector<8x128xf32> to vector<8x16xf32>
    %448 = math.tanh %440 : vector<8x16xf32>
    %449 = arith.mulf %447, %448 : vector<8x16xf32>
    %450 = vector.extract_strided_slice %433 {offsets = [0, 112], sizes = [8, 16], strides = [1, 1]} : vector<8x128xf32> to vector<8x16xf32>
    %451 = math.tanh %446 : vector<8x16xf32>
    %452 = arith.mulf %450, %451 : vector<8x16xf32>
    %cst_97 = arith.constant 0.000000e+00 : f32
    %453 = vector.shape_cast %419 : vector<8x1xi1> to vector<8x1xi1>
    %454 = vector.broadcast %453 : vector<8x1xi1> to vector<8x16xi1>
    %455 = vector.broadcast %cst_97 : f32 to vector<8x16xf32>
    %456 = arith.select %454, %449, %455 : vector<8x16xi1>, vector<8x16xf32>
    %cst_98 = arith.constant 0.000000e+00 : f32
    %457 = vector.shape_cast %423 : vector<8x1xi1> to vector<8x1xi1>
    %458 = vector.broadcast %457 : vector<8x1xi1> to vector<8x16xi1>
    %459 = vector.broadcast %cst_98 : f32 to vector<8x16xf32>
    %460 = arith.select %458, %452, %459 : vector<8x16xi1>, vector<8x16xf32>
    %461 = tpu.concatenate %50, %108, %166, %224, %282, %340, %398, %456 in 0 : vector<8x16xf32>, vector<8x16xf32>, vector<8x16xf32>, vector<8x16xf32>, vector<8x16xf32>, vector<8x16xf32>, vector<8x16xf32>, vector<8x16xf32> -> vector<64x16xf32>
    %462 = tpu.concatenate %460, %402, %344, %286, %228, %170, %112, %54 in 0 : vector<8x16xf32>, vector<8x16xf32>, vector<8x16xf32>, vector<8x16xf32>, vector<8x16xf32>, vector<8x16xf32>, vector<8x16xf32>, vector<8x16xf32> -> vector<64x16xf32>
    %c0_99 = arith.constant 0 : index
    %c0_100 = arith.constant 0 : index
    %463 = vector.load %arg7[%c0_99, %c0_100] : memref<16x5xf32, #tpu.memory_space<vmem>>, vector<16x5xf32>
    %cst_101 = arith.constant dense<0.000000e+00> : vector<64x5xf32>
    %464 = tpu.matmul %461, %463, %cst_101 {dimension_numbers = #tpu.dot_dimension_numbers<[1], [0], [0], [1], [0, 0, 1, 1], [], []>} : vector<64x16xf32>, vector<16x5xf32>, vector<64x5xf32> -> vector<64x5xf32>
    %c0_102 = arith.constant 0 : index
    %c0_103 = arith.constant 0 : index
    %465 = vector.load %arg8[%c0_102, %c0_103] : memref<16x5xf32, #tpu.memory_space<vmem>>, vector<16x5xf32>
    %cst_104 = arith.constant dense<0.000000e+00> : vector<64x5xf32>
    %466 = tpu.matmul %462, %465, %cst_104 {dimension_numbers = #tpu.dot_dimension_numbers<[1], [0], [0], [1], [0, 0, 1, 1], [], []>} : vector<64x16xf32>, vector<16x5xf32>, vector<64x5xf32> -> vector<64x5xf32>
    %467 = arith.addf %464, %466 : vector<64x5xf32>
    %c0_105 = arith.constant 0 : index
    %c0_106 = arith.constant 0 : index
    %468 = vector.load %arg9[%c0_105, %c0_106] : memref<1x5xf32, #tpu.memory_space<vmem>>, vector<1x5xf32>
    %469 = vector.broadcast %468 : vector<1x5xf32> to vector<64x5xf32>
    %470 = arith.addf %467, %469 : vector<64x5xf32>
    %471 = vector.shape_cast %470 : vector<64x5xf32> to vector<8x8x5xf32>
    %c0_107 = arith.constant 0 : index
    %c0_108 = arith.constant 0 : index
    %c0_109 = arith.constant 0 : index
    %472 = vector.load %arg13[%c0_107, %c0_108, %c0_109] : memref<8x8x5xf32, #tpu.memory_space<vmem>>, vector<8x8x5xf32>
    tpu.vector_store %arg13[%c0_107, %c0_108, %c0_109], %471 {strides = array<i32>} : memref<8x8x5xf32, #tpu.memory_space<vmem>>, vector<8x8x5xf32>,
    %c0_110 = arith.constant 0 : index
    %c0_111 = arith.constant 0 : index
    %473 = vector.load %arg12[%c0_110, %c0_111] : memref<5x5xf32, #tpu.memory_space<vmem>>, vector<5x5xf32>
    %c0_112 = arith.constant 0 : index
    %c0_113 = arith.constant 0 : index
    %474 = vector.load %arg3[%c0_112, %c0_113] : memref<8x1xi32, #tpu.memory_space<vmem>>, vector<8x1xi32>
    %475 = tpu.iota {dimensions = array<i32: 2>} : vector<8x5x5xi32>
    %476 = tpu.iota {dimensions = array<i32: 1>} : vector<8x5xi32>
    %c-1_i32 = arith.constant -1 : i32
    %477 = vector.broadcast %c-1_i32 : i32 to vector<8x1xi32>
    %478 = vector.extract_strided_slice %470 {offsets = [0, 0], sizes = [8, 5], strides = [1, 1]} : vector<64x5xf32> to vector<8x5xf32>
    %479 = vector.extract_strided_slice %470 {offsets = [8, 0], sizes = [8, 5], strides = [1, 1]} : vector<64x5xf32> to vector<8x5xf32>
    %480 = vector.extract_strided_slice %470 {offsets = [16, 0], sizes = [8, 5], strides = [1, 1]} : vector<64x5xf32> to vector<8x5xf32>
    %481 = vector.extract_strided_slice %470 {offsets = [24, 0], sizes = [8, 5], strides = [1, 1]} : vector<64x5xf32> to vector<8x5xf32>
    %482 = vector.extract_strided_slice %470 {offsets = [32, 0], sizes = [8, 5], strides = [1, 1]} : vector<64x5xf32> to vector<8x5xf32>
    %483 = vector.extract_strided_slice %470 {offsets = [40, 0], sizes = [8, 5], strides = [1, 1]} : vector<64x5xf32> to vector<8x5xf32>
    %484 = vector.extract_strided_slice %470 {offsets = [48, 0], sizes = [8, 5], strides = [1, 1]} : vector<64x5xf32> to vector<8x5xf32>
    %485 = vector.extract_strided_slice %470 {offsets = [56, 0], sizes = [8, 5], strides = [1, 1]} : vector<64x5xf32> to vector<8x5xf32>
    %c0_114 = arith.constant 0 : index
    %c0_115 = arith.constant 0 : index
    %486 = vector.load %arg10[%c0_114, %c0_115] : memref<1x5xf32, #tpu.memory_space<vmem>>, vector<1x5xf32>
    %487 = vector.broadcast %486 : vector<1x5xf32> to vector<8x5xf32>
    %488 = arith.addf %487, %478 : vector<8x5xf32>
    %c1_116 = arith.constant 1 : index
    %c0_117 = arith.constant 0 : index
    %c0_118 = arith.constant 0 : index
    %489 = vector.load %arg2[%c1_116, %c0_117, %c0_118] : memref<8x8x1xf32, #tpu.memory_space<vmem>>, vector<1x8x1xf32>
    %490 = vector.shape_cast %489 : vector<1x8x1xf32> to vector<8x1xf32>
    %491 = vector.shape_cast %488 : vector<8x5xf32> to vector<8x1x5xf32>
    %492 = vector.shape_cast %473 : vector<5x5xf32> to vector<1x5x5xf32>
    %493 = vector.broadcast %491 : vector<8x1x5xf32> to vector<8x5x5xf32>
    %494 = vector.broadcast %492 : vector<1x5x5xf32> to vector<8x5x5xf32>
    %495 = arith.addf %493, %494 : vector<8x5x5xf32>
    %cst_119 = arith.constant dense<0xFF800000> : vector<8x5xf32>
    %496 = vector.multi_reduction <maximumf>, %495, %cst_119 [2] : vector<8x5x5xf32> to vector<8x5xf32>
    %497 = vector.shape_cast %496 : vector<8x5xf32> to vector<8x5x1xf32>
    %498 = vector.broadcast %497 : vector<8x5x1xf32> to vector<8x5x5xf32>
    %499 = arith.cmpf oge, %495, %498 : vector<8x5x5xf32>
    %c5_i32 = arith.constant 5 : i32
    %500 = vector.broadcast %c5_i32 : i32 to vector<8x5x5xi32>
    %501 = arith.select %499, %475, %500 : vector<8x5x5xi1>, vector<8x5x5xi32>
    %cst_120 = arith.constant dense<2147483647> : vector<8x5xi32>
    %502 = vector.multi_reduction <minsi>, %501, %cst_120 [2] : vector<8x5x5xi32> to vector<8x5xi32>
    %cst_121 = arith.constant 5.000000e-01 : f32
    %503 = vector.broadcast %cst_121 : f32 to vector<8x1xf32>
    %504 = arith.cmpf ogt, %490, %503 : vector<8x1xf32>
    %505 = arith.addf %496, %479 : vector<8x5xf32>
    %506 = vector.shape_cast %504 : vector<8x1xi1> to vector<8x1xi1>
    %507 = vector.broadcast %506 : vector<8x1xi1> to vector<8x5xi1>
    %508 = arith.select %507, %505, %488 : vector<8x5xi1>, vector<8x5xf32>
    %c2_122 = arith.constant 2 : index
    %c0_123 = arith.constant 0 : index
    %c0_124 = arith.constant 0 : index
    %509 = vector.load %arg2[%c2_122, %c0_123, %c0_124] : memref<8x8x1xf32, #tpu.memory_space<vmem>>, vector<1x8x1xf32>
    %510 = vector.shape_cast %509 : vector<1x8x1xf32> to vector<8x1xf32>
    %511 = vector.shape_cast %508 : vector<8x5xf32> to vector<8x1x5xf32>
    %512 = vector.shape_cast %473 : vector<5x5xf32> to vector<1x5x5xf32>
    %513 = vector.broadcast %511 : vector<8x1x5xf32> to vector<8x5x5xf32>
    %514 = vector.broadcast %512 : vector<1x5x5xf32> to vector<8x5x5xf32>
    %515 = arith.addf %513, %514 : vector<8x5x5xf32>
    %cst_125 = arith.constant dense<0xFF800000> : vector<8x5xf32>
    %516 = vector.multi_reduction <maximumf>, %515, %cst_125 [2] : vector<8x5x5xf32> to vector<8x5xf32>
    %517 = vector.shape_cast %516 : vector<8x5xf32> to vector<8x5x1xf32>
    %518 = vector.broadcast %517 : vector<8x5x1xf32> to vector<8x5x5xf32>
    %519 = arith.cmpf oge, %515, %518 : vector<8x5x5xf32>
    %c5_i32_126 = arith.constant 5 : i32
    %520 = vector.broadcast %c5_i32_126 : i32 to vector<8x5x5xi32>
    %521 = arith.select %519, %475, %520 : vector<8x5x5xi1>, vector<8x5x5xi32>
    %cst_127 = arith.constant dense<2147483647> : vector<8x5xi32>
    %522 = vector.multi_reduction <minsi>, %521, %cst_127 [2] : vector<8x5x5xi32> to vector<8x5xi32>
    %cst_128 = arith.constant 5.000000e-01 : f32
    %523 = vector.broadcast %cst_128 : f32 to vector<8x1xf32>
    %524 = arith.cmpf ogt, %510, %523 : vector<8x1xf32>
    %525 = arith.addf %516, %480 : vector<8x5xf32>
    %526 = vector.shape_cast %524 : vector<8x1xi1> to vector<8x1xi1>
    %527 = vector.broadcast %526 : vector<8x1xi1> to vector<8x5xi1>
    %528 = arith.select %527, %525, %508 : vector<8x5xi1>, vector<8x5xf32>
    %c3_129 = arith.constant 3 : index
    %c0_130 = arith.constant 0 : index
    %c0_131 = arith.constant 0 : index
    %529 = vector.load %arg2[%c3_129, %c0_130, %c0_131] : memref<8x8x1xf32, #tpu.memory_space<vmem>>, vector<1x8x1xf32>
    %530 = vector.shape_cast %529 : vector<1x8x1xf32> to vector<8x1xf32>
    %531 = vector.shape_cast %528 : vector<8x5xf32> to vector<8x1x5xf32>
    %532 = vector.shape_cast %473 : vector<5x5xf32> to vector<1x5x5xf32>
    %533 = vector.broadcast %531 : vector<8x1x5xf32> to vector<8x5x5xf32>
    %534 = vector.broadcast %532 : vector<1x5x5xf32> to vector<8x5x5xf32>
    %535 = arith.addf %533, %534 : vector<8x5x5xf32>
    %cst_132 = arith.constant dense<0xFF800000> : vector<8x5xf32>
    %536 = vector.multi_reduction <maximumf>, %535, %cst_132 [2] : vector<8x5x5xf32> to vector<8x5xf32>
    %537 = vector.shape_cast %536 : vector<8x5xf32> to vector<8x5x1xf32>
    %538 = vector.broadcast %537 : vector<8x5x1xf32> to vector<8x5x5xf32>
    %539 = arith.cmpf oge, %535, %538 : vector<8x5x5xf32>
    %c5_i32_133 = arith.constant 5 : i32
    %540 = vector.broadcast %c5_i32_133 : i32 to vector<8x5x5xi32>
    %541 = arith.select %539, %475, %540 : vector<8x5x5xi1>, vector<8x5x5xi32>
    %cst_134 = arith.constant dense<2147483647> : vector<8x5xi32>
    %542 = vector.multi_reduction <minsi>, %541, %cst_134 [2] : vector<8x5x5xi32> to vector<8x5xi32>
    %cst_135 = arith.constant 5.000000e-01 : f32
    %543 = vector.broadcast %cst_135 : f32 to vector<8x1xf32>
    %544 = arith.cmpf ogt, %530, %543 : vector<8x1xf32>
    %545 = arith.addf %536, %481 : vector<8x5xf32>
    %546 = vector.shape_cast %544 : vector<8x1xi1> to vector<8x1xi1>
    %547 = vector.broadcast %546 : vector<8x1xi1> to vector<8x5xi1>
    %548 = arith.select %547, %545, %528 : vector<8x5xi1>, vector<8x5xf32>
    %c4_136 = arith.constant 4 : index
    %c0_137 = arith.constant 0 : index
    %c0_138 = arith.constant 0 : index
    %549 = vector.load %arg2[%c4_136, %c0_137, %c0_138] : memref<8x8x1xf32, #tpu.memory_space<vmem>>, vector<1x8x1xf32>
    %550 = vector.shape_cast %549 : vector<1x8x1xf32> to vector<8x1xf32>
    %551 = vector.shape_cast %548 : vector<8x5xf32> to vector<8x1x5xf32>
    %552 = vector.shape_cast %473 : vector<5x5xf32> to vector<1x5x5xf32>
    %553 = vector.broadcast %551 : vector<8x1x5xf32> to vector<8x5x5xf32>
    %554 = vector.broadcast %552 : vector<1x5x5xf32> to vector<8x5x5xf32>
    %555 = arith.addf %553, %554 : vector<8x5x5xf32>
    %cst_139 = arith.constant dense<0xFF800000> : vector<8x5xf32>
    %556 = vector.multi_reduction <maximumf>, %555, %cst_139 [2] : vector<8x5x5xf32> to vector<8x5xf32>
    %557 = vector.shape_cast %556 : vector<8x5xf32> to vector<8x5x1xf32>
    %558 = vector.broadcast %557 : vector<8x5x1xf32> to vector<8x5x5xf32>
    %559 = arith.cmpf oge, %555, %558 : vector<8x5x5xf32>
    %c5_i32_140 = arith.constant 5 : i32
    %560 = vector.broadcast %c5_i32_140 : i32 to vector<8x5x5xi32>
    %561 = arith.select %559, %475, %560 : vector<8x5x5xi1>, vector<8x5x5xi32>
    %cst_141 = arith.constant dense<2147483647> : vector<8x5xi32>
    %562 = vector.multi_reduction <minsi>, %561, %cst_141 [2] : vector<8x5x5xi32> to vector<8x5xi32>
    %cst_142 = arith.constant 5.000000e-01 : f32
    %563 = vector.broadcast %cst_142 : f32 to vector<8x1xf32>
    %564 = arith.cmpf ogt, %550, %563 : vector<8x1xf32>
    %565 = arith.addf %556, %482 : vector<8x5xf32>
    %566 = vector.shape_cast %564 : vector<8x1xi1> to vector<8x1xi1>
    %567 = vector.broadcast %566 : vector<8x1xi1> to vector<8x5xi1>
    %568 = arith.select %567, %565, %548 : vector<8x5xi1>, vector<8x5xf32>
    %c5_143 = arith.constant 5 : index
    %c0_144 = arith.constant 0 : index
    %c0_145 = arith.constant 0 : index
    %569 = vector.load %arg2[%c5_143, %c0_144, %c0_145] : memref<8x8x1xf32, #tpu.memory_space<vmem>>, vector<1x8x1xf32>
    %570 = vector.shape_cast %569 : vector<1x8x1xf32> to vector<8x1xf32>
    %571 = vector.shape_cast %568 : vector<8x5xf32> to vector<8x1x5xf32>
    %572 = vector.shape_cast %473 : vector<5x5xf32> to vector<1x5x5xf32>
    %573 = vector.broadcast %571 : vector<8x1x5xf32> to vector<8x5x5xf32>
    %574 = vector.broadcast %572 : vector<1x5x5xf32> to vector<8x5x5xf32>
    %575 = arith.addf %573, %574 : vector<8x5x5xf32>
    %cst_146 = arith.constant dense<0xFF800000> : vector<8x5xf32>
    %576 = vector.multi_reduction <maximumf>, %575, %cst_146 [2] : vector<8x5x5xf32> to vector<8x5xf32>
    %577 = vector.shape_cast %576 : vector<8x5xf32> to vector<8x5x1xf32>
    %578 = vector.broadcast %577 : vector<8x5x1xf32> to vector<8x5x5xf32>
    %579 = arith.cmpf oge, %575, %578 : vector<8x5x5xf32>
    %c5_i32_147 = arith.constant 5 : i32
    %580 = vector.broadcast %c5_i32_147 : i32 to vector<8x5x5xi32>
    %581 = arith.select %579, %475, %580 : vector<8x5x5xi1>, vector<8x5x5xi32>
    %cst_148 = arith.constant dense<2147483647> : vector<8x5xi32>
    %582 = vector.multi_reduction <minsi>, %581, %cst_148 [2] : vector<8x5x5xi32> to vector<8x5xi32>
    %cst_149 = arith.constant 5.000000e-01 : f32
    %583 = vector.broadcast %cst_149 : f32 to vector<8x1xf32>
    %584 = arith.cmpf ogt, %570, %583 : vector<8x1xf32>
    %585 = arith.addf %576, %483 : vector<8x5xf32>
    %586 = vector.shape_cast %584 : vector<8x1xi1> to vector<8x1xi1>
    %587 = vector.broadcast %586 : vector<8x1xi1> to vector<8x5xi1>
    %588 = arith.select %587, %585, %568 : vector<8x5xi1>, vector<8x5xf32>
    %c6_150 = arith.constant 6 : index
    %c0_151 = arith.constant 0 : index
    %c0_152 = arith.constant 0 : index
    %589 = vector.load %arg2[%c6_150, %c0_151, %c0_152] : memref<8x8x1xf32, #tpu.memory_space<vmem>>, vector<1x8x1xf32>
    %590 = vector.shape_cast %589 : vector<1x8x1xf32> to vector<8x1xf32>
    %591 = vector.shape_cast %588 : vector<8x5xf32> to vector<8x1x5xf32>
    %592 = vector.shape_cast %473 : vector<5x5xf32> to vector<1x5x5xf32>
    %593 = vector.broadcast %591 : vector<8x1x5xf32> to vector<8x5x5xf32>
    %594 = vector.broadcast %592 : vector<1x5x5xf32> to vector<8x5x5xf32>
    %595 = arith.addf %593, %594 : vector<8x5x5xf32>
    %cst_153 = arith.constant dense<0xFF800000> : vector<8x5xf32>
    %596 = vector.multi_reduction <maximumf>, %595, %cst_153 [2] : vector<8x5x5xf32> to vector<8x5xf32>
    %597 = vector.shape_cast %596 : vector<8x5xf32> to vector<8x5x1xf32>
    %598 = vector.broadcast %597 : vector<8x5x1xf32> to vector<8x5x5xf32>
    %599 = arith.cmpf oge, %595, %598 : vector<8x5x5xf32>
    %c5_i32_154 = arith.constant 5 : i32
    %600 = vector.broadcast %c5_i32_154 : i32 to vector<8x5x5xi32>
    %601 = arith.select %599, %475, %600 : vector<8x5x5xi1>, vector<8x5x5xi32>
    %cst_155 = arith.constant dense<2147483647> : vector<8x5xi32>
    %602 = vector.multi_reduction <minsi>, %601, %cst_155 [2] : vector<8x5x5xi32> to vector<8x5xi32>
    %cst_156 = arith.constant 5.000000e-01 : f32
    %603 = vector.broadcast %cst_156 : f32 to vector<8x1xf32>
    %604 = arith.cmpf ogt, %590, %603 : vector<8x1xf32>
    %605 = arith.addf %596, %484 : vector<8x5xf32>
    %606 = vector.shape_cast %604 : vector<8x1xi1> to vector<8x1xi1>
    %607 = vector.broadcast %606 : vector<8x1xi1> to vector<8x5xi1>
    %608 = arith.select %607, %605, %588 : vector<8x5xi1>, vector<8x5xf32>
    %c7_157 = arith.constant 7 : index
    %c0_158 = arith.constant 0 : index
    %c0_159 = arith.constant 0 : index
    %609 = vector.load %arg2[%c7_157, %c0_158, %c0_159] : memref<8x8x1xf32, #tpu.memory_space<vmem>>, vector<1x8x1xf32>
    %610 = vector.shape_cast %609 : vector<1x8x1xf32> to vector<8x1xf32>
    %611 = vector.shape_cast %608 : vector<8x5xf32> to vector<8x1x5xf32>
    %612 = vector.shape_cast %473 : vector<5x5xf32> to vector<1x5x5xf32>
    %613 = vector.broadcast %611 : vector<8x1x5xf32> to vector<8x5x5xf32>
    %614 = vector.broadcast %612 : vector<1x5x5xf32> to vector<8x5x5xf32>
    %615 = arith.addf %613, %614 : vector<8x5x5xf32>
    %cst_160 = arith.constant dense<0xFF800000> : vector<8x5xf32>
    %616 = vector.multi_reduction <maximumf>, %615, %cst_160 [2] : vector<8x5x5xf32> to vector<8x5xf32>
    %617 = vector.shape_cast %616 : vector<8x5xf32> to vector<8x5x1xf32>
    %618 = vector.broadcast %617 : vector<8x5x1xf32> to vector<8x5x5xf32>
    %619 = arith.cmpf oge, %615, %618 : vector<8x5x5xf32>
    %c5_i32_161 = arith.constant 5 : i32
    %620 = vector.broadcast %c5_i32_161 : i32 to vector<8x5x5xi32>
    %621 = arith.select %619, %475, %620 : vector<8x5x5xi1>, vector<8x5x5xi32>
    %cst_162 = arith.constant dense<2147483647> : vector<8x5xi32>
    %622 = vector.multi_reduction <minsi>, %621, %cst_162 [2] : vector<8x5x5xi32> to vector<8x5xi32>
    %cst_163 = arith.constant 5.000000e-01 : f32
    %623 = vector.broadcast %cst_163 : f32 to vector<8x1xf32>
    %624 = arith.cmpf ogt, %610, %623 : vector<8x1xf32>
    %625 = arith.addf %616, %485 : vector<8x5xf32>
    %626 = vector.shape_cast %624 : vector<8x1xi1> to vector<8x1xi1>
    %627 = vector.broadcast %626 : vector<8x1xi1> to vector<8x5xi1>
    %628 = arith.select %627, %625, %608 : vector<8x5xi1>, vector<8x5xf32>
    %c0_164 = arith.constant 0 : index
    %c0_165 = arith.constant 0 : index
    %629 = vector.load %arg11[%c0_164, %c0_165] : memref<1x5xf32, #tpu.memory_space<vmem>>, vector<1x5xf32>
    %630 = vector.broadcast %629 : vector<1x5xf32> to vector<8x5xf32>
    %631 = arith.addf %628, %630 : vector<8x5xf32>
    %cst_166 = arith.constant dense<0xFF800000> : vector<8xf32>
    %632 = vector.multi_reduction <maximumf>, %631, %cst_166 [1] : vector<8x5xf32> to vector<8xf32>
    %633 = vector.shape_cast %632 : vector<8xf32> to vector<8x1xf32>
    %634 = vector.broadcast %633 : vector<8x1xf32> to vector<8x5xf32>
    %635 = arith.cmpf oge, %631, %634 : vector<8x5xf32>
    %c5_i32_167 = arith.constant 5 : i32
    %636 = vector.broadcast %c5_i32_167 : i32 to vector<8x5xi32>
    %637 = arith.select %635, %476, %636 : vector<8x5xi1>, vector<8x5xi32>
    %cst_168 = arith.constant dense<2147483647> : vector<8xi32>
    %638 = vector.multi_reduction <minsi>, %637, %cst_168 [1] : vector<8x5xi32> to vector<8xi32>
    %639 = vector.shape_cast %638 : vector<8xi32> to vector<8x1xi32>
    %c7_i32 = arith.constant 7 : i32
    %640 = vector.broadcast %c7_i32 : i32 to vector<8x1xi32>
    %641 = arith.cmpi eq, %474, %640 : vector<8x1xi32>
    %642 = arith.select %641, %639, %477 : vector<8x1xi1>, vector<8x1xi32>
    %643 = vector.broadcast %642 : vector<8x1xi32> to vector<8x5xi32>
    %644 = arith.cmpi eq, %476, %643 : vector<8x5xi32>
    %c0_i32 = arith.constant 0 : i32
    %645 = vector.broadcast %c0_i32 : i32 to vector<8x5xi32>
    %646 = arith.select %644, %622, %645 : vector<8x5xi1>, vector<8x5xi32>
    %cst_169 = arith.constant dense<0> : vector<8xi32>
    %647 = vector.multi_reduction <add>, %646, %cst_169 [1] : vector<8x5xi32> to vector<8xi32>
    %648 = vector.shape_cast %647 : vector<8xi32> to vector<8x1xi32>
    %c6_i32 = arith.constant 6 : i32
    %649 = vector.broadcast %c6_i32 : i32 to vector<8x1xi32>
    %650 = arith.cmpi eq, %474, %649 : vector<8x1xi32>
    %c6_i32_170 = arith.constant 6 : i32
    %651 = vector.broadcast %c6_i32_170 : i32 to vector<8x1xi32>
    %652 = arith.cmpi sgt, %474, %651 : vector<8x1xi32>
    %653 = arith.select %652, %648, %477 : vector<8x1xi1>, vector<8x1xi32>
    %654 = arith.select %650, %639, %653 : vector<8x1xi1>, vector<8x1xi32>
    %655 = vector.broadcast %654 : vector<8x1xi32> to vector<8x5xi32>
    %656 = arith.cmpi eq, %476, %655 : vector<8x5xi32>
    %c0_i32_171 = arith.constant 0 : i32
    %657 = vector.broadcast %c0_i32_171 : i32 to vector<8x5xi32>
    %658 = arith.select %656, %602, %657 : vector<8x5xi1>, vector<8x5xi32>
    %cst_172 = arith.constant dense<0> : vector<8xi32>
    %659 = vector.multi_reduction <add>, %658, %cst_172 [1] : vector<8x5xi32> to vector<8xi32>
    %660 = vector.shape_cast %659 : vector<8xi32> to vector<8x1xi32>
    %c5_i32_173 = arith.constant 5 : i32
    %661 = vector.broadcast %c5_i32_173 : i32 to vector<8x1xi32>
    %662 = arith.cmpi eq, %474, %661 : vector<8x1xi32>
    %c5_i32_174 = arith.constant 5 : i32
    %663 = vector.broadcast %c5_i32_174 : i32 to vector<8x1xi32>
    %664 = arith.cmpi sgt, %474, %663 : vector<8x1xi32>
    %665 = arith.select %664, %660, %477 : vector<8x1xi1>, vector<8x1xi32>
    %666 = arith.select %662, %639, %665 : vector<8x1xi1>, vector<8x1xi32>
    %667 = vector.broadcast %666 : vector<8x1xi32> to vector<8x5xi32>
    %668 = arith.cmpi eq, %476, %667 : vector<8x5xi32>
    %c0_i32_175 = arith.constant 0 : i32
    %669 = vector.broadcast %c0_i32_175 : i32 to vector<8x5xi32>
    %670 = arith.select %668, %582, %669 : vector<8x5xi1>, vector<8x5xi32>
    %cst_176 = arith.constant dense<0> : vector<8xi32>
    %671 = vector.multi_reduction <add>, %670, %cst_176 [1] : vector<8x5xi32> to vector<8xi32>
    %672 = vector.shape_cast %671 : vector<8xi32> to vector<8x1xi32>
    %c4_i32 = arith.constant 4 : i32
    %673 = vector.broadcast %c4_i32 : i32 to vector<8x1xi32>
    %674 = arith.cmpi eq, %474, %673 : vector<8x1xi32>
    %c4_i32_177 = arith.constant 4 : i32
    %675 = vector.broadcast %c4_i32_177 : i32 to vector<8x1xi32>
    %676 = arith.cmpi sgt, %474, %675 : vector<8x1xi32>
    %677 = arith.select %676, %672, %477 : vector<8x1xi1>, vector<8x1xi32>
    %678 = arith.select %674, %639, %677 : vector<8x1xi1>, vector<8x1xi32>
    %679 = vector.broadcast %678 : vector<8x1xi32> to vector<8x5xi32>
    %680 = arith.cmpi eq, %476, %679 : vector<8x5xi32>
    %c0_i32_178 = arith.constant 0 : i32
    %681 = vector.broadcast %c0_i32_178 : i32 to vector<8x5xi32>
    %682 = arith.select %680, %562, %681 : vector<8x5xi1>, vector<8x5xi32>
    %cst_179 = arith.constant dense<0> : vector<8xi32>
    %683 = vector.multi_reduction <add>, %682, %cst_179 [1] : vector<8x5xi32> to vector<8xi32>
    %684 = vector.shape_cast %683 : vector<8xi32> to vector<8x1xi32>
    %c3_i32 = arith.constant 3 : i32
    %685 = vector.broadcast %c3_i32 : i32 to vector<8x1xi32>
    %686 = arith.cmpi eq, %474, %685 : vector<8x1xi32>
    %c3_i32_180 = arith.constant 3 : i32
    %687 = vector.broadcast %c3_i32_180 : i32 to vector<8x1xi32>
    %688 = arith.cmpi sgt, %474, %687 : vector<8x1xi32>
    %689 = arith.select %688, %684, %477 : vector<8x1xi1>, vector<8x1xi32>
    %690 = arith.select %686, %639, %689 : vector<8x1xi1>, vector<8x1xi32>
    %691 = vector.broadcast %690 : vector<8x1xi32> to vector<8x5xi32>
    %692 = arith.cmpi eq, %476, %691 : vector<8x5xi32>
    %c0_i32_181 = arith.constant 0 : i32
    %693 = vector.broadcast %c0_i32_181 : i32 to vector<8x5xi32>
    %694 = arith.select %692, %542, %693 : vector<8x5xi1>, vector<8x5xi32>
    %cst_182 = arith.constant dense<0> : vector<8xi32>
    %695 = vector.multi_reduction <add>, %694, %cst_182 [1] : vector<8x5xi32> to vector<8xi32>
    %696 = vector.shape_cast %695 : vector<8xi32> to vector<8x1xi32>
    %c2_i32 = arith.constant 2 : i32
    %697 = vector.broadcast %c2_i32 : i32 to vector<8x1xi32>
    %698 = arith.cmpi eq, %474, %697 : vector<8x1xi32>
    %c2_i32_183 = arith.constant 2 : i32
    %699 = vector.broadcast %c2_i32_183 : i32 to vector<8x1xi32>
    %700 = arith.cmpi sgt, %474, %699 : vector<8x1xi32>
    %701 = arith.select %700, %696, %477 : vector<8x1xi1>, vector<8x1xi32>
    %702 = arith.select %698, %639, %701 : vector<8x1xi1>, vector<8x1xi32>
    %703 = vector.broadcast %702 : vector<8x1xi32> to vector<8x5xi32>
    %704 = arith.cmpi eq, %476, %703 : vector<8x5xi32>
    %c0_i32_184 = arith.constant 0 : i32
    %705 = vector.broadcast %c0_i32_184 : i32 to vector<8x5xi32>
    %706 = arith.select %704, %522, %705 : vector<8x5xi1>, vector<8x5xi32>
    %cst_185 = arith.constant dense<0> : vector<8xi32>
    %707 = vector.multi_reduction <add>, %706, %cst_185 [1] : vector<8x5xi32> to vector<8xi32>
    %708 = vector.shape_cast %707 : vector<8xi32> to vector<8x1xi32>
    %c1_i32 = arith.constant 1 : i32
    %709 = vector.broadcast %c1_i32 : i32 to vector<8x1xi32>
    %710 = arith.cmpi eq, %474, %709 : vector<8x1xi32>
    %c1_i32_186 = arith.constant 1 : i32
    %711 = vector.broadcast %c1_i32_186 : i32 to vector<8x1xi32>
    %712 = arith.cmpi sgt, %474, %711 : vector<8x1xi32>
    %713 = arith.select %712, %708, %477 : vector<8x1xi1>, vector<8x1xi32>
    %714 = arith.select %710, %639, %713 : vector<8x1xi1>, vector<8x1xi32>
    %715 = vector.broadcast %714 : vector<8x1xi32> to vector<8x5xi32>
    %716 = arith.cmpi eq, %476, %715 : vector<8x5xi32>
    %c0_i32_187 = arith.constant 0 : i32
    %717 = vector.broadcast %c0_i32_187 : i32 to vector<8x5xi32>
    %718 = arith.select %716, %502, %717 : vector<8x5xi1>, vector<8x5xi32>
    %cst_188 = arith.constant dense<0> : vector<8xi32>
    %719 = vector.multi_reduction <add>, %718, %cst_188 [1] : vector<8x5xi32> to vector<8xi32>
    %720 = vector.shape_cast %719 : vector<8xi32> to vector<8x1xi32>
    %c0_i32_189 = arith.constant 0 : i32
    %721 = vector.broadcast %c0_i32_189 : i32 to vector<8x1xi32>
    %722 = arith.cmpi eq, %474, %721 : vector<8x1xi32>
    %c0_i32_190 = arith.constant 0 : i32
    %723 = vector.broadcast %c0_i32_190 : i32 to vector<8x1xi32>
    %724 = arith.cmpi sgt, %474, %723 : vector<8x1xi32>
    %725 = arith.select %724, %720, %477 : vector<8x1xi1>, vector<8x1xi32>
    %726 = arith.select %722, %639, %725 : vector<8x1xi1>, vector<8x1xi32>
    %727 = tpu.concatenate %726, %714, %702, %690, %678, %666, %654, %642 in 1 : vector<8x1xi32>, vector<8x1xi32>, vector<8x1xi32>, vector<8x1xi32>, vector<8x1xi32>, vector<8x1xi32>, vector<8x1xi32>, vector<8x1xi32> -> vector<8x8xi32>
    %c0_191 = arith.constant 0 : index
    %c0_192 = arith.constant 0 : index
    %728 = vector.load %arg14[%c0_191, %c0_192] : memref<8x8xi32, #tpu.memory_space<vmem>>, vector<8x8xi32>
    tpu.vector_store %arg14[%c0_191, %c0_192], %727 {strides = array<i32>} : memref<8x8xi32, #tpu.memory_space<vmem>>, vector<8x8xi32>,
    return
  }
  func.func @transform_0(%arg0: i32) -> (i32, i32, i32) {
    %c0_i32 = arith.constant 0 : i32
    %c0_i32_0 = arith.constant 0 : i32
    %c0_i32_1 = arith.constant 0 : i32
    return %c0_i32, %arg0, %c0_i32_0 : i32, i32, i32
  }
  func.func @transform_1(%arg0: i32) -> (i32, i32, i32) {
    %c0_i32 = arith.constant 0 : i32
    %c0_i32_0 = arith.constant 0 : i32
    %c0_i32_1 = arith.constant 0 : i32
    return %c0_i32, %arg0, %c0_i32_0 : i32, i32, i32
  }
  func.func @transform_2(%arg0: i32) -> (i32, i32) {
    %c0_i32 = arith.constant 0 : i32
    %c0_i32_0 = arith.constant 0 : i32
    return %arg0, %c0_i32 : i32, i32
  }
  func.func @transform_3(%arg0: i32) -> (i32, i32) {
    %c0_i32 = arith.constant 0 : i32
    %c0_i32_0 = arith.constant 0 : i32
    %c0_i32_1 = arith.constant 0 : i32
    return %c0_i32, %c0_i32_0 : i32, i32
  }
  func.func @transform_4(%arg0: i32) -> (i32, i32) {
    %c0_i32 = arith.constant 0 : i32
    %c0_i32_0 = arith.constant 0 : i32
    %c0_i32_1 = arith.constant 0 : i32
    return %c0_i32, %c0_i32_0 : i32, i32
  }
  func.func @transform_5(%arg0: i32) -> (i32, i32) {
    %c0_i32 = arith.constant 0 : i32
    %c0_i32_0 = arith.constant 0 : i32
    %c0_i32_1 = arith.constant 0 : i32
    return %c0_i32, %c0_i32_0 : i32, i32
  }
  func.func @transform_6(%arg0: i32) -> (i32, i32) {
    %c0_i32 = arith.constant 0 : i32
    %c0_i32_0 = arith.constant 0 : i32
    %c0_i32_1 = arith.constant 0 : i32
    return %c0_i32, %c0_i32_0 : i32, i32
  }
  func.func @transform_7(%arg0: i32) -> (i32, i32) {
    %c0_i32 = arith.constant 0 : i32
    %c0_i32_0 = arith.constant 0 : i32
    %c0_i32_1 = arith.constant 0 : i32
    return %c0_i32, %c0_i32_0 : i32, i32
  }
  func.func @transform_8(%arg0: i32) -> (i32, i32) {
    %c0_i32 = arith.constant 0 : i32
    %c0_i32_0 = arith.constant 0 : i32
    %c0_i32_1 = arith.constant 0 : i32
    return %c0_i32, %c0_i32_0 : i32, i32
  }
  func.func @transform_9(%arg0: i32) -> (i32, i32) {
    %c0_i32 = arith.constant 0 : i32
    %c0_i32_0 = arith.constant 0 : i32
    %c0_i32_1 = arith.constant 0 : i32
    return %c0_i32, %c0_i32_0 : i32, i32
  }
  func.func @transform_10(%arg0: i32) -> (i32, i32) {
    %c0_i32 = arith.constant 0 : i32
    %c0_i32_0 = arith.constant 0 : i32
    %c0_i32_1 = arith.constant 0 : i32
    return %c0_i32, %c0_i32_0 : i32, i32
  }
  func.func @transform_11(%arg0: i32) -> (i32, i32) {
    %c0_i32 = arith.constant 0 : i32
    %c0_i32_0 = arith.constant 0 : i32
    %c0_i32_1 = arith.constant 0 : i32
    return %c0_i32, %c0_i32_0 : i32, i32
  }
  func.func @transform_12(%arg0: i32) -> (i32, i32, i32) {
    %c0_i32 = arith.constant 0 : i32
    %c0_i32_0 = arith.constant 0 : i32
    %c0_i32_1 = arith.constant 0 : i32
    return %c0_i32, %arg0, %c0_i32_0 : i32, i32, i32
  }
  func.func @transform_13(%arg0: i32) -> (i32, i32) {
    %c0_i32 = arith.constant 0 : i32
    %c0_i32_0 = arith.constant 0 : i32
    return %arg0, %c0_i32 : i32, i32
  }
}

</mosaic_0001>

<llo_original>
// kernel: bilstm_crf_forward.1
$region0: #{bilstm_crf_forward.1}
  #allocation0 [shape = 'u32[]', space=smem, size = 0x4, offset = 0x4, fixed_abs, tag = 'smem constant byte address 0x4 - core index']
  #allocation1 [shape = 'u32[144,128]{1,0:T(1,128)}', space=vmem, size = 0x12000, scoped, tag = 'internal scratch']
  %s0 = inlined_call_operand.vmem [shape: f32[8,8,16], index: 0, kind: input, shape index: {}]
  %s1 = inlined_call_operand.vmem [shape: f32[8,8,1], index: 1, kind: input, shape index: {}]
  %s2 = inlined_call_operand.vmem [shape: s32[8,1], index: 2, kind: input, shape index: {}]
  %s3 = inlined_call_operand.vmem [shape: f32[16,128], index: 3, kind: input, shape index: {}]
  %s4 = inlined_call_operand.vmem [shape: f32[1,128], index: 4, kind: input, shape index: {}]
  %s5 = inlined_call_operand.vmem [shape: f32[32,128], index: 5, kind: input, shape index: {}]
  %s6 = inlined_call_operand.vmem [shape: f32[16,5], index: 6, kind: input, shape index: {}]
  %s7 = inlined_call_operand.vmem [shape: f32[16,5], index: 7, kind: input, shape index: {}]
  %s8 = inlined_call_operand.vmem [shape: f32[1,5], index: 8, kind: input, shape index: {}]
  %s9 = inlined_call_operand.vmem [shape: f32[1,5], index: 9, kind: input, shape index: {}]
  %s10 = inlined_call_operand.vmem [shape: f32[1,5], index: 10, kind: input, shape index: {}]
  %s11 = inlined_call_operand.vmem [shape: f32[5,5], index: 11, kind: input, shape index: {}]
  %s12 = inlined_call_operand.vmem [shape: f32[8,8,5], index: 12, kind: output, shape index: {0}]
  %s13 = inlined_call_operand.vmem [shape: s32[8,8], index: 13, kind: output, shape index: {1}]
  %14 = xla_tuple %s12, %s13
  %s15 = sld [smem:[#allocation0]]
  $region66: #{bilstm_crf_forward.1} parent=0
    _
  %s17 = ssub.s32 1, %s15
  %s18 = scalar_select 0, %s17, %s15
  // Predicated region
  $region2: #{bilstm_crf_forward.1} parent=0 // pred_check
    _
  $region3: #{bilstm_crf_forward.1} parent=0 // pred_check_branch
    %20 = sbr.rel (0) target = $region5
  $region4: #{bilstm_crf_forward.1} parent=0 // pred_region
    _
  $region5: #{bilstm_crf_forward.1} parent=0 // pred_fallthru
    _
  // Predicated region
  $region6: #{bilstm_crf_forward.1} parent=0 // pred_check
    _
  $region7: #{bilstm_crf_forward.1} parent=0 // pred_check_branch
    %22 = sbr.rel (0) target = $region9
  $region8: #{bilstm_crf_forward.1} parent=0 // pred_region
    _
  $region9: #{bilstm_crf_forward.1} parent=0 // pred_fallthru
    _
  // Predicated region
  $region10: #{bilstm_crf_forward.1} parent=0 // pred_check
    _
  $region11: #{bilstm_crf_forward.1} parent=0 // pred_check_branch
    %24 = sbr.rel (0) target = $region13
  $region12: #{bilstm_crf_forward.1} parent=0 // pred_region
    _
  $region13: #{bilstm_crf_forward.1} parent=0 // pred_fallthru
    _
  // Predicated region
  $region14: #{bilstm_crf_forward.1} parent=0 // pred_check
    _
  $region15: #{bilstm_crf_forward.1} parent=0 // pred_check_branch
    %26 = sbr.rel (0) target = $region17
  $region16: #{bilstm_crf_forward.1} parent=0 // pred_region
    _
  $region17: #{bilstm_crf_forward.1} parent=0 // pred_fallthru
    _
  // Predicated region
  $region18: #{bilstm_crf_forward.1} parent=0 // pred_check
    _
  $region19: #{bilstm_crf_forward.1} parent=0 // pred_check_branch
    %28 = sbr.rel (0) target = $region21
  $region20: #{bilstm_crf_forward.1} parent=0 // pred_region
    _
  $region21: #{bilstm_crf_forward.1} parent=0 // pred_fallthru
    _
  // Predicated region
  $region22: #{bilstm_crf_forward.1} parent=0 // pred_check
    _
  $region23: #{bilstm_crf_forward.1} parent=0 // pred_check_branch
    %30 = sbr.rel (0) target = $region25
  $region24: #{bilstm_crf_forward.1} parent=0 // pred_region
    _
  $region25: #{bilstm_crf_forward.1} parent=0 // pred_fallthru
    _
  // Predicated region
  $region26: #{bilstm_crf_forward.1} parent=0 // pred_check
    _
  $region27: #{bilstm_crf_forward.1} parent=0 // pred_check_branch
    %32 = sbr.rel (0) target = $region29
  $region28: #{bilstm_crf_forward.1} parent=0 // pred_region
    _
  $region29: #{bilstm_crf_forward.1} parent=0 // pred_fallthru
    _
  // Predicated region
  $region30: #{bilstm_crf_forward.1} parent=0 // pred_check
    _
  $region31: #{bilstm_crf_forward.1} parent=0 // pred_check_branch
    %34 = sbr.rel (0) target = $region33
  $region32: #{bilstm_crf_forward.1} parent=0 // pred_region
    _
  $region33: #{bilstm_crf_forward.1} parent=0 // pred_fallthru
    _
  // Predicated region
  $region34: #{bilstm_crf_forward.1} parent=0 // pred_check
    _
  $region35: #{bilstm_crf_forward.1} parent=0 // pred_check_branch
    %36 = sbr.rel (0) target = $region37
  $region36: #{bilstm_crf_forward.1} parent=0 // pred_region
    _
  $region37: #{bilstm_crf_forward.1} parent=0 // pred_fallthru
    _
  // Predicated region
  $region38: #{bilstm_crf_forward.1} parent=0 // pred_check
    _
  $region39: #{bilstm_crf_forward.1} parent=0 // pred_check_branch
    %38 = sbr.rel (0) target = $region41
  $region40: #{bilstm_crf_forward.1} parent=0 // pred_region
    _
  $region41: #{bilstm_crf_forward.1} parent=0 // pred_fallthru
    _
  // Predicated region
  $region42: #{bilstm_crf_forward.1} parent=0 // pred_check
    _
  $region43: #{bilstm_crf_forward.1} parent=0 // pred_check_branch
    %40 = sbr.rel (0) target = $region45
  $region44: #{bilstm_crf_forward.1} parent=0 // pred_region
    _
  $region45: #{bilstm_crf_forward.1} parent=0 // pred_fallthru
    _
  // Predicated region
  $region46: #{bilstm_crf_forward.1} parent=0 // pred_check
    _
  $region47: #{bilstm_crf_forward.1} parent=0 // pred_check_branch
    %42 = sbr.rel (0) target = $region49
  $region48: #{bilstm_crf_forward.1} parent=0 // pred_region
    _
  $region49: #{bilstm_crf_forward.1} parent=0 // pred_fallthru
    _
  %v43 = vld [vmem:[%s5] sm:$0xff]
  %v44 = vld [vmem:[%s5 + $0x8] sm:$0xff]
  %v45 = vld [vmem:[%s5 + $0x10] sm:$0xff]
  %v46 = vld [vmem:[%s5 + $0x18] sm:$0xff]
  %v47 = vld [vmem:[%s0] sm:$0xff]
  %v48 = vld [vmem:[%s0 + $0x8] sm:$0xff]
  %v49 = vld [vmem:[%s0 + $0x10] sm:$0xff]
  %v50 = vld [vmem:[%s0 + $0x18] sm:$0xff]
  %v51 = vld [vmem:[%s0 + $0x20] sm:$0xff]
  %v52 = vld [vmem:[%s0 + $0x28] sm:$0xff]
  %v53 = vld [vmem:[%s0 + $0x30] sm:$0xff]
  %v54 = vld [vmem:[%s0 + $0x38] sm:$0xff]
  %v55 = vld [vmem:[%s3] sm:$0xff]
  %v56 = vld [vmem:[%s3 + $0x8] sm:$0xff]
  %v57 = vld [vmem:[%s4] sm:$0x1]
  %v59 = vlaneseq
  %v60 = vshrl.u32 %v59, 7
  %v61 = vsub.s32 0, %v60
  %v62 = vrot.slane %v57, %v61
  %vm64 = vcmask 130048
  %v66 = vsel %vm64, %v47, 0
  %v69 = vsel %vm64, %v48, 0
  %v72 = vsel %vm64, %v49, 0
  %v75 = vsel %vm64, %v50, 0
  %v78 = vsel %vm64, %v51, 0
  %v81 = vsel %vm64, %v52, 0
  %v84 = vsel %vm64, %v53, 0
  %v87 = vsel %vm64, %v54, 0
  %89 = vmatprep.subr.mxu0 0.0
  %90 = vmatpush1.msra.mxu0 0.0
  %91 = vmatprep.subr.mxu0 0.0
  %92 = vmatpush1.msra.mxu0 0.0
  %93 = vmatprep.subr.mxu0 0.0
  %94 = vmatpush1.msra.mxu0 0.0
  %95 = vmatprep.subr.mxu0 0.0
  %96 = vmatpush1.msra.mxu0 0.0
  %97 = vmatprep.subr.mxu0 0.0
  %98 = vmatpush1.msra.mxu0 0.0
  %99 = vmatprep.subr.mxu0 0.0
  %100 = vmatpush1.msra.mxu0 0.0
  %101 = vmatprep.subr.mxu0 0.0
  %102 = vmatpush1.msra.mxu0 0.0
  %103 = vmatprep.subr.mxu0 0.0
  %104 = vmatpush1.msra.mxu0 0.0
  %105 = vmatprep.subr.mxu0 0.0
  %106 = vmatpush1.msra.mxu0 0.0
  %107 = vmatprep.subr.mxu0 0.0
  %108 = vmatpush1.msra.mxu0 0.0
  %109 = vmatprep.subr.mxu0 0.0
  %110 = vmatpush1.msra.mxu0 0.0
  %111 = vmatprep.subr.mxu0 0.0
  %112 = vmatpush1.msra.mxu0 0.0
  %113 = vmatprep.subr.mxu0 0.0
  %114 = vmatpush1.msra.mxu0 0.0
  %115 = vmatprep.subr.mxu0 0.0
  %116 = vmatpush1.msra.mxu0 0.0
  %117 = vmatprep.subr.mxu0 0.0
  %118 = vmatpush1.msra.mxu0 %v56
  %119 = vmatprep.subr.mxu0 0.0
  %120 = vmatpush1.msra.mxu0 %v55
  %121 = vmatprep.subr.mxu0 0.0
  %122 = vmatpush2.msra.mxu0 0.0
  %123 = vmatprep.subr.mxu0 0.0
  %124 = vmatpush2.msra.mxu0 0.0
  %125 = vmatprep.subr.mxu0 0.0
  %126 = vmatpush2.msra.mxu0 0.0
  %127 = vmatprep.subr.mxu0 0.0
  %128 = vmatpush2.msra.mxu0 0.0
  %129 = vmatprep.subr.mxu0 0.0
  %130 = vmatpush2.msra.mxu0 0.0
  %131 = vmatprep.subr.mxu0 0.0
  %132 = vmatpush2.msra.mxu0 0.0
  %133 = vmatprep.subr.mxu0 0.0
  %134 = vmatpush2.msra.mxu0 0.0
  %135 = vmatprep.subr.mxu0 0.0
  %136 = vmatpush2.msra.mxu0 0.0
  %137 = vmatprep.subr.mxu0 0.0
  %138 = vmatpush2.msra.mxu0 0.0
  %139 = vmatprep.subr.mxu0 0.0
  %140 = vmatpush2.msra.mxu0 0.0
  %141 = vmatprep.subr.mxu0 0.0
  %142 = vmatpush2.msra.mxu0 0.0
  %143 = vmatprep.subr.mxu0 0.0
  %144 = vmatpush2.msra.mxu0 0.0
  %145 = vmatprep.subr.mxu0 0.0
  %146 = vmatpush2.msra.mxu0 0.0
  %147 = vmatprep.subr.mxu0 0.0
  %148 = vmatpush2.msra.mxu0 0.0
  %149 = vmatprep.subr.mxu0 0.0
  %150 = vmatpush2.msra.mxu0 0.0
  %151 = vmatprep.subr.mxu0 0.0
  %152 = vmatpush2.msra.mxu0 0.0
  %153 = vmatprep.mubr.f32.mxu0 0.0
  %154 = vmatmul.mubr.f32.gmra.mxu0 %v66
  %v155 = vpop.f32.mrf.mxu0
  %v156 = vadd.f32 %v62, %v155
  %v157 = vpop.f32.mrf.mxu0
  %158 = vmatprep.mubr.f32.mxu0 0.0
  %159 = vmatmul.mubr.f32.gmra.mxu0 %v69
  %v160 = vpop.f32.mrf.mxu0
  %v161 = vadd.f32 %v62, %v160
  %v162 = vpop.f32.mrf.mxu0
  %163 = vmatprep.mubr.f32.mxu0 0.0
  %164 = vmatmul.mubr.f32.gmra.mxu0 %v72
  %v165 = vpop.f32.mrf.mxu0
  %v166 = vadd.f32 %v62, %v165
  %v167 = vpop.f32.mrf.mxu0
  %168 = vmatprep.mubr.f32.mxu0 0.0
  %169 = vmatmul.mubr.f32.gmra.mxu0 %v75
  %v170 = vpop.f32.mrf.mxu0
  %v171 = vadd.f32 %v62, %v170
  %v172 = vpop.f32.mrf.mxu0
  %173 = vmatprep.mubr.f32.mxu0 0.0
  %174 = vmatmul.mubr.f32.gmra.mxu0 %v78
  %v175 = vpop.f32.mrf.mxu0
  %v176 = vadd.f32 %v62, %v175
  %v177 = vpop.f32.mrf.mxu0
  %178 = vmatprep.mubr.f32.mxu0 0.0
  %179 = vmatmul.mubr.f32.gmra.mxu0 %v81
  %v180 = vpop.f32.mrf.mxu0
  %v181 = vadd.f32 %v62, %v180
  %v182 = vpop.f32.mrf.mxu0
  %183 = vmatprep.mubr.f32.mxu0 0.0
  %184 = vmatmul.mubr.f32.gmra.mxu0 %v84
  %v185 = vpop.f32.mrf.mxu0
  %v186 = vadd.f32 %v62, %v185
  %v187 = vpop.f32.mrf.mxu0
  %188 = vmatprep.mubr.f32.mxu0 0.0
  %189 = vmatmul.mubr.f32.gmra.mxu0 %v87
  %v190 = vpop.f32.mrf.mxu0
  %v191 = vadd.f32 %v62, %v190
  %v192 = vpop.f32.mrf.mxu0
  %193 = vdwg.mxu0
  %v194 = vld [vmem:[%s1] sm:$0xff]
  %vm195 = vcmp.gt.f32.partialorder %v194, 0.5
  %s196 = scalar_lea.vmem %s1, 56
  %v197 = vld [vmem:[%s196] sm:$0xff]
  %vm198 = vcmp.gt.f32.partialorder %v197, 0.5
  %vm199 = vcmask 523264
  %v200 = vsel %vm199, %v156, %v191
  %vm201 = vcmask 261120
  %v203 = vsel %vm201, 0.0, 0
  %205 = vmatprep.subr.mxu0 0.0
  %206 = vmatpush1.msra.mxu0 0.0
  %207 = vmatprep.subr.mxu0 0.0
  %208 = vmatpush1.msra.mxu0 0.0
  %209 = vmatprep.subr.mxu0 0.0
  %210 = vmatpush1.msra.mxu0 0.0
  %211 = vmatprep.subr.mxu0 0.0
  %212 = vmatpush1.msra.mxu0 0.0
  %213 = vmatprep.subr.mxu0 0.0
  %214 = vmatpush1.msra.mxu0 0.0
  %215 = vmatprep.subr.mxu0 0.0
  %216 = vmatpush1.msra.mxu0 0.0
  %217 = vmatprep.subr.mxu0 0.0
  %218 = vmatpush1.msra.mxu0 0.0
  %219 = vmatprep.subr.mxu0 0.0
  %220 = vmatpush1.msra.mxu0 0.0
  %221 = vmatprep.subr.mxu0 0.0
  %222 = vmatpush1.msra.mxu0 0.0
  %223 = vmatprep.subr.mxu0 0.0
  %224 = vmatpush1.msra.mxu0 0.0
  %225 = vmatprep.subr.mxu0 0.0
  %226 = vmatpush1.msra.mxu0 0.0
  %227 = vmatprep.subr.mxu0 0.0
  %228 = vmatpush1.msra.mxu0 0.0
  %229 = vmatprep.subr.mxu0 0.0
  %230 = vmatpush1.msra.mxu0 %v46
  %231 = vmatprep.subr.mxu0 0.0
  %232 = vmatpush1.msra.mxu0 %v45
  %233 = vmatprep.subr.mxu0 0.0
  %234 = vmatpush1.msra.mxu0 %v44
  %235 = vmatprep.subr.mxu0 0.0
  %236 = vmatpush1.msra.mxu0 %v43
  %237 = vmatprep.subr.mxu0 0.0
  %238 = vmatpush2.msra.mxu0 0.0
  %239 = vmatprep.subr.mxu0 0.0
  %240 = vmatpush2.msra.mxu0 0.0
  %241 = vmatprep.subr.mxu0 0.0
  %242 = vmatpush2.msra.mxu0 0.0
  %243 = vmatprep.subr.mxu0 0.0
  %244 = vmatpush2.msra.mxu0 0.0
  %245 = vmatprep.subr.mxu0 0.0
  %246 = vmatpush2.msra.mxu0 0.0
  %247 = vmatprep.subr.mxu0 0.0
  %248 = vmatpush2.msra.mxu0 0.0
  %249 = vmatprep.subr.mxu0 0.0
  %250 = vmatpush2.msra.mxu0 0.0
  %251 = vmatprep.subr.mxu0 0.0
  %252 = vmatpush2.msra.mxu0 0.0
  %253 = vmatprep.subr.mxu0 0.0
  %254 = vmatpush2.msra.mxu0 0.0
  %255 = vmatprep.subr.mxu0 0.0
  %256 = vmatpush2.msra.mxu0 0.0
  %257 = vmatprep.subr.mxu0 0.0
  %258 = vmatpush2.msra.mxu0 0.0
  %259 = vmatprep.subr.mxu0 0.0
  %260 = vmatpush2.msra.mxu0 0.0
  %261 = vmatprep.subr.mxu0 0.0
  %262 = vmatpush2.msra.mxu0 0.0
  %263 = vmatprep.subr.mxu0 0.0
  %264 = vmatpush2.msra.mxu0 0.0
  %265 = vmatprep.subr.mxu0 0.0
  %266 = vmatpush2.msra.mxu0 0.0
  %267 = vmatprep.subr.mxu0 0.0
  %268 = vmatpush2.msra.mxu0 0.0
  %269 = vmatprep.mubr.f32.mxu0 0.0
  %270 = vmatmul.mubr.f32.gmra.mxu0 %v203
  %v271 = vpop.f32.mrf.mxu0
  %v272 = vadd.f32 0.0, %v271
  %v273 = vpop.f32.mrf.mxu0
  %274 = vdwg.mxu0
  %v275 = vadd.f32 %v200, %v272
  %v276 = vxor.u32 %v275, 2147483648
  %v277 = vmul.f32 %v276, 1.442695
  %v278 = vpow.pop %v277
  %v279 = vadd.f32 %v278, 1.0
  %v280 = vrcp.pop %v279
  %v281 = vmul.f32 1.0, %v280
  %v282 = vtanh.pop %v275
  %v283 = vmul.f32 %v281, 0.0
  %285 = vrot.lane.b32.xlu0 %v282, 96
  %v286 = vpop.permute.xlu0 %285
  %v288 = vmul.f32 %v281, %v286
  %290 = vrot.lane.b32.xlu0 %v288, 16
  %v291 = vpop.permute.xlu0 %290
  %v293 = vadd.f32 %v283, %v291
  %v294 = vtanh.pop %v293
  %296 = vrot.lane.b32.xlu0 %v294, 32
  %v297 = vpop.permute.xlu0 %296
  %v299 = vmul.f32 %v281, %v297
  %v300 = vsel %vm195, 1, 0
  %301 = vset.pattern.permute.xlu0 0
  %302 = vperm.xlu0 %301, %v300
  %v303 = vpop.permute.xlu0 %302
  %vm304 = vcmp.eq.s32.totalorder %v303, 1
  %v305 = vsel %vm304, %v299, 0.0
  %v306 = vsel %vm198, 1, 0
  %307 = vset.pattern.permute.xlu0 0
  %308 = vperm.xlu0 %307, %v306
  %v309 = vpop.permute.xlu0 %308
  %vm310 = vcmp.eq.s32.totalorder %v309, 1
  %v311 = vsel %vm310, %v299, 0.0
  %v312 = vsel %vm304, %v293, 0.0
  %v313 = vsel %vm310, %v293, 0.0
  %315 = vrot.lane.b32.xlu0 %v305, 80
  %v316 = vpop.permute.xlu0 %315
  %319 = vrot.lane.b32.xlu0 %v311, 32
  %v320 = vpop.permute.xlu0 %319
  %v322 = vsel %vm64, %v316, %v320
  %s323 = scalar_lea.vmem %s1, 8
  %v324 = vld [vmem:[%s323] sm:$0xff]
  %vm325 = vcmp.gt.f32.partialorder %v324, 0.5
  %s326 = scalar_lea.vmem %s1, 48
  %v327 = vld [vmem:[%s326] sm:$0xff]
  %vm328 = vcmp.gt.f32.partialorder %v327, 0.5
  %v329 = vsel %vm199, %v161, %v186
  %v331 = vsel %vm201, %v322, 0
  %333 = vmatprep.subr.mxu0 0.0
  %334 = vmatpush1.msra.mxu0 0.0
  %335 = vmatprep.subr.mxu0 0.0
  %336 = vmatpush1.msra.mxu0 0.0
  %337 = vmatprep.subr.mxu0 0.0
  %338 = vmatpush1.msra.mxu0 0.0
  %339 = vmatprep.subr.mxu0 0.0
  %340 = vmatpush1.msra.mxu0 0.0
  %341 = vmatprep.subr.mxu0 0.0
  %342 = vmatpush1.msra.mxu0 0.0
  %343 = vmatprep.subr.mxu0 0.0
  %344 = vmatpush1.msra.mxu0 0.0
  %345 = vmatprep.subr.mxu0 0.0
  %346 = vmatpush1.msra.mxu0 0.0
  %347 = vmatprep.subr.mxu0 0.0
  %348 = vmatpush1.msra.mxu0 0.0
  %349 = vmatprep.subr.mxu0 0.0
  %350 = vmatpush1.msra.mxu0 0.0
  %351 = vmatprep.subr.mxu0 0.0
  %352 = vmatpush1.msra.mxu0 0.0
  %353 = vmatprep.subr.mxu0 0.0
  %354 = vmatpush1.msra.mxu0 0.0
  %355 = vmatprep.subr.mxu0 0.0
  %356 = vmatpush1.msra.mxu0 0.0
  %357 = vmatprep.subr.mxu0 0.0
  %358 = vmatpush1.msra.mxu0 %v46
  %359 = vmatprep.subr.mxu0 0.0
  %360 = vmatpush1.msra.mxu0 %v45
  %361 = vmatprep.subr.mxu0 0.0
  %362 = vmatpush1.msra.mxu0 %v44
  %363 = vmatprep.subr.mxu0 0.0
  %364 = vmatpush1.msra.mxu0 %v43
  %365 = vmatprep.subr.mxu0 0.0
  %366 = vmatpush2.msra.mxu0 0.0
  %367 = vmatprep.subr.mxu0 0.0
  %368 = vmatpush2.msra.mxu0 0.0
  %369 = vmatprep.subr.mxu0 0.0
  %370 = vmatpush2.msra.mxu0 0.0
  %371 = vmatprep.subr.mxu0 0.0
  %372 = vmatpush2.msra.mxu0 0.0
  %373 = vmatprep.subr.mxu0 0.0
  %374 = vmatpush2.msra.mxu0 0.0
  %375 = vmatprep.subr.mxu0 0.0
  %376 = vmatpush2.msra.mxu0 0.0
  %377 = vmatprep.subr.mxu0 0.0
  %378 = vmatpush2.msra.mxu0 0.0
  %379 = vmatprep.subr.mxu0 0.0
  %380 = vmatpush2.msra.mxu0 0.0
  %381 = vmatprep.subr.mxu0 0.0
  %382 = vmatpush2.msra.mxu0 0.0
  %383 = vmatprep.subr.mxu0 0.0
  %384 = vmatpush2.msra.mxu0 0.0
  %385 = vmatprep.subr.mxu0 0.0
  %386 = vmatpush2.msra.mxu0 0.0
  %387 = vmatprep.subr.mxu0 0.0
  %388 = vmatpush2.msra.mxu0 0.0
  %389 = vmatprep.subr.mxu0 0.0
  %390 = vmatpush2.msra.mxu0 0.0
  %391 = vmatprep.subr.mxu0 0.0
  %392 = vmatpush2.msra.mxu0 0.0
  %393 = vmatprep.subr.mxu0 0.0
  %394 = vmatpush2.msra.mxu0 0.0
  %395 = vmatprep.subr.mxu0 0.0
  %396 = vmatpush2.msra.mxu0 0.0
  %397 = vmatprep.mubr.f32.mxu0 0.0
  %398 = vmatmul.mubr.f32.gmra.mxu0 %v331
  %v399 = vpop.f32.mrf.mxu0
  %v400 = vadd.f32 0.0, %v399
  %v401 = vpop.f32.mrf.mxu0
  %402 = vdwg.mxu0
  %v403 = vadd.f32 %v329, %v400
  %v404 = vxor.u32 %v403, 2147483648
  %v405 = vmul.f32 %v404, 1.442695
  %v406 = vpow.pop %v405
  %v407 = vadd.f32 %v406, 1.0
  %v408 = vrcp.pop %v407
  %v409 = vmul.f32 1.0, %v408
  %v410 = vtanh.pop %v403
  %v411 = vmul.f32 %v409, %v312
  %413 = vrot.lane.b32.xlu0 %v410, 96
  %v414 = vpop.permute.xlu0 %413
  %v416 = vmul.f32 %v409, %v414
  %418 = vrot.lane.b32.xlu0 %v416, 16
  %v419 = vpop.permute.xlu0 %418
  %v421 = vadd.f32 %v411, %v419
  %v422 = vmul.f32 %v409, %v313
  %v423 = vadd.f32 %v422, %v419
  %v424 = vtanh.pop %v421
  %426 = vrot.lane.b32.xlu0 %v424, 32
  %v427 = vpop.permute.xlu0 %426
  %v429 = vmul.f32 %v409, %v427
  %v430 = vtanh.pop %v423
  %432 = vrot.lane.b32.xlu0 %v430, 32
  %v433 = vpop.permute.xlu0 %432
  %v435 = vmul.f32 %v409, %v433
  %v436 = vsel %vm325, 1, 0
  %437 = vset.pattern.permute.xlu0 0
  %438 = vperm.xlu0 %437, %v436
  %v439 = vpop.permute.xlu0 %438
  %vm440 = vcmp.eq.s32.totalorder %v439, 1
  %v441 = vsel %vm440, %v429, 0.0
  %v442 = vsel %vm328, 1, 0
  %443 = vset.pattern.permute.xlu0 0
  %444 = vperm.xlu0 %443, %v442
  %v445 = vpop.permute.xlu0 %444
  %vm446 = vcmp.eq.s32.totalorder %v445, 1
  %v447 = vsel %vm446, %v435, 0.0
  %v448 = vsel %vm440, %v429, %v305
  %v449 = vsel %vm440, %v421, %v312
  %v450 = vsel %vm446, %v435, %v311
  %v451 = vsel %vm446, %v423, %v313
  %453 = vrot.lane.b32.xlu0 %v448, 80
  %v454 = vpop.permute.xlu0 %453
  %457 = vrot.lane.b32.xlu0 %v450, 32
  %v458 = vpop.permute.xlu0 %457
  %v460 = vsel %vm64, %v454, %v458
  %s461 = scalar_lea.vmem %s1, 16
  %v462 = vld [vmem:[%s461] sm:$0xff]
  %vm463 = vcmp.gt.f32.partialorder %v462, 0.5
  %s464 = scalar_lea.vmem %s1, 40
  %v465 = vld [vmem:[%s464] sm:$0xff]
  %vm466 = vcmp.gt.f32.partialorder %v465, 0.5
  %v467 = vsel %vm199, %v166, %v181
  %v469 = vsel %vm201, %v460, 0
  %471 = vmatprep.subr.mxu0 0.0
  %472 = vmatpush1.msra.mxu0 0.0
  %473 = vmatprep.subr.mxu0 0.0
  %474 = vmatpush1.msra.mxu0 0.0
  %475 = vmatprep.subr.mxu0 0.0
  %476 = vmatpush1.msra.mxu0 0.0
  %477 = vmatprep.subr.mxu0 0.0
  %478 = vmatpush1.msra.mxu0 0.0
  %479 = vmatprep.subr.mxu0 0.0
  %480 = vmatpush1.msra.mxu0 0.0
  %481 = vmatprep.subr.mxu0 0.0
  %482 = vmatpush1.msra.mxu0 0.0
  %483 = vmatprep.subr.mxu0 0.0
  %484 = vmatpush1.msra.mxu0 0.0
  %485 = vmatprep.subr.mxu0 0.0
  %486 = vmatpush1.msra.mxu0 0.0
  %487 = vmatprep.subr.mxu0 0.0
  %488 = vmatpush1.msra.mxu0 0.0
  %489 = vmatprep.subr.mxu0 0.0
  %490 = vmatpush1.msra.mxu0 0.0
  %491 = vmatprep.subr.mxu0 0.0
  %492 = vmatpush1.msra.mxu0 0.0
  %493 = vmatprep.subr.mxu0 0.0
  %494 = vmatpush1.msra.mxu0 0.0
  %495 = vmatprep.subr.mxu0 0.0
  %496 = vmatpush1.msra.mxu0 %v46
  %497 = vmatprep.subr.mxu0 0.0
  %498 = vmatpush1.msra.mxu0 %v45
  %499 = vmatprep.subr.mxu0 0.0
  %500 = vmatpush1.msra.mxu0 %v44
  %501 = vmatprep.subr.mxu0 0.0
  %502 = vmatpush1.msra.mxu0 %v43
  %503 = vmatprep.subr.mxu0 0.0
  %504 = vmatpush2.msra.mxu0 0.0
  %505 = vmatprep.subr.mxu0 0.0
  %506 = vmatpush2.msra.mxu0 0.0
  %507 = vmatprep.subr.mxu0 0.0
  %508 = vmatpush2.msra.mxu0 0.0
  %509 = vmatprep.subr.mxu0 0.0
  %510 = vmatpush2.msra.mxu0 0.0
  %511 = vmatprep.subr.mxu0 0.0
  %512 = vmatpush2.msra.mxu0 0.0
  %513 = vmatprep.subr.mxu0 0.0
  %514 = vmatpush2.msra.mxu0 0.0
  %515 = vmatprep.subr.mxu0 0.0
  %516 = vmatpush2.msra.mxu0 0.0
  %517 = vmatprep.subr.mxu0 0.0
  %518 = vmatpush2.msra.mxu0 0.0
  %519 = vmatprep.subr.mxu0 0.0
  %520 = vmatpush2.msra.mxu0 0.0
  %521 = vmatprep.subr.mxu0 0.0
  %522 = vmatpush2.msra.mxu0 0.0
  %523 = vmatprep.subr.mxu0 0.0
  %524 = vmatpush2.msra.mxu0 0.0
  %525 = vmatprep.subr.mxu0 0.0
  %526 = vmatpush2.msra.mxu0 0.0
  %527 = vmatprep.subr.mxu0 0.0
  %528 = vmatpush2.msra.mxu0 0.0
  %529 = vmatprep.subr.mxu0 0.0
  %530 = vmatpush2.msra.mxu0 0.0
  %531 = vmatprep.subr.mxu0 0.0
  %532 = vmatpush2.msra.mxu0 0.0
  %533 = vmatprep.subr.mxu0 0.0
  %534 = vmatpush2.msra.mxu0 0.0
  %535 = vmatprep.mubr.f32.mxu0 0.0
  %536 = vmatmul.mubr.f32.gmra.mxu0 %v469
  %v537 = vpop.f32.mrf.mxu0
  %v538 = vadd.f32 0.0, %v537
  %v539 = vpop.f32.mrf.mxu0
  %540 = vdwg.mxu0
  %v541 = vadd.f32 %v467, %v538
  %v542 = vxor.u32 %v541, 2147483648
  %v543 = vmul.f32 %v542, 1.442695
  %v544 = vpow.pop %v543
  %v545 = vadd.f32 %v544, 1.0
  %v546 = vrcp.pop %v545
  %v547 = vmul.f32 1.0, %v546
  %v548 = vtanh.pop %v541
  %v549 = vmul.f32 %v547, %v449
  %551 = vrot.lane.b32.xlu0 %v548, 96
  %v552 = vpop.permute.xlu0 %551
  %v554 = vmul.f32 %v547, %v552
  %556 = vrot.lane.b32.xlu0 %v554, 16
  %v557 = vpop.permute.xlu0 %556
  %v559 = vadd.f32 %v549, %v557
  %v560 = vmul.f32 %v547, %v451
  %v561 = vadd.f32 %v560, %v557
  %v562 = vtanh.pop %v559
  %564 = vrot.lane.b32.xlu0 %v562, 32
  %v565 = vpop.permute.xlu0 %564
  %v567 = vmul.f32 %v547, %v565
  %v568 = vtanh.pop %v561
  %570 = vrot.lane.b32.xlu0 %v568, 32
  %v571 = vpop.permute.xlu0 %570
  %v573 = vmul.f32 %v547, %v571
  %v574 = vsel %vm463, 1, 0
  %575 = vset.pattern.permute.xlu0 0
  %576 = vperm.xlu0 %575, %v574
  %v577 = vpop.permute.xlu0 %576
  %vm578 = vcmp.eq.s32.totalorder %v577, 1
  %v579 = vsel %vm578, %v567, 0.0
  %v580 = vsel %vm466, 1, 0
  %581 = vset.pattern.permute.xlu0 0
  %582 = vperm.xlu0 %581, %v580
  %v583 = vpop.permute.xlu0 %582
  %vm584 = vcmp.eq.s32.totalorder %v583, 1
  %v585 = vsel %vm584, %v573, 0.0
  %v586 = vsel %vm578, %v567, %v448
  %v587 = vsel %vm578, %v559, %v449
  %v588 = vsel %vm584, %v573, %v450
  %v589 = vsel %vm584, %v561, %v451
  %591 = vrot.lane.b32.xlu0 %v586, 80
  %v592 = vpop.permute.xlu0 %591
  %595 = vrot.lane.b32.xlu0 %v588, 32
  %v596 = vpop.permute.xlu0 %595
  %v598 = vsel %vm64, %v592, %v596
  %s599 = scalar_lea.vmem %s1, 24
  %v600 = vld [vmem:[%s599] sm:$0xff]
  %vm601 = vcmp.gt.f32.partialorder %v600, 0.5
  %s602 = scalar_lea.vmem %s1, 32
  %v603 = vld [vmem:[%s602] sm:$0xff]
  %vm604 = vcmp.gt.f32.partialorder %v603, 0.5
  %v605 = vsel %vm199, %v171, %v176
  %v607 = vsel %vm201, %v598, 0
  %609 = vmatprep.subr.mxu0 0.0
  %610 = vmatpush1.msra.mxu0 0.0
  %611 = vmatprep.subr.mxu0 0.0
  %612 = vmatpush1.msra.mxu0 0.0
  %613 = vmatprep.subr.mxu0 0.0
  %614 = vmatpush1.msra.mxu0 0.0
  %615 = vmatprep.subr.mxu0 0.0
  %616 = vmatpush1.msra.mxu0 0.0
  %617 = vmatprep.subr.mxu0 0.0
  %618 = vmatpush1.msra.mxu0 0.0
  %619 = vmatprep.subr.mxu0 0.0
  %620 = vmatpush1.msra.mxu0 0.0
  %621 = vmatprep.subr.mxu0 0.0
  %622 = vmatpush1.msra.mxu0 0.0
  %623 = vmatprep.subr.mxu0 0.0
  %624 = vmatpush1.msra.mxu0 0.0
  %625 = vmatprep.subr.mxu0 0.0
  %626 = vmatpush1.msra.mxu0 0.0
  %627 = vmatprep.subr.mxu0 0.0
  %628 = vmatpush1.msra.mxu0 0.0
  %629 = vmatprep.subr.mxu0 0.0
  %630 = vmatpush1.msra.mxu0 0.0
  %631 = vmatprep.subr.mxu0 0.0
  %632 = vmatpush1.msra.mxu0 0.0
  %633 = vmatprep.subr.mxu0 0.0
  %634 = vmatpush1.msra.mxu0 %v46
  %635 = vmatprep.subr.mxu0 0.0
  %636 = vmatpush1.msra.mxu0 %v45
  %637 = vmatprep.subr.mxu0 0.0
  %638 = vmatpush1.msra.mxu0 %v44
  %639 = vmatprep.subr.mxu0 0.0
  %640 = vmatpush1.msra.mxu0 %v43
  %641 = vmatprep.subr.mxu0 0.0
  %642 = vmatpush2.msra.mxu0 0.0
  %643 = vmatprep.subr.mxu0 0.0
  %644 = vmatpush2.msra.mxu0 0.0
  %645 = vmatprep.subr.mxu0 0.0
  %646 = vmatpush2.msra.mxu0 0.0
  %647 = vmatprep.subr.mxu0 0.0
  %648 = vmatpush2.msra.mxu0 0.0
  %649 = vmatprep.subr.mxu0 0.0
  %650 = vmatpush2.msra.mxu0 0.0
  %651 = vmatprep.subr.mxu0 0.0
  %652 = vmatpush2.msra.mxu0 0.0
  %653 = vmatprep.subr.mxu0 0.0
  %654 = vmatpush2.msra.mxu0 0.0
  %655 = vmatprep.subr.mxu0 0.0
  %656 = vmatpush2.msra.mxu0 0.0
  %657 = vmatprep.subr.mxu0 0.0
  %658 = vmatpush2.msra.mxu0 0.0
  %659 = vmatprep.subr.mxu0 0.0
  %660 = vmatpush2.msra.mxu0 0.0
  %661 = vmatprep.subr.mxu0 0.0
  %662 = vmatpush2.msra.mxu0 0.0
  %663 = vmatprep.subr.mxu0 0.0
  %664 = vmatpush2.msra.mxu0 0.0
  %665 = vmatprep.subr.mxu0 0.0
  %666 = vmatpush2.msra.mxu0 0.0
  %667 = vmatprep.subr.mxu0 0.0
  %668 = vmatpush2.msra.mxu0 0.0
  %669 = vmatprep.subr.mxu0 0.0
  %670 = vmatpush2.msra.mxu0 0.0
  %671 = vmatprep.subr.mxu0 0.0
  %672 = vmatpush2.msra.mxu0 0.0
  %673 = vmatprep.mubr.f32.mxu0 0.0
  %674 = vmatmul.mubr.f32.gmra.mxu0 %v607
  %v675 = vpop.f32.mrf.mxu0
  %v676 = vadd.f32 0.0, %v675
  %v677 = vpop.f32.mrf.mxu0
  %678 = vdwg.mxu0
  %v679 = vadd.f32 %v605, %v676
  %v680 = vxor.u32 %v679, 2147483648
  %v681 = vmul.f32 %v680, 1.442695
  %v682 = vpow.pop %v681
  %v683 = vadd.f32 %v682, 1.0
  %v684 = vrcp.pop %v683
  %v685 = vmul.f32 1.0, %v684
  %v686 = vtanh.pop %v679
  %v687 = vmul.f32 %v685, %v587
  %689 = vrot.lane.b32.xlu0 %v686, 96
  %v690 = vpop.permute.xlu0 %689
  %v692 = vmul.f32 %v685, %v690
  %694 = vrot.lane.b32.xlu0 %v692, 16
  %v695 = vpop.permute.xlu0 %694
  %v697 = vadd.f32 %v687, %v695
  %v698 = vmul.f32 %v685, %v589
  %v699 = vadd.f32 %v698, %v695
  %v700 = vtanh.pop %v697
  %702 = vrot.lane.b32.xlu0 %v700, 32
  %v703 = vpop.permute.xlu0 %702
  %v705 = vmul.f32 %v685, %v703
  %v706 = vtanh.pop %v699
  %708 = vrot.lane.b32.xlu0 %v706, 32
  %v709 = vpop.permute.xlu0 %708
  %v711 = vmul.f32 %v685, %v709
  %v712 = vsel %vm601, 1, 0
  %713 = vset.pattern.permute.xlu0 0
  %714 = vperm.xlu0 %713, %v712
  %v715 = vpop.permute.xlu0 %714
  %vm716 = vcmp.eq.s32.totalorder %v715, 1
  %v717 = vsel %vm716, %v705, 0.0
  %v718 = vsel %vm604, 1, 0
  %719 = vset.pattern.permute.xlu0 0
  %720 = vperm.xlu0 %719, %v718
  %v721 = vpop.permute.xlu0 %720
  %vm722 = vcmp.eq.s32.totalorder %v721, 1
  %v723 = vsel %vm722, %v711, 0.0
  %v724 = vsel %vm716, %v705, %v586
  %v725 = vsel %vm716, %v697, %v587
  %v726 = vsel %vm722, %v711, %v588
  %v727 = vsel %vm722, %v699, %v589
  %729 = vrot.lane.b32.xlu0 %v724, 80
  %v730 = vpop.permute.xlu0 %729
  %733 = vrot.lane.b32.xlu0 %v726, 32
  %v734 = vpop.permute.xlu0 %733
  %v736 = vsel %vm64, %v730, %v734
  %v737 = vsel %vm199, %v176, %v171
  %v739 = vsel %vm201, %v736, 0
  %741 = vmatprep.subr.mxu0 0.0
  %742 = vmatpush1.msra.mxu0 0.0
  %743 = vmatprep.subr.mxu0 0.0
  %744 = vmatpush1.msra.mxu0 0.0
  %745 = vmatprep.subr.mxu0 0.0
  %746 = vmatpush1.msra.mxu0 0.0
  %747 = vmatprep.subr.mxu0 0.0
  %748 = vmatpush1.msra.mxu0 0.0
  %749 = vmatprep.subr.mxu0 0.0
  %750 = vmatpush1.msra.mxu0 0.0
  %751 = vmatprep.subr.mxu0 0.0
  %752 = vmatpush1.msra.mxu0 0.0
  %753 = vmatprep.subr.mxu0 0.0
  %754 = vmatpush1.msra.mxu0 0.0
  %755 = vmatprep.subr.mxu0 0.0
  %756 = vmatpush1.msra.mxu0 0.0
  %757 = vmatprep.subr.mxu0 0.0
  %758 = vmatpush1.msra.mxu0 0.0
  %759 = vmatprep.subr.mxu0 0.0
  %760 = vmatpush1.msra.mxu0 0.0
  %761 = vmatprep.subr.mxu0 0.0
  %762 = vmatpush1.msra.mxu0 0.0
  %763 = vmatprep.subr.mxu0 0.0
  %764 = vmatpush1.msra.mxu0 0.0
  %765 = vmatprep.subr.mxu0 0.0
  %766 = vmatpush1.msra.mxu0 %v46
  %767 = vmatprep.subr.mxu0 0.0
  %768 = vmatpush1.msra.mxu0 %v45
  %769 = vmatprep.subr.mxu0 0.0
  %770 = vmatpush1.msra.mxu0 %v44
  %771 = vmatprep.subr.mxu0 0.0
  %772 = vmatpush1.msra.mxu0 %v43
  %773 = vmatprep.subr.mxu0 0.0
  %774 = vmatpush2.msra.mxu0 0.0
  %775 = vmatprep.subr.mxu0 0.0
  %776 = vmatpush2.msra.mxu0 0.0
  %777 = vmatprep.subr.mxu0 0.0
  %778 = vmatpush2.msra.mxu0 0.0
  %779 = vmatprep.subr.mxu0 0.0
  %780 = vmatpush2.msra.mxu0 0.0
  %781 = vmatprep.subr.mxu0 0.0
  %782 = vmatpush2.msra.mxu0 0.0
  %783 = vmatprep.subr.mxu0 0.0
  %784 = vmatpush2.msra.mxu0 0.0
  %785 = vmatprep.subr.mxu0 0.0
  %786 = vmatpush2.msra.mxu0 0.0
  %787 = vmatprep.subr.mxu0 0.0
  %788 = vmatpush2.msra.mxu0 0.0
  %789 = vmatprep.subr.mxu0 0.0
  %790 = vmatpush2.msra.mxu0 0.0
  %791 = vmatprep.subr.mxu0 0.0
  %792 = vmatpush2.msra.mxu0 0.0
  %793 = vmatprep.subr.mxu0 0.0
  %794 = vmatpush2.msra.mxu0 0.0
  %795 = vmatprep.subr.mxu0 0.0
  %796 = vmatpush2.msra.mxu0 0.0
  %797 = vmatprep.subr.mxu0 0.0
  %798 = vmatpush2.msra.mxu0 0.0
  %799 = vmatprep.subr.mxu0 0.0
  %800 = vmatpush2.msra.mxu0 0.0
  %801 = vmatprep.subr.mxu0 0.0
  %802 = vmatpush2.msra.mxu0 0.0
  %803 = vmatprep.subr.mxu0 0.0
  %804 = vmatpush2.msra.mxu0 0.0
  %805 = vmatprep.mubr.f32.mxu0 0.0
  %806 = vmatmul.mubr.f32.gmra.mxu0 %v739
  %v807 = vpop.f32.mrf.mxu0
  %v808 = vadd.f32 0.0, %v807
  %v809 = vpop.f32.mrf.mxu0
  %810 = vdwg.mxu0
  %v811 = vadd.f32 %v737, %v808
  %v812 = vxor.u32 %v811, 2147483648
  %v813 = vmul.f32 %v812, 1.442695
  %v814 = vpow.pop %v813
  %v815 = vadd.f32 %v814, 1.0
  %v816 = vrcp.pop %v815
  %v817 = vmul.f32 1.0, %v816
  %v818 = vtanh.pop %v811
  %v819 = vmul.f32 %v817, %v725
  %821 = vrot.lane.b32.xlu0 %v818, 96
  %v822 = vpop.permute.xlu0 %821
  %v824 = vmul.f32 %v817, %v822
  %826 = vrot.lane.b32.xlu0 %v824, 16
  %v827 = vpop.permute.xlu0 %826
  %v829 = vadd.f32 %v819, %v827
  %v830 = vmul.f32 %v817, %v727
  %v831 = vadd.f32 %v830, %v827
  %v832 = vtanh.pop %v829
  %834 = vrot.lane.b32.xlu0 %v832, 32
  %v835 = vpop.permute.xlu0 %834
  %v837 = vmul.f32 %v817, %v835
  %v838 = vtanh.pop %v831
  %840 = vrot.lane.b32.xlu0 %v838, 32
  %v841 = vpop.permute.xlu0 %840
  %v843 = vmul.f32 %v817, %v841
  %v844 = vsel %vm722, %v837, 0.0
  %v845 = vsel %vm716, %v843, 0.0
  %v846 = vsel %vm722, %v837, %v724
  %v847 = vsel %vm722, %v829, %v725
  %v848 = vsel %vm716, %v843, %v726
  %v849 = vsel %vm716, %v831, %v727
  %851 = vrot.lane.b32.xlu0 %v846, 80
  %v852 = vpop.permute.xlu0 %851
  %855 = vrot.lane.b32.xlu0 %v848, 32
  %v856 = vpop.permute.xlu0 %855
  %v858 = vsel %vm64, %v852, %v856
  %v859 = vsel %vm199, %v181, %v166
  %v861 = vsel %vm201, %v858, 0
  %863 = vmatprep.subr.mxu0 0.0
  %864 = vmatpush1.msra.mxu0 0.0
  %865 = vmatprep.subr.mxu0 0.0
  %866 = vmatpush1.msra.mxu0 0.0
  %867 = vmatprep.subr.mxu0 0.0
  %868 = vmatpush1.msra.mxu0 0.0
  %869 = vmatprep.subr.mxu0 0.0
  %870 = vmatpush1.msra.mxu0 0.0
  %871 = vmatprep.subr.mxu0 0.0
  %872 = vmatpush1.msra.mxu0 0.0
  %873 = vmatprep.subr.mxu0 0.0
  %874 = vmatpush1.msra.mxu0 0.0
  %875 = vmatprep.subr.mxu0 0.0
  %876 = vmatpush1.msra.mxu0 0.0
  %877 = vmatprep.subr.mxu0 0.0
  %878 = vmatpush1.msra.mxu0 0.0
  %879 = vmatprep.subr.mxu0 0.0
  %880 = vmatpush1.msra.mxu0 0.0
  %881 = vmatprep.subr.mxu0 0.0
  %882 = vmatpush1.msra.mxu0 0.0
  %883 = vmatprep.subr.mxu0 0.0
  %884 = vmatpush1.msra.mxu0 0.0
  %885 = vmatprep.subr.mxu0 0.0
  %886 = vmatpush1.msra.mxu0 0.0
  %887 = vmatprep.subr.mxu0 0.0
  %888 = vmatpush1.msra.mxu0 %v46
  %889 = vmatprep.subr.mxu0 0.0
  %890 = vmatpush1.msra.mxu0 %v45
  %891 = vmatprep.subr.mxu0 0.0
  %892 = vmatpush1.msra.mxu0 %v44
  %893 = vmatprep.subr.mxu0 0.0
  %894 = vmatpush1.msra.mxu0 %v43
  %895 = vmatprep.subr.mxu0 0.0
  %896 = vmatpush2.msra.mxu0 0.0
  %897 = vmatprep.subr.mxu0 0.0
  %898 = vmatpush2.msra.mxu0 0.0
  %899 = vmatprep.subr.mxu0 0.0
  %900 = vmatpush2.msra.mxu0 0.0
  %901 = vmatprep.subr.mxu0 0.0
  %902 = vmatpush2.msra.mxu0 0.0
  %903 = vmatprep.subr.mxu0 0.0
  %904 = vmatpush2.msra.mxu0 0.0
  %905 = vmatprep.subr.mxu0 0.0
  %906 = vmatpush2.msra.mxu0 0.0
  %907 = vmatprep.subr.mxu0 0.0
  %908 = vmatpush2.msra.mxu0 0.0
  %909 = vmatprep.subr.mxu0 0.0
  %910 = vmatpush2.msra.mxu0 0.0
  %911 = vmatprep.subr.mxu0 0.0
  %912 = vmatpush2.msra.mxu0 0.0
  %913 = vmatprep.subr.mxu0 0.0
  %914 = vmatpush2.msra.mxu0 0.0
  %915 = vmatprep.subr.mxu0 0.0
  %916 = vmatpush2.msra.mxu0 0.0
  %917 = vmatprep.subr.mxu0 0.0
  %918 = vmatpush2.msra.mxu0 0.0
  %919 = vmatprep.subr.mxu0 0.0
  %920 = vmatpush2.msra.mxu0 0.0
  %921 = vmatprep.subr.mxu0 0.0
  %922 = vmatpush2.msra.mxu0 0.0
  %923 = vmatprep.subr.mxu0 0.0
  %924 = vmatpush2.msra.mxu0 0.0
  %925 = vmatprep.subr.mxu0 0.0
  %926 = vmatpush2.msra.mxu0 0.0
  %927 = vmatprep.mubr.f32.mxu0 0.0
  %928 = vmatmul.mubr.f32.gmra.mxu0 %v861
  %v929 = vpop.f32.mrf.mxu0
  %v930 = vadd.f32 0.0, %v929
  %v931 = vpop.f32.mrf.mxu0
  %932 = vdwg.mxu0
  %v933 = vadd.f32 %v859, %v930
  %v934 = vxor.u32 %v933, 2147483648
  %v935 = vmul.f32 %v934, 1.442695
  %v936 = vpow.pop %v935
  %v937 = vadd.f32 %v936, 1.0
  %v938 = vrcp.pop %v937
  %v939 = vmul.f32 1.0, %v938
  %v940 = vtanh.pop %v933
  %v941 = vmul.f32 %v939, %v847
  %943 = vrot.lane.b32.xlu0 %v940, 96
  %v944 = vpop.permute.xlu0 %943
  %v946 = vmul.f32 %v939, %v944
  %948 = vrot.lane.b32.xlu0 %v946, 16
  %v949 = vpop.permute.xlu0 %948
  %v951 = vadd.f32 %v941, %v949
  %v952 = vmul.f32 %v939, %v849
  %v953 = vadd.f32 %v952, %v949
  %v954 = vtanh.pop %v951
  %956 = vrot.lane.b32.xlu0 %v954, 32
  %v957 = vpop.permute.xlu0 %956
  %v959 = vmul.f32 %v939, %v957
  %v960 = vtanh.pop %v953
  %962 = vrot.lane.b32.xlu0 %v960, 32
  %v963 = vpop.permute.xlu0 %962
  %v965 = vmul.f32 %v939, %v963
  %v966 = vsel %vm584, %v959, 0.0
  %v967 = vsel %vm578, %v965, 0.0
  %v968 = vsel %vm584, %v959, %v846
  %v969 = vsel %vm584, %v951, %v847
  %v970 = vsel %vm578, %v965, %v848
  %v971 = vsel %vm578, %v953, %v849
  %973 = vrot.lane.b32.xlu0 %v968, 80
  %v974 = vpop.permute.xlu0 %973
  %977 = vrot.lane.b32.xlu0 %v970, 32
  %v978 = vpop.permute.xlu0 %977
  %v980 = vsel %vm64, %v974, %v978
  %v981 = vsel %vm199, %v186, %v161
  %v983 = vsel %vm201, %v980, 0
  %985 = vmatprep.subr.mxu0 0.0
  %986 = vmatpush1.msra.mxu0 0.0
  %987 = vmatprep.subr.mxu0 0.0
  %988 = vmatpush1.msra.mxu0 0.0
  %989 = vmatprep.subr.mxu0 0.0
  %990 = vmatpush1.msra.mxu0 0.0
  %991 = vmatprep.subr.mxu0 0.0
  %992 = vmatpush1.msra.mxu0 0.0
  %993 = vmatprep.subr.mxu0 0.0
  %994 = vmatpush1.msra.mxu0 0.0
  %995 = vmatprep.subr.mxu0 0.0
  %996 = vmatpush1.msra.mxu0 0.0
  %997 = vmatprep.subr.mxu0 0.0
  %998 = vmatpush1.msra.mxu0 0.0
  %999 = vmatprep.subr.mxu0 0.0
  %1000 = vmatpush1.msra.mxu0 0.0
  %1001 = vmatprep.subr.mxu0 0.0
  %1002 = vmatpush1.msra.mxu0 0.0
  %1003 = vmatprep.subr.mxu0 0.0
  %1004 = vmatpush1.msra.mxu0 0.0
  %1005 = vmatprep.subr.mxu0 0.0
  %1006 = vmatpush1.msra.mxu0 0.0
  %1007 = vmatprep.subr.mxu0 0.0
  %1008 = vmatpush1.msra.mxu0 0.0
  %1009 = vmatprep.subr.mxu0 0.0
  %1010 = vmatpush1.msra.mxu0 %v46
  %1011 = vmatprep.subr.mxu0 0.0
  %1012 = vmatpush1.msra.mxu0 %v45
  %1013 = vmatprep.subr.mxu0 0.0
  %1014 = vmatpush1.msra.mxu0 %v44
  %1015 = vmatprep.subr.mxu0 0.0
  %1016 = vmatpush1.msra.mxu0 %v43
  %1017 = vmatprep.subr.mxu0 0.0
  %1018 = vmatpush2.msra.mxu0 0.0
  %1019 = vmatprep.subr.mxu0 0.0
  %1020 = vmatpush2.msra.mxu0 0.0
  %1021 = vmatprep.subr.mxu0 0.0
  %1022 = vmatpush2.msra.mxu0 0.0
  %1023 = vmatprep.subr.mxu0 0.0
  %1024 = vmatpush2.msra.mxu0 0.0
  %1025 = vmatprep.subr.mxu0 0.0
  %1026 = vmatpush2.msra.mxu0 0.0
  %1027 = vmatprep.subr.mxu0 0.0
  %1028 = vmatpush2.msra.mxu0 0.0
  %1029 = vmatprep.subr.mxu0 0.0
  %1030 = vmatpush2.msra.mxu0 0.0
  %1031 = vmatprep.subr.mxu0 0.0
  %1032 = vmatpush2.msra.mxu0 0.0
  %1033 = vmatprep.subr.mxu0 0.0
  %1034 = vmatpush2.msra.mxu0 0.0
  %1035 = vmatprep.subr.mxu0 0.0
  %1036 = vmatpush2.msra.mxu0 0.0
  %1037 = vmatprep.subr.mxu0 0.0
  %1038 = vmatpush2.msra.mxu0 0.0
  %1039 = vmatprep.subr.mxu0 0.0
  %1040 = vmatpush2.msra.mxu0 0.0
  %1041 = vmatprep.subr.mxu0 0.0
  %1042 = vmatpush2.msra.mxu0 0.0
  %1043 = vmatprep.subr.mxu0 0.0
  %1044 = vmatpush2.msra.mxu0 0.0
  %1045 = vmatprep.subr.mxu0 0.0
  %1046 = vmatpush2.msra.mxu0 0.0
  %1047 = vmatprep.subr.mxu0 0.0
  %1048 = vmatpush2.msra.mxu0 0.0
  %1049 = vmatprep.mubr.f32.mxu0 0.0
  %1050 = vmatmul.mubr.f32.gmra.mxu0 %v983
  %v1051 = vpop.f32.mrf.mxu0
  %v1052 = vadd.f32 0.0, %v1051
  %v1053 = vpop.f32.mrf.mxu0
  %1054 = vdwg.mxu0
  %v1055 = vadd.f32 %v981, %v1052
  %v1056 = vxor.u32 %v1055, 2147483648
  %v1057 = vmul.f32 %v1056, 1.442695
  %v1058 = vpow.pop %v1057
  %v1059 = vadd.f32 %v1058, 1.0
  %v1060 = vrcp.pop %v1059
  %v1061 = vmul.f32 1.0, %v1060
  %v1062 = vtanh.pop %v1055
  %v1063 = vmul.f32 %v1061, %v969
  %1065 = vrot.lane.b32.xlu0 %v1062, 96
  %v1066 = vpop.permute.xlu0 %1065
  %v1068 = vmul.f32 %v1061, %v1066
  %1070 = vrot.lane.b32.xlu0 %v1068, 16
  %v1071 = vpop.permute.xlu0 %1070
  %v1073 = vadd.f32 %v1063, %v1071
  %v1074 = vmul.f32 %v1061, %v971
  %v1075 = vadd.f32 %v1074, %v1071
  %v1076 = vtanh.pop %v1073
  %1078 = vrot.lane.b32.xlu0 %v1076, 32
  %v1079 = vpop.permute.xlu0 %1078
  %v1081 = vmul.f32 %v1061, %v1079
  %v1082 = vtanh.pop %v1075
  %1084 = vrot.lane.b32.xlu0 %v1082, 32
  %v1085 = vpop.permute.xlu0 %1084
  %v1087 = vmul.f32 %v1061, %v1085
  %v1088 = vsel %vm446, %v1081, 0.0
  %v1089 = vsel %vm440, %v1087, 0.0
  %v1090 = vsel %vm446, %v1081, %v968
  %v1091 = vsel %vm446, %v1073, %v969
  %v1092 = vsel %vm440, %v1087, %v970
  %v1093 = vsel %vm440, %v1075, %v971
  %1095 = vrot.lane.b32.xlu0 %v1090, 80
  %v1096 = vpop.permute.xlu0 %1095
  %1099 = vrot.lane.b32.xlu0 %v1092, 32
  %v1100 = vpop.permute.xlu0 %1099
  %v1102 = vsel %vm64, %v1096, %v1100
  %v1103 = vsel %vm199, %v191, %v156
  %v1105 = vsel %vm201, %v1102, 0
  %1107 = vmatprep.subr.mxu0 0.0
  %1108 = vmatpush1.msra.mxu0 0.0
  %1109 = vmatprep.subr.mxu0 0.0
  %1110 = vmatpush1.msra.mxu0 0.0
  %1111 = vmatprep.subr.mxu0 0.0
  %1112 = vmatpush1.msra.mxu0 0.0
  %1113 = vmatprep.subr.mxu0 0.0
  %1114 = vmatpush1.msra.mxu0 0.0
  %1115 = vmatprep.subr.mxu0 0.0
  %1116 = vmatpush1.msra.mxu0 0.0
  %1117 = vmatprep.subr.mxu0 0.0
  %1118 = vmatpush1.msra.mxu0 0.0
  %1119 = vmatprep.subr.mxu0 0.0
  %1120 = vmatpush1.msra.mxu0 0.0
  %1121 = vmatprep.subr.mxu0 0.0
  %1122 = vmatpush1.msra.mxu0 0.0
  %1123 = vmatprep.subr.mxu0 0.0
  %1124 = vmatpush1.msra.mxu0 0.0
  %1125 = vmatprep.subr.mxu0 0.0
  %1126 = vmatpush1.msra.mxu0 0.0
  %1127 = vmatprep.subr.mxu0 0.0
  %1128 = vmatpush1.msra.mxu0 0.0
  %1129 = vmatprep.subr.mxu0 0.0
  %1130 = vmatpush1.msra.mxu0 0.0
  %1131 = vmatprep.subr.mxu0 0.0
  %1132 = vmatpush1.msra.mxu0 %v46
  %1133 = vmatprep.subr.mxu0 0.0
  %1134 = vmatpush1.msra.mxu0 %v45
  %1135 = vmatprep.subr.mxu0 0.0
  %1136 = vmatpush1.msra.mxu0 %v44
  %1137 = vmatprep.subr.mxu0 0.0
  %1138 = vmatpush1.msra.mxu0 %v43
  %1139 = vmatprep.subr.mxu0 0.0
  %1140 = vmatpush2.msra.mxu0 0.0
  %1141 = vmatprep.subr.mxu0 0.0
  %1142 = vmatpush2.msra.mxu0 0.0
  %1143 = vmatprep.subr.mxu0 0.0
  %1144 = vmatpush2.msra.mxu0 0.0
  %1145 = vmatprep.subr.mxu0 0.0
  %1146 = vmatpush2.msra.mxu0 0.0
  %1147 = vmatprep.subr.mxu0 0.0
  %1148 = vmatpush2.msra.mxu0 0.0
  %1149 = vmatprep.subr.mxu0 0.0
  %1150 = vmatpush2.msra.mxu0 0.0
  %1151 = vmatprep.subr.mxu0 0.0
  %1152 = vmatpush2.msra.mxu0 0.0
  %1153 = vmatprep.subr.mxu0 0.0
  %1154 = vmatpush2.msra.mxu0 0.0
  %1155 = vmatprep.subr.mxu0 0.0
  %1156 = vmatpush2.msra.mxu0 0.0
  %1157 = vmatprep.subr.mxu0 0.0
  %1158 = vmatpush2.msra.mxu0 0.0
  %1159 = vmatprep.subr.mxu0 0.0
  %1160 = vmatpush2.msra.mxu0 0.0
  %1161 = vmatprep.subr.mxu0 0.0
  %1162 = vmatpush2.msra.mxu0 0.0
  %1163 = vmatprep.subr.mxu0 0.0
  %1164 = vmatpush2.msra.mxu0 0.0
  %1165 = vmatprep.subr.mxu0 0.0
  %1166 = vmatpush2.msra.mxu0 0.0
  %1167 = vmatprep.subr.mxu0 0.0
  %1168 = vmatpush2.msra.mxu0 0.0
  %1169 = vmatprep.subr.mxu0 0.0
  %1170 = vmatpush2.msra.mxu0 0.0
  %1171 = vmatprep.mubr.f32.mxu0 0.0
  %1172 = vmatmul.mubr.f32.gmra.mxu0 %v1105
  %v1173 = vpop.f32.mrf.mxu0
  %v1174 = vadd.f32 0.0, %v1173
  %v1175 = vpop.f32.mrf.mxu0
  %1176 = vdwg.mxu0
  %v1177 = vadd.f32 %v1103, %v1174
  %v1178 = vxor.u32 %v1177, 2147483648
  %v1179 = vmul.f32 %v1178, 1.442695
  %v1180 = vpow.pop %v1179
  %v1181 = vadd.f32 %v1180, 1.0
  %v1182 = vrcp.pop %v1181
  %v1183 = vmul.f32 1.0, %v1182
  %v1184 = vtanh.pop %v1177
  %v1185 = vmul.f32 %v1183, %v1091
  %1187 = vrot.lane.b32.xlu0 %v1184, 96
  %v1188 = vpop.permute.xlu0 %1187
  %v1190 = vmul.f32 %v1183, %v1188
  %1192 = vrot.lane.b32.xlu0 %v1190, 16
  %v1193 = vpop.permute.xlu0 %1192
  %v1195 = vadd.f32 %v1185, %v1193
  %v1196 = vmul.f32 %v1183, %v1093
  %v1197 = vadd.f32 %v1196, %v1193
  %v1198 = vtanh.pop %v1195
  %1200 = vrot.lane.b32.xlu0 %v1198, 32
  %v1201 = vpop.permute.xlu0 %1200
  %v1203 = vmul.f32 %v1183, %v1201
  %v1204 = vtanh.pop %v1197
  %1206 = vrot.lane.b32.xlu0 %v1204, 32
  %v1207 = vpop.permute.xlu0 %1206
  %v1209 = vmul.f32 %v1183, %v1207
  %v1210 = vsel %vm310, %v1203, 0.0
  %v1211 = vsel %vm304, %v1209, 0.0
  %v1212 = vld [vmem:[%s6] sm:$0xff]
  %v1213 = vld [vmem:[%s6 + $0x8] sm:$0xff]
  %v1214 = vld [vmem:[%s7] sm:$0xff]
  %v1215 = vld [vmem:[%s7 + $0x8] sm:$0xff]
  %1223 = vrot.lane.b32.xlu0 %v1211, 16
  %v1224 = vpop.permute.xlu0 %1223
  %1225 = vrot.lane.b32.xlu0 %v1089, 16
  %v1226 = vpop.permute.xlu0 %1225
  %1227 = vrot.lane.b32.xlu0 %v967, 16
  %v1228 = vpop.permute.xlu0 %1227
  %1229 = vrot.lane.b32.xlu0 %v845, 16
  %v1230 = vpop.permute.xlu0 %1229
  %1231 = vrot.lane.b32.xlu0 %v723, 16
  %v1232 = vpop.permute.xlu0 %1231
  %1233 = vrot.lane.b32.xlu0 %v585, 16
  %v1234 = vpop.permute.xlu0 %1233
  %1235 = vrot.lane.b32.xlu0 %v447, 16
  %v1236 = vpop.permute.xlu0 %1235
  %1237 = vrot.lane.b32.xlu0 %v311, 16
  %v1238 = vpop.permute.xlu0 %1237
  %v1239 = vsel %vm64, %v1224, 0
  %v1241 = vsel %vm64, %v1226, 0
  %v1243 = vsel %vm64, %v1228, 0
  %v1245 = vsel %vm64, %v1230, 0
  %v1247 = vsel %vm64, %v1232, 0
  %v1249 = vsel %vm64, %v1234, 0
  %v1251 = vsel %vm64, %v1236, 0
  %v1253 = vsel %vm64, %v1238, 0
  %1255 = vmatprep.subr.mxu0 0.0
  %1256 = vmatpush1.msra.mxu0 0.0
  %1257 = vmatprep.subr.mxu0 0.0
  %1258 = vmatpush1.msra.mxu0 0.0
  %1259 = vmatprep.subr.mxu0 0.0
  %1260 = vmatpush1.msra.mxu0 0.0
  %1261 = vmatprep.subr.mxu0 0.0
  %1262 = vmatpush1.msra.mxu0 0.0
  %1263 = vmatprep.subr.mxu0 0.0
  %1264 = vmatpush1.msra.mxu0 0.0
  %1265 = vmatprep.subr.mxu0 0.0
  %1266 = vmatpush1.msra.mxu0 0.0
  %1267 = vmatprep.subr.mxu0 0.0
  %1268 = vmatpush1.msra.mxu0 0.0
  %1269 = vmatprep.subr.mxu0 0.0
  %1270 = vmatpush1.msra.mxu0 0.0
  %1271 = vmatprep.subr.mxu0 0.0
  %1272 = vmatpush1.msra.mxu0 0.0
  %1273 = vmatprep.subr.mxu0 0.0
  %1274 = vmatpush1.msra.mxu0 0.0
  %1275 = vmatprep.subr.mxu0 0.0
  %1276 = vmatpush1.msra.mxu0 0.0
  %1277 = vmatprep.subr.mxu0 0.0
  %1278 = vmatpush1.msra.mxu0 0.0
  %1279 = vmatprep.subr.mxu0 0.0
  %1280 = vmatpush1.msra.mxu0 0.0
  %1281 = vmatprep.subr.mxu0 0.0
  %1282 = vmatpush1.msra.mxu0 0.0
  %1283 = vmatprep.subr.mxu0 0.0
  %1284 = vmatpush1.msra.mxu0 %v1215
  %1285 = vmatprep.subr.mxu0 0.0
  %1286 = vmatpush1.msra.mxu0 %v1214
  %1287 = vmatprep.subr.mxu0 0.0
  %1288 = vmatpush2.msra.mxu0 0.0
  %1289 = vmatprep.subr.mxu0 0.0
  %1290 = vmatpush2.msra.mxu0 0.0
  %1291 = vmatprep.subr.mxu0 0.0
  %1292 = vmatpush2.msra.mxu0 0.0
  %1293 = vmatprep.subr.mxu0 0.0
  %1294 = vmatpush2.msra.mxu0 0.0
  %1295 = vmatprep.subr.mxu0 0.0
  %1296 = vmatpush2.msra.mxu0 0.0
  %1297 = vmatprep.subr.mxu0 0.0
  %1298 = vmatpush2.msra.mxu0 0.0
  %1299 = vmatprep.subr.mxu0 0.0
  %1300 = vmatpush2.msra.mxu0 0.0
  %1301 = vmatprep.subr.mxu0 0.0
  %1302 = vmatpush2.msra.mxu0 0.0
  %1303 = vmatprep.subr.mxu0 0.0
  %1304 = vmatpush2.msra.mxu0 0.0
  %1305 = vmatprep.subr.mxu0 0.0
  %1306 = vmatpush2.msra.mxu0 0.0
  %1307 = vmatprep.subr.mxu0 0.0
  %1308 = vmatpush2.msra.mxu0 0.0
  %1309 = vmatprep.subr.mxu0 0.0
  %1310 = vmatpush2.msra.mxu0 0.0
  %1311 = vmatprep.subr.mxu0 0.0
  %1312 = vmatpush2.msra.mxu0 0.0
  %1313 = vmatprep.subr.mxu0 0.0
  %1314 = vmatpush2.msra.mxu0 0.0
  %1315 = vmatprep.subr.mxu0 0.0
  %1316 = vmatpush2.msra.mxu0 0.0
  %1317 = vmatprep.subr.mxu0 0.0
  %1318 = vmatpush2.msra.mxu0 0.0
  %1319 = vmatprep.mubr.f32.mxu0 0.0
  %1320 = vmatmul.mubr.f32.gmra.mxu0 %v1239
  %v1321 = vpop.f32.mrf.mxu0
  %v1322 = vadd.f32 0.0, %v1321
  %v1323 = vpop.f32.mrf.mxu0
  %1324 = vmatprep.mubr.f32.mxu0 0.0
  %1325 = vmatmul.mubr.f32.gmra.mxu0 %v1241
  %v1326 = vpop.f32.mrf.mxu0
  %v1327 = vadd.f32 0.0, %v1326
  %v1328 = vpop.f32.mrf.mxu0
  %1329 = vmatprep.mubr.f32.mxu0 0.0
  %1330 = vmatmul.mubr.f32.gmra.mxu0 %v1243
  %v1331 = vpop.f32.mrf.mxu0
  %v1332 = vadd.f32 0.0, %v1331
  %v1333 = vpop.f32.mrf.mxu0
  %1334 = vmatprep.mubr.f32.mxu0 0.0
  %1335 = vmatmul.mubr.f32.gmra.mxu0 %v1245
  %v1336 = vpop.f32.mrf.mxu0
  %v1337 = vadd.f32 0.0, %v1336
  %v1338 = vpop.f32.mrf.mxu0
  %1339 = vmatprep.mubr.f32.mxu0 0.0
  %1340 = vmatmul.mubr.f32.gmra.mxu0 %v1247
  %v1341 = vpop.f32.mrf.mxu0
  %v1342 = vadd.f32 0.0, %v1341
  %v1343 = vpop.f32.mrf.mxu0
  %1344 = vmatprep.mubr.f32.mxu0 0.0
  %1345 = vmatmul.mubr.f32.gmra.mxu0 %v1249
  %v1346 = vpop.f32.mrf.mxu0
  %v1347 = vadd.f32 0.0, %v1346
  %v1348 = vpop.f32.mrf.mxu0
  %1349 = vmatprep.mubr.f32.mxu0 0.0
  %1350 = vmatmul.mubr.f32.gmra.mxu0 %v1251
  %v1351 = vpop.f32.mrf.mxu0
  %v1352 = vadd.f32 0.0, %v1351
  %v1353 = vpop.f32.mrf.mxu0
  %1354 = vmatprep.mubr.f32.mxu0 0.0
  %1355 = vmatmul.mubr.f32.gmra.mxu0 %v1253
  %v1356 = vpop.f32.mrf.mxu0
  %v1357 = vadd.f32 0.0, %v1356
  %v1358 = vpop.f32.mrf.mxu0
  %1359 = vdwg.mxu0
  %1367 = vrot.lane.b32.xlu0 %v441, 80
  %v1368 = vpop.permute.xlu0 %1367
  %1369 = vrot.lane.b32.xlu0 %v579, 80
  %v1370 = vpop.permute.xlu0 %1369
  %1371 = vrot.lane.b32.xlu0 %v717, 80
  %v1372 = vpop.permute.xlu0 %1371
  %1373 = vrot.lane.b32.xlu0 %v844, 80
  %v1374 = vpop.permute.xlu0 %1373
  %1375 = vrot.lane.b32.xlu0 %v966, 80
  %v1376 = vpop.permute.xlu0 %1375
  %1377 = vrot.lane.b32.xlu0 %v1088, 80
  %v1378 = vpop.permute.xlu0 %1377
  %1379 = vrot.lane.b32.xlu0 %v1210, 80
  %v1380 = vpop.permute.xlu0 %1379
  %v1381 = vsel %vm64, %v316, 0
  %v1383 = vsel %vm64, %v1368, 0
  %v1385 = vsel %vm64, %v1370, 0
  %v1387 = vsel %vm64, %v1372, 0
  %v1389 = vsel %vm64, %v1374, 0
  %v1391 = vsel %vm64, %v1376, 0
  %v1393 = vsel %vm64, %v1378, 0
  %v1395 = vsel %vm64, %v1380, 0
  %1397 = vmatprep.subr.mxu0 0.0
  %1398 = vmatpush1.msra.mxu0 0.0
  %1399 = vmatprep.subr.mxu0 0.0
  %1400 = vmatpush1.msra.mxu0 0.0
  %1401 = vmatprep.subr.mxu0 0.0
  %1402 = vmatpush1.msra.mxu0 0.0
  %1403 = vmatprep.subr.mxu0 0.0
  %1404 = vmatpush1.msra.mxu0 0.0
  %1405 = vmatprep.subr.mxu0 0.0
  %1406 = vmatpush1.msra.mxu0 0.0
  %1407 = vmatprep.subr.mxu0 0.0
  %1408 = vmatpush1.msra.mxu0 0.0
  %1409 = vmatprep.subr.mxu0 0.0
  %1410 = vmatpush1.msra.mxu0 0.0
  %1411 = vmatprep.subr.mxu0 0.0
  %1412 = vmatpush1.msra.mxu0 0.0
  %1413 = vmatprep.subr.mxu0 0.0
  %1414 = vmatpush1.msra.mxu0 0.0
  %1415 = vmatprep.subr.mxu0 0.0
  %1416 = vmatpush1.msra.mxu0 0.0
  %1417 = vmatprep.subr.mxu0 0.0
  %1418 = vmatpush1.msra.mxu0 0.0
  %1419 = vmatprep.subr.mxu0 0.0
  %1420 = vmatpush1.msra.mxu0 0.0
  %1421 = vmatprep.subr.mxu0 0.0
  %1422 = vmatpush1.msra.mxu0 0.0
  %1423 = vmatprep.subr.mxu0 0.0
  %1424 = vmatpush1.msra.mxu0 0.0
  %1425 = vmatprep.subr.mxu0 0.0
  %1426 = vmatpush1.msra.mxu0 %v1213
  %1427 = vmatprep.subr.mxu0 0.0
  %1428 = vmatpush1.msra.mxu0 %v1212
  %1429 = vmatprep.subr.mxu0 0.0
  %1430 = vmatpush2.msra.mxu0 0.0
  %1431 = vmatprep.subr.mxu0 0.0
  %1432 = vmatpush2.msra.mxu0 0.0
  %1433 = vmatprep.subr.mxu0 0.0
  %1434 = vmatpush2.msra.mxu0 0.0
  %1435 = vmatprep.subr.mxu0 0.0
  %1436 = vmatpush2.msra.mxu0 0.0
  %1437 = vmatprep.subr.mxu0 0.0
  %1438 = vmatpush2.msra.mxu0 0.0
  %1439 = vmatprep.subr.mxu0 0.0
  %1440 = vmatpush2.msra.mxu0 0.0
  %1441 = vmatprep.subr.mxu0 0.0
  %1442 = vmatpush2.msra.mxu0 0.0
  %1443 = vmatprep.subr.mxu0 0.0
  %1444 = vmatpush2.msra.mxu0 0.0
  %1445 = vmatprep.subr.mxu0 0.0
  %1446 = vmatpush2.msra.mxu0 0.0
  %1447 = vmatprep.subr.mxu0 0.0
  %1448 = vmatpush2.msra.mxu0 0.0
  %1449 = vmatprep.subr.mxu0 0.0
  %1450 = vmatpush2.msra.mxu0 0.0
  %1451 = vmatprep.subr.mxu0 0.0
  %1452 = vmatpush2.msra.mxu0 0.0
  %1453 = vmatprep.subr.mxu0 0.0
  %1454 = vmatpush2.msra.mxu0 0.0
  %1455 = vmatprep.subr.mxu0 0.0
  %1456 = vmatpush2.msra.mxu0 0.0
  %1457 = vmatprep.subr.mxu0 0.0
  %1458 = vmatpush2.msra.mxu0 0.0
  %1459 = vmatprep.subr.mxu0 0.0
  %1460 = vmatpush2.msra.mxu0 0.0
  %1461 = vmatprep.mubr.f32.mxu0 0.0
  %1462 = vmatmul.mubr.f32.gmra.mxu0 %v1381
  %v1463 = vpop.f32.mrf.mxu0
  %v1464 = vadd.f32 %v1322, %v1463
  %v1465 = vpop.f32.mrf.mxu0
  %1466 = vmatprep.mubr.f32.mxu0 0.0
  %1467 = vmatmul.mubr.f32.gmra.mxu0 %v1383
  %v1468 = vpop.f32.mrf.mxu0
  %v1469 = vadd.f32 %v1327, %v1468
  %v1470 = vpop.f32.mrf.mxu0
  %1471 = vmatprep.mubr.f32.mxu0 0.0
  %1472 = vmatmul.mubr.f32.gmra.mxu0 %v1385
  %v1473 = vpop.f32.mrf.mxu0
  %v1474 = vadd.f32 %v1332, %v1473
  %v1475 = vpop.f32.mrf.mxu0
  %1476 = vmatprep.mubr.f32.mxu0 0.0
  %1477 = vmatmul.mubr.f32.gmra.mxu0 %v1387
  %v1478 = vpop.f32.mrf.mxu0
  %v1479 = vadd.f32 %v1337, %v1478
  %v1480 = vpop.f32.mrf.mxu0
  %1481 = vmatprep.mubr.f32.mxu0 0.0
  %1482 = vmatmul.mubr.f32.gmra.mxu0 %v1389
  %v1483 = vpop.f32.mrf.mxu0
  %v1484 = vadd.f32 %v1342, %v1483
  %v1485 = vpop.f32.mrf.mxu0
  %1486 = vmatprep.mubr.f32.mxu0 0.0
  %1487 = vmatmul.mubr.f32.gmra.mxu0 %v1391
  %v1488 = vpop.f32.mrf.mxu0
  %v1489 = vadd.f32 %v1347, %v1488
  %v1490 = vpop.f32.mrf.mxu0
  %1491 = vmatprep.mubr.f32.mxu0 0.0
  %1492 = vmatmul.mubr.f32.gmra.mxu0 %v1393
  %v1493 = vpop.f32.mrf.mxu0
  %v1494 = vadd.f32 %v1352, %v1493
  %v1495 = vpop.f32.mrf.mxu0
  %1496 = vmatprep.mubr.f32.mxu0 0.0
  %1497 = vmatmul.mubr.f32.gmra.mxu0 %v1395
  %v1498 = vpop.f32.mrf.mxu0
  %v1499 = vadd.f32 %v1357, %v1498
  %v1500 = vpop.f32.mrf.mxu0
  %1501 = vdwg.mxu0
  %v1502 = vld [vmem:[%s8] sm:$0x1]
  %v1504 = vlaneseq
  %v1505 = vshrl.u32 %v1504, 7
  %v1506 = vsub.s32 0, %v1505
  %v1507 = vrot.slane %v1502, %v1506
  %v1509 = vadd.f32 %v1464, %v1507
  %v1510 = vadd.f32 %v1469, %v1507
  %v1511 = vadd.f32 %v1474, %v1507
  %v1512 = vadd.f32 %v1479, %v1507
  %v1513 = vadd.f32 %v1484, %v1507
  %v1514 = vadd.f32 %v1489, %v1507
  %v1515 = vadd.f32 %v1494, %v1507
  %v1516 = vadd.f32 %v1499, %v1507
  %vm1517 = vcmask 39936
  %1518 = vst.msk [vmem:[%s12] sm:$0xff] %vm1517, %v1509
  %1519 = vst.msk [vmem:[%s12 + $0x8] sm:$0xff] %vm1517, %v1510
  %1520 = vst.msk [vmem:[%s12 + $0x10] sm:$0xff] %vm1517, %v1511
  %1521 = vst.msk [vmem:[%s12 + $0x18] sm:$0xff] %vm1517, %v1512
  %1522 = vst.msk [vmem:[%s12 + $0x20] sm:$0xff] %vm1517, %v1513
  %1523 = vst.msk [vmem:[%s12 + $0x28] sm:$0xff] %vm1517, %v1514
  %1524 = vst.msk [vmem:[%s12 + $0x30] sm:$0xff] %vm1517, %v1515
  %1525 = vst.msk [vmem:[%s12 + $0x38] sm:$0xff] %vm1517, %v1516
  %v1526 = vld [vmem:[%s11] sm:$0x1f]
  %v1527 = vld [vmem:[%s2] sm:$0xff]
  %v1528 = vlaneseq
  %v1529 = vand.u32 %v1528, 127
  %v1530 = vld [vmem:[%s9] sm:$0x1]
  %v1532 = vlaneseq
  %v1533 = vshrl.u32 %v1532, 7
  %v1534 = vsub.s32 0, %v1533
  %v1535 = vrot.slane %v1530, %v1534
  %v1537 = vadd.f32 %v1535, %v1509
  %v1538 = vld [vmem:[%s323] sm:$0xff]
  %v1540 = vcombine.high %v1537, %v1537
  %v1542 = vunpack.c.l.s4 1966171168
  %v1543 = vunpack.c.0.s8 %v1542
  %v1544 = vlaneseq
  %v1545 = vshrl.u32 %v1544, 7
  %v1546 = vsub.s32 %v1543, %v1545
  %v1547 = vrot.slane %v1537, %v1546
  %v1549 = vunpack.c.l.s4 1966171168
  %v1550 = vunpack.c.0.s8 %v1549
  %v1551 = vlaneseq
  %v1552 = vshrl.u32 %v1551, 7
  %v1553 = vsub.s32 %v1550, %v1552
  %v1554 = vrot.slane %v1540, %v1553
  %v1555 = vcombine.high %v1547, %v1547
  %v1556 = vcombine.high %v1554, %v1554
  %v1558 = vunpack.c.l.s4 1966171168
  %v1559 = vunpack.c.0.s8 %v1558
  %v1560 = vlaneseq
  %v1561 = vshrl.u32 %v1560, 7
  %v1562 = vsub.s32 %v1559, %v1561
  %v1563 = vrot.slane %v1547, %v1562
  %v1565 = vunpack.c.l.s4 1966171168
  %v1566 = vunpack.c.0.s8 %v1565
  %v1567 = vlaneseq
  %v1568 = vshrl.u32 %v1567, 7
  %v1569 = vsub.s32 %v1566, %v1568
  %v1570 = vrot.slane %v1554, %v1569
  %v1572 = vunpack.c.l.s4 1966171168
  %v1573 = vunpack.c.0.s8 %v1572
  %v1574 = vlaneseq
  %v1575 = vshrl.u32 %v1574, 7
  %v1576 = vsub.s32 %v1573, %v1575
  %v1577 = vrot.slane %v1555, %v1576
  %v1579 = vunpack.c.l.s4 1966171168
  %v1580 = vunpack.c.0.s8 %v1579
  %v1581 = vlaneseq
  %v1582 = vshrl.u32 %v1581, 7
  %v1583 = vsub.s32 %v1580, %v1582
  %v1584 = vrot.slane %v1556, %v1583
  %v1585 = vcombine.high %v1563, %v1563
  %v1586 = vcombine.high %v1570, %v1570
  %v1587 = vcombine.high %v1577, %v1577
  %v1588 = vcombine.high %v1584, %v1584
  %v1589 = vlaneseq
  %v1590 = vshrl.u32 %v1589, 7
  %v1591 = vsub.s32 0, %v1590
  %v1592 = vrot.slane %v1563, %v1591
  %v1593 = vlaneseq
  %v1594 = vshrl.u32 %v1593, 7
  %v1595 = vsub.s32 0, %v1594
  %v1596 = vrot.slane %v1577, %v1595
  %v1597 = vlaneseq
  %v1598 = vshrl.u32 %v1597, 7
  %v1599 = vsub.s32 0, %v1598
  %v1600 = vrot.slane %v1585, %v1599
  %v1601 = vlaneseq
  %v1602 = vshrl.u32 %v1601, 7
  %v1603 = vsub.s32 0, %v1602
  %v1604 = vrot.slane %v1587, %v1603
  %v1605 = vlaneseq
  %v1606 = vshrl.u32 %v1605, 7
  %v1607 = vsub.s32 0, %v1606
  %v1608 = vrot.slane %v1570, %v1607
  %v1609 = vlaneseq
  %v1610 = vshrl.u32 %v1609, 7
  %v1611 = vsub.s32 0, %v1610
  %v1612 = vrot.slane %v1584, %v1611
  %v1613 = vlaneseq
  %v1614 = vshrl.u32 %v1613, 7
  %v1615 = vsub.s32 0, %v1614
  %v1616 = vrot.slane %v1586, %v1615
  %v1617 = vlaneseq
  %v1618 = vshrl.u32 %v1617, 7
  %v1619 = vsub.s32 0, %v1618
  %v1620 = vrot.slane %v1588, %v1619
  %v1629 = vadd.f32 %v1592, %v1526
  %v1630 = vadd.f32 %v1596, %v1526
  %v1631 = vadd.f32 %v1600, %v1526
  %v1632 = vadd.f32 %v1604, %v1526
  %v1633 = vadd.f32 %v1608, %v1526
  %v1634 = vadd.f32 %v1612, %v1526
  %v1635 = vadd.f32 %v1616, %v1526
  %v1636 = vadd.f32 %v1620, %v1526
  %vm1637 = vcmask 36864
  %v1638 = vsel %vm1637, %v1629, -inf
  %1639 = vmax.xlane.f32.xlu0 %v1638
  %v1640 = vpop.xlane.xlu0 %1639
  %v1641 = vsel %vm1637, %v1630, -inf
  %1642 = vmax.xlane.f32.xlu0 %v1641
  %v1643 = vpop.xlane.xlu0 %1642
  %v1644 = vsel %vm1637, %v1631, -inf
  %1645 = vmax.xlane.f32.xlu0 %v1644
  %v1646 = vpop.xlane.xlu0 %1645
  %v1647 = vsel %vm1637, %v1632, -inf
  %1648 = vmax.xlane.f32.xlu0 %v1647
  %v1649 = vpop.xlane.xlu0 %1648
  %v1650 = vsel %vm1637, %v1633, -inf
  %1651 = vmax.xlane.f32.xlu0 %v1650
  %v1652 = vpop.xlane.xlu0 %1651
  %v1653 = vsel %vm1637, %v1634, -inf
  %1654 = vmax.xlane.f32.xlu0 %v1653
  %v1655 = vpop.xlane.xlu0 %1654
  %v1656 = vsel %vm1637, %v1635, -inf
  %1657 = vmax.xlane.f32.xlu0 %v1656
  %v1658 = vpop.xlane.xlu0 %1657
  %v1659 = vsel %vm1637, %v1636, -inf
  %1660 = vmax.xlane.f32.xlu0 %v1659
  %v1661 = vpop.xlane.xlu0 %1660
  %vm1662 = vcmp.ge.f32.partialorder %v1629, %v1640
  %vm1663 = vcmp.ge.f32.partialorder %v1630, %v1643
  %vm1664 = vcmp.ge.f32.partialorder %v1631, %v1646
  %vm1665 = vcmp.ge.f32.partialorder %v1632, %v1649
  %vm1666 = vcmp.ge.f32.partialorder %v1633, %v1652
  %vm1667 = vcmp.ge.f32.partialorder %v1634, %v1655
  %vm1668 = vcmp.ge.f32.partialorder %v1635, %v1658
  %vm1669 = vcmp.ge.f32.partialorder %v1636, %v1661
  %v1670 = vsel %vm1662, %v1529, 5
  %v1671 = vsel %vm1663, %v1529, 5
  %v1672 = vsel %vm1664, %v1529, 5
  %v1673 = vsel %vm1665, %v1529, 5
  %v1674 = vsel %vm1666, %v1529, 5
  %v1675 = vsel %vm1667, %v1529, 5
  %v1676 = vsel %vm1668, %v1529, 5
  %v1677 = vsel %vm1669, %v1529, 5
  %v1678 = vsel %vm1637, %v1670, 2147483647
  %v1679 = vand.u32 %v1678, 65535
  %v1680 = vshra.s32 %v1678, 16
  %v1681 = vcvt.s32.f32 %v1679
  %v1682 = vcvt.s32.f32 %v1680
  %1683 = vmin.xlane.f32.xlu0 %v1682
  %v1684 = vpop.xlane.xlu0 %1683
  %vm1685 = vcmp.eq.f32.partialorder %v1682, %v1684
  %v1686 = vsel %vm1685, %v1681, inf
  %1687 = vmin.xlane.f32.xlu0 %v1686
  %v1688 = vpop.xlane.xlu0 %1687
  %v1689 = vcvt.f32.s32 %v1688
  %v1690 = vcvt.f32.s32 %v1684
  %v1691 = vshll.u32 %v1690, 16
  %v1692 = vadd.s32 %v1691, %v1689
  %v1693 = vsel %vm1637, %v1671, 2147483647
  %v1694 = vand.u32 %v1693, 65535
  %v1695 = vshra.s32 %v1693, 16
  %v1696 = vcvt.s32.f32 %v1694
  %v1697 = vcvt.s32.f32 %v1695
  %1698 = vmin.xlane.f32.xlu0 %v1697
  %v1699 = vpop.xlane.xlu0 %1698
  %vm1700 = vcmp.eq.f32.partialorder %v1697, %v1699
  %v1701 = vsel %vm1700, %v1696, inf
  %1702 = vmin.xlane.f32.xlu0 %v1701
  %v1703 = vpop.xlane.xlu0 %1702
  %v1704 = vcvt.f32.s32 %v1703
  %v1705 = vcvt.f32.s32 %v1699
  %v1706 = vshll.u32 %v1705, 16
  %v1707 = vadd.s32 %v1706, %v1704
  %v1708 = vsel %vm1637, %v1672, 2147483647
  %v1709 = vand.u32 %v1708, 65535
  %v1710 = vshra.s32 %v1708, 16
  %v1711 = vcvt.s32.f32 %v1709
  %v1712 = vcvt.s32.f32 %v1710
  %1713 = vmin.xlane.f32.xlu0 %v1712
  %v1714 = vpop.xlane.xlu0 %1713
  %vm1715 = vcmp.eq.f32.partialorder %v1712, %v1714
  %v1716 = vsel %vm1715, %v1711, inf
  %1717 = vmin.xlane.f32.xlu0 %v1716
  %v1718 = vpop.xlane.xlu0 %1717
  %v1719 = vcvt.f32.s32 %v1718
  %v1720 = vcvt.f32.s32 %v1714
  %v1721 = vshll.u32 %v1720, 16
  %v1722 = vadd.s32 %v1721, %v1719
  %v1723 = vsel %vm1637, %v1673, 2147483647
  %v1724 = vand.u32 %v1723, 65535
  %v1725 = vshra.s32 %v1723, 16
  %v1726 = vcvt.s32.f32 %v1724
  %v1727 = vcvt.s32.f32 %v1725
  %1728 = vmin.xlane.f32.xlu0 %v1727
  %v1729 = vpop.xlane.xlu0 %1728
  %vm1730 = vcmp.eq.f32.partialorder %v1727, %v1729
  %v1731 = vsel %vm1730, %v1726, inf
  %1732 = vmin.xlane.f32.xlu0 %v1731
  %v1733 = vpop.xlane.xlu0 %1732
  %v1734 = vcvt.f32.s32 %v1733
  %v1735 = vcvt.f32.s32 %v1729
  %v1736 = vshll.u32 %v1735, 16
  %v1737 = vadd.s32 %v1736, %v1734
  %v1738 = vsel %vm1637, %v1674, 2147483647
  %v1739 = vand.u32 %v1738, 65535
  %v1740 = vshra.s32 %v1738, 16
  %v1741 = vcvt.s32.f32 %v1739
  %v1742 = vcvt.s32.f32 %v1740
  %1743 = vmin.xlane.f32.xlu0 %v1742
  %v1744 = vpop.xlane.xlu0 %1743
  %vm1745 = vcmp.eq.f32.partialorder %v1742, %v1744
  %v1746 = vsel %vm1745, %v1741, inf
  %1747 = vmin.xlane.f32.xlu0 %v1746
  %v1748 = vpop.xlane.xlu0 %1747
  %v1749 = vcvt.f32.s32 %v1748
  %v1750 = vcvt.f32.s32 %v1744
  %v1751 = vshll.u32 %v1750, 16
  %v1752 = vadd.s32 %v1751, %v1749
  %v1753 = vsel %vm1637, %v1675, 2147483647
  %v1754 = vand.u32 %v1753, 65535
  %v1755 = vshra.s32 %v1753, 16
  %v1756 = vcvt.s32.f32 %v1754
  %v1757 = vcvt.s32.f32 %v1755
  %1758 = vmin.xlane.f32.xlu0 %v1757
  %v1759 = vpop.xlane.xlu0 %1758
  %vm1760 = vcmp.eq.f32.partialorder %v1757, %v1759
  %v1761 = vsel %vm1760, %v1756, inf
  %1762 = vmin.xlane.f32.xlu0 %v1761
  %v1763 = vpop.xlane.xlu0 %1762
  %v1764 = vcvt.f32.s32 %v1763
  %v1765 = vcvt.f32.s32 %v1759
  %v1766 = vshll.u32 %v1765, 16
  %v1767 = vadd.s32 %v1766, %v1764
  %v1768 = vsel %vm1637, %v1676, 2147483647
  %v1769 = vand.u32 %v1768, 65535
  %v1770 = vshra.s32 %v1768, 16
  %v1771 = vcvt.s32.f32 %v1769
  %v1772 = vcvt.s32.f32 %v1770
  %1773 = vmin.xlane.f32.xlu0 %v1772
  %v1774 = vpop.xlane.xlu0 %1773
  %vm1775 = vcmp.eq.f32.partialorder %v1772, %v1774
  %v1776 = vsel %vm1775, %v1771, inf
  %1777 = vmin.xlane.f32.xlu0 %v1776
  %v1778 = vpop.xlane.xlu0 %1777
  %v1779 = vcvt.f32.s32 %v1778
  %v1780 = vcvt.f32.s32 %v1774
  %v1781 = vshll.u32 %v1780, 16
  %v1782 = vadd.s32 %v1781, %v1779
  %v1783 = vsel %vm1637, %v1677, 2147483647
  %v1784 = vand.u32 %v1783, 65535
  %v1785 = vshra.s32 %v1783, 16
  %v1786 = vcvt.s32.f32 %v1784
  %v1787 = vcvt.s32.f32 %v1785
  %1788 = vmin.xlane.f32.xlu0 %v1787
  %v1789 = vpop.xlane.xlu0 %1788
  %vm1790 = vcmp.eq.f32.partialorder %v1787, %v1789
  %v1791 = vsel %vm1790, %v1786, inf
  %1792 = vmin.xlane.f32.xlu0 %v1791
  %v1793 = vpop.xlane.xlu0 %1792
  %v1794 = vcvt.f32.s32 %v1793
  %v1795 = vcvt.f32.s32 %v1789
  %v1796 = vshll.u32 %v1795, 16
  %v1797 = vadd.s32 %v1796, %v1794
  %vm1798 = vcmp.gt.f32.partialorder %v1538, 0.5
  %v1800 = vlaneseq
  %v1801 = vshrl.u32 %v1800, 7
  %v1802 = vsub.s32 0, %v1801
  %v1803 = vrot.slane %v1510, %v1802
  %1805 = vbcast.lane.b32.xlu0 %v1803, 256
  %v1806 = vpop.permute.xlu0 %1805
  %v1807 = vlaneseq
  %v1808 = vshrl.u32 %v1807, 7
  %v1809 = vsub.s32 1, %v1808
  %v1810 = vrot.slane %v1510, %v1809
  %1812 = vbcast.lane.b32.xlu0 %v1810, 256
  %v1813 = vpop.permute.xlu0 %1812
  %v1814 = vlaneseq
  %v1815 = vshrl.u32 %v1814, 7
  %v1816 = vsub.s32 2, %v1815
  %v1817 = vrot.slane %v1510, %v1816
  %1819 = vbcast.lane.b32.xlu0 %v1817, 256
  %v1820 = vpop.permute.xlu0 %1819
  %v1821 = vlaneseq
  %v1822 = vshrl.u32 %v1821, 7
  %v1823 = vsub.s32 3, %v1822
  %v1824 = vrot.slane %v1510, %v1823
  %1826 = vbcast.lane.b32.xlu0 %v1824, 256
  %v1827 = vpop.permute.xlu0 %1826
  %v1828 = vlaneseq
  %v1829 = vshrl.u32 %v1828, 7
  %v1830 = vsub.s32 4, %v1829
  %v1831 = vrot.slane %v1510, %v1830
  %1833 = vbcast.lane.b32.xlu0 %v1831, 256
  %v1834 = vpop.permute.xlu0 %1833
  %v1835 = vlaneseq
  %v1836 = vshrl.u32 %v1835, 7
  %v1837 = vsub.s32 5, %v1836
  %v1838 = vrot.slane %v1510, %v1837
  %1840 = vbcast.lane.b32.xlu0 %v1838, 256
  %v1841 = vpop.permute.xlu0 %1840
  %v1842 = vlaneseq
  %v1843 = vshrl.u32 %v1842, 7
  %v1844 = vsub.s32 6, %v1843
  %v1845 = vrot.slane %v1510, %v1844
  %1847 = vbcast.lane.b32.xlu0 %v1845, 256
  %v1848 = vpop.permute.xlu0 %1847
  %v1849 = vlaneseq
  %v1850 = vshrl.u32 %v1849, 7
  %v1851 = vsub.s32 7, %v1850
  %v1852 = vrot.slane %v1510, %v1851
  %1854 = vbcast.lane.b32.xlu0 %v1852, 256
  %v1855 = vpop.permute.xlu0 %1854
  %v1864 = vadd.f32 %v1640, %v1806
  %v1865 = vadd.f32 %v1643, %v1813
  %v1866 = vadd.f32 %v1646, %v1820
  %v1867 = vadd.f32 %v1649, %v1827
  %v1868 = vadd.f32 %v1652, %v1834
  %v1869 = vadd.f32 %v1655, %v1841
  %v1870 = vadd.f32 %v1658, %v1848
  %v1871 = vadd.f32 %v1661, %v1855
  %v1872 = vsel %vm1798, 1, 0
  %1873 = vset.pattern.permute.xlu0 0
  %1874 = vperm.xlu0 %1873, %v1872
  %v1875 = vpop.permute.xlu0 %1874
  %vm1876 = vcmp.eq.s32.totalorder %v1875, 1
  %1885 = vset.pattern.permute.xlu0 0
  %1886 = vperm.xlu0 %1885, %v1864
  %v1887 = vpop.permute.xlu0 %1886
  %1888 = vset.pattern.permute.xlu0 0
  %1889 = vperm.xlu0 %1888, %v1865
  %v1890 = vpop.permute.xlu0 %1889
  %1891 = vset.pattern.permute.xlu0 0
  %1892 = vperm.xlu0 %1891, %v1866
  %v1893 = vpop.permute.xlu0 %1892
  %1894 = vset.pattern.permute.xlu0 0
  %1895 = vperm.xlu0 %1894, %v1867
  %v1896 = vpop.permute.xlu0 %1895
  %1897 = vset.pattern.permute.xlu0 0
  %1898 = vperm.xlu0 %1897, %v1868
  %v1899 = vpop.permute.xlu0 %1898
  %1900 = vset.pattern.permute.xlu0 0
  %1901 = vperm.xlu0 %1900, %v1869
  %v1902 = vpop.permute.xlu0 %1901
  %1903 = vset.pattern.permute.xlu0 0
  %1904 = vperm.xlu0 %1903, %v1870
  %v1905 = vpop.permute.xlu0 %1904
  %1906 = vset.pattern.permute.xlu0 0
  %1907 = vperm.xlu0 %1906, %v1871
  %v1908 = vpop.permute.xlu0 %1907
  %v1909 = vlaneseq
  %v1910 = vshrl.u32 %v1909, 7
  %v1911 = vsub.s32 %v1529, %v1910
  %v1912 = vrot.slane %v1887, %v1911
  %v1913 = vlaneseq
  %v1914 = vshrl.u32 %v1913, 7
  %v1915 = vsub.s32 %v1529, %v1914
  %v1916 = vrot.slane %v1890, %v1915
  %v1917 = vlaneseq
  %v1918 = vshrl.u32 %v1917, 7
  %v1919 = vsub.s32 %v1529, %v1918
  %v1920 = vrot.slane %v1893, %v1919
  %v1921 = vlaneseq
  %v1922 = vshrl.u32 %v1921, 7
  %v1923 = vsub.s32 %v1529, %v1922
  %v1924 = vrot.slane %v1896, %v1923
  %v1925 = vlaneseq
  %v1926 = vshrl.u32 %v1925, 7
  %v1927 = vsub.s32 %v1529, %v1926
  %v1928 = vrot.slane %v1899, %v1927
  %v1929 = vlaneseq
  %v1930 = vshrl.u32 %v1929, 7
  %v1931 = vsub.s32 %v1529, %v1930
  %v1932 = vrot.slane %v1902, %v1931
  %v1933 = vlaneseq
  %v1934 = vshrl.u32 %v1933, 7
  %v1935 = vsub.s32 %v1529, %v1934
  %v1936 = vrot.slane %v1905, %v1935
  %v1937 = vlaneseq
  %v1938 = vshrl.u32 %v1937, 7
  %v1939 = vsub.s32 %v1529, %v1938
  %v1940 = vrot.slane %v1908, %v1939
  %vm1941 = vcmask 1041409
  %v1942 = vsel %vm1941, %v1916, %v1912
  %vm1943 = vcmask 1042434
  %v1944 = vsel %vm1943, %v1920, %v1942
  %vm1945 = vcmask 1043459
  %v1946 = vsel %vm1945, %v1924, %v1944
  %vm1947 = vcmask 1044484
  %v1948 = vsel %vm1947, %v1928, %v1946
  %vm1949 = vcmask 1045509
  %v1950 = vsel %vm1949, %v1932, %v1948
  %vm1951 = vcmask 1046534
  %v1952 = vsel %vm1951, %v1936, %v1950
  %vm1953 = vcmask 1047559
  %v1954 = vsel %vm1953, %v1940, %v1952
  %v1956 = vsel %vm1876, %v1954, %v1537
  %v1957 = vld [vmem:[%s461] sm:$0xff]
  %v1959 = vcombine.high %v1956, %v1956
  %v1961 = vunpack.c.l.s4 1966171168
  %v1962 = vunpack.c.0.s8 %v1961
  %v1963 = vlaneseq
  %v1964 = vshrl.u32 %v1963, 7
  %v1965 = vsub.s32 %v1962, %v1964
  %v1966 = vrot.slane %v1956, %v1965
  %v1968 = vunpack.c.l.s4 1966171168
  %v1969 = vunpack.c.0.s8 %v1968
  %v1970 = vlaneseq
  %v1971 = vshrl.u32 %v1970, 7
  %v1972 = vsub.s32 %v1969, %v1971
  %v1973 = vrot.slane %v1959, %v1972
  %v1974 = vcombine.high %v1966, %v1966
  %v1975 = vcombine.high %v1973, %v1973
  %v1977 = vunpack.c.l.s4 1966171168
  %v1978 = vunpack.c.0.s8 %v1977
  %v1979 = vlaneseq
  %v1980 = vshrl.u32 %v1979, 7
  %v1981 = vsub.s32 %v1978, %v1980
  %v1982 = vrot.slane %v1966, %v1981
  %v1984 = vunpack.c.l.s4 1966171168
  %v1985 = vunpack.c.0.s8 %v1984
  %v1986 = vlaneseq
  %v1987 = vshrl.u32 %v1986, 7
  %v1988 = vsub.s32 %v1985, %v1987
  %v1989 = vrot.slane %v1973, %v1988
  %v1991 = vunpack.c.l.s4 1966171168
  %v1992 = vunpack.c.0.s8 %v1991
  %v1993 = vlaneseq
  %v1994 = vshrl.u32 %v1993, 7
  %v1995 = vsub.s32 %v1992, %v1994
  %v1996 = vrot.slane %v1974, %v1995
  %v1998 = vunpack.c.l.s4 1966171168
  %v1999 = vunpack.c.0.s8 %v1998
  %v2000 = vlaneseq
  %v2001 = vshrl.u32 %v2000, 7
  %v2002 = vsub.s32 %v1999, %v2001
  %v2003 = vrot.slane %v1975, %v2002
  %v2004 = vcombine.high %v1982, %v1982
  %v2005 = vcombine.high %v1989, %v1989
  %v2006 = vcombine.high %v1996, %v1996
  %v2007 = vcombine.high %v2003, %v2003
  %v2008 = vlaneseq
  %v2009 = vshrl.u32 %v2008, 7
  %v2010 = vsub.s32 0, %v2009
  %v2011 = vrot.slane %v1982, %v2010
  %v2012 = vlaneseq
  %v2013 = vshrl.u32 %v2012, 7
  %v2014 = vsub.s32 0, %v2013
  %v2015 = vrot.slane %v1996, %v2014
  %v2016 = vlaneseq
  %v2017 = vshrl.u32 %v2016, 7
  %v2018 = vsub.s32 0, %v2017
  %v2019 = vrot.slane %v2004, %v2018
  %v2020 = vlaneseq
  %v2021 = vshrl.u32 %v2020, 7
  %v2022 = vsub.s32 0, %v2021
  %v2023 = vrot.slane %v2006, %v2022
  %v2024 = vlaneseq
  %v2025 = vshrl.u32 %v2024, 7
  %v2026 = vsub.s32 0, %v2025
  %v2027 = vrot.slane %v1989, %v2026
  %v2028 = vlaneseq
  %v2029 = vshrl.u32 %v2028, 7
  %v2030 = vsub.s32 0, %v2029
  %v2031 = vrot.slane %v2003, %v2030
  %v2032 = vlaneseq
  %v2033 = vshrl.u32 %v2032, 7
  %v2034 = vsub.s32 0, %v2033
  %v2035 = vrot.slane %v2005, %v2034
  %v2036 = vlaneseq
  %v2037 = vshrl.u32 %v2036, 7
  %v2038 = vsub.s32 0, %v2037
  %v2039 = vrot.slane %v2007, %v2038
  %v2048 = vadd.f32 %v2011, %v1526
  %v2049 = vadd.f32 %v2015, %v1526
  %v2050 = vadd.f32 %v2019, %v1526
  %v2051 = vadd.f32 %v2023, %v1526
  %v2052 = vadd.f32 %v2027, %v1526
  %v2053 = vadd.f32 %v2031, %v1526
  %v2054 = vadd.f32 %v2035, %v1526
  %v2055 = vadd.f32 %v2039, %v1526
  %v2056 = vsel %vm1637, %v2048, -inf
  %2057 = vmax.xlane.f32.xlu0 %v2056
  %v2058 = vpop.xlane.xlu0 %2057
  %v2059 = vsel %vm1637, %v2049, -inf
  %2060 = vmax.xlane.f32.xlu0 %v2059
  %v2061 = vpop.xlane.xlu0 %2060
  %v2062 = vsel %vm1637, %v2050, -inf
  %2063 = vmax.xlane.f32.xlu0 %v2062
  %v2064 = vpop.xlane.xlu0 %2063
  %v2065 = vsel %vm1637, %v2051, -inf
  %2066 = vmax.xlane.f32.xlu0 %v2065
  %v2067 = vpop.xlane.xlu0 %2066
  %v2068 = vsel %vm1637, %v2052, -inf
  %2069 = vmax.xlane.f32.xlu0 %v2068
  %v2070 = vpop.xlane.xlu0 %2069
  %v2071 = vsel %vm1637, %v2053, -inf
  %2072 = vmax.xlane.f32.xlu0 %v2071
  %v2073 = vpop.xlane.xlu0 %2072
  %v2074 = vsel %vm1637, %v2054, -inf
  %2075 = vmax.xlane.f32.xlu0 %v2074
  %v2076 = vpop.xlane.xlu0 %2075
  %v2077 = vsel %vm1637, %v2055, -inf
  %2078 = vmax.xlane.f32.xlu0 %v2077
  %v2079 = vpop.xlane.xlu0 %2078
  %vm2080 = vcmp.ge.f32.partialorder %v2048, %v2058
  %vm2081 = vcmp.ge.f32.partialorder %v2049, %v2061
  %vm2082 = vcmp.ge.f32.partialorder %v2050, %v2064
  %vm2083 = vcmp.ge.f32.partialorder %v2051, %v2067
  %vm2084 = vcmp.ge.f32.partialorder %v2052, %v2070
  %vm2085 = vcmp.ge.f32.partialorder %v2053, %v2073
  %vm2086 = vcmp.ge.f32.partialorder %v2054, %v2076
  %vm2087 = vcmp.ge.f32.partialorder %v2055, %v2079
  %v2088 = vsel %vm2080, %v1529, 5
  %v2089 = vsel %vm2081, %v1529, 5
  %v2090 = vsel %vm2082, %v1529, 5
  %v2091 = vsel %vm2083, %v1529, 5
  %v2092 = vsel %vm2084, %v1529, 5
  %v2093 = vsel %vm2085, %v1529, 5
  %v2094 = vsel %vm2086, %v1529, 5
  %v2095 = vsel %vm2087, %v1529, 5
  %v2096 = vsel %vm1637, %v2088, 2147483647
  %v2097 = vand.u32 %v2096, 65535
  %v2098 = vshra.s32 %v2096, 16
  %v2099 = vcvt.s32.f32 %v2097
  %v2100 = vcvt.s32.f32 %v2098
  %2101 = vmin.xlane.f32.xlu0 %v2100
  %v2102 = vpop.xlane.xlu0 %2101
  %vm2103 = vcmp.eq.f32.partialorder %v2100, %v2102
  %v2104 = vsel %vm2103, %v2099, inf
  %2105 = vmin.xlane.f32.xlu0 %v2104
  %v2106 = vpop.xlane.xlu0 %2105
  %v2107 = vcvt.f32.s32 %v2106
  %v2108 = vcvt.f32.s32 %v2102
  %v2109 = vshll.u32 %v2108, 16
  %v2110 = vadd.s32 %v2109, %v2107
  %v2111 = vsel %vm1637, %v2089, 2147483647
  %v2112 = vand.u32 %v2111, 65535
  %v2113 = vshra.s32 %v2111, 16
  %v2114 = vcvt.s32.f32 %v2112
  %v2115 = vcvt.s32.f32 %v2113
  %2116 = vmin.xlane.f32.xlu0 %v2115
  %v2117 = vpop.xlane.xlu0 %2116
  %vm2118 = vcmp.eq.f32.partialorder %v2115, %v2117
  %v2119 = vsel %vm2118, %v2114, inf
  %2120 = vmin.xlane.f32.xlu0 %v2119
  %v2121 = vpop.xlane.xlu0 %2120
  %v2122 = vcvt.f32.s32 %v2121
  %v2123 = vcvt.f32.s32 %v2117
  %v2124 = vshll.u32 %v2123, 16
  %v2125 = vadd.s32 %v2124, %v2122
  %v2126 = vsel %vm1637, %v2090, 2147483647
  %v2127 = vand.u32 %v2126, 65535
  %v2128 = vshra.s32 %v2126, 16
  %v2129 = vcvt.s32.f32 %v2127
  %v2130 = vcvt.s32.f32 %v2128
  %2131 = vmin.xlane.f32.xlu0 %v2130
  %v2132 = vpop.xlane.xlu0 %2131
  %vm2133 = vcmp.eq.f32.partialorder %v2130, %v2132
  %v2134 = vsel %vm2133, %v2129, inf
  %2135 = vmin.xlane.f32.xlu0 %v2134
  %v2136 = vpop.xlane.xlu0 %2135
  %v2137 = vcvt.f32.s32 %v2136
  %v2138 = vcvt.f32.s32 %v2132
  %v2139 = vshll.u32 %v2138, 16
  %v2140 = vadd.s32 %v2139, %v2137
  %v2141 = vsel %vm1637, %v2091, 2147483647
  %v2142 = vand.u32 %v2141, 65535
  %v2143 = vshra.s32 %v2141, 16
  %v2144 = vcvt.s32.f32 %v2142
  %v2145 = vcvt.s32.f32 %v2143
  %2146 = vmin.xlane.f32.xlu0 %v2145
  %v2147 = vpop.xlane.xlu0 %2146
  %vm2148 = vcmp.eq.f32.partialorder %v2145, %v2147
  %v2149 = vsel %vm2148, %v2144, inf
  %2150 = vmin.xlane.f32.xlu0 %v2149
  %v2151 = vpop.xlane.xlu0 %2150
  %v2152 = vcvt.f32.s32 %v2151
  %v2153 = vcvt.f32.s32 %v2147
  %v2154 = vshll.u32 %v2153, 16
  %v2155 = vadd.s32 %v2154, %v2152
  %v2156 = vsel %vm1637, %v2092, 2147483647
  %v2157 = vand.u32 %v2156, 65535
  %v2158 = vshra.s32 %v2156, 16
  %v2159 = vcvt.s32.f32 %v2157
  %v2160 = vcvt.s32.f32 %v2158
  %2161 = vmin.xlane.f32.xlu0 %v2160
  %v2162 = vpop.xlane.xlu0 %2161
  %vm2163 = vcmp.eq.f32.partialorder %v2160, %v2162
  %v2164 = vsel %vm2163, %v2159, inf
  %2165 = vmin.xlane.f32.xlu0 %v2164
  %v2166 = vpop.xlane.xlu0 %2165
  %v2167 = vcvt.f32.s32 %v2166
  %v2168 = vcvt.f32.s32 %v2162
  %v2169 = vshll.u32 %v2168, 16
  %v2170 = vadd.s32 %v2169, %v2167
  %v2171 = vsel %vm1637, %v2093, 2147483647
  %v2172 = vand.u32 %v2171, 65535
  %v2173 = vshra.s32 %v2171, 16
  %v2174 = vcvt.s32.f32 %v2172
  %v2175 = vcvt.s32.f32 %v2173
  %2176 = vmin.xlane.f32.xlu0 %v2175
  %v2177 = vpop.xlane.xlu0 %2176
  %vm2178 = vcmp.eq.f32.partialorder %v2175, %v2177
  %v2179 = vsel %vm2178, %v2174, inf
  %2180 = vmin.xlane.f32.xlu0 %v2179
  %v2181 = vpop.xlane.xlu0 %2180
  %v2182 = vcvt.f32.s32 %v2181
  %v2183 = vcvt.f32.s32 %v2177
  %v2184 = vshll.u32 %v2183, 16
  %v2185 = vadd.s32 %v2184, %v2182
  %v2186 = vsel %vm1637, %v2094, 2147483647
  %v2187 = vand.u32 %v2186, 65535
  %v2188 = vshra.s32 %v2186, 16
  %v2189 = vcvt.s32.f32 %v2187
  %v2190 = vcvt.s32.f32 %v2188
  %2191 = vmin.xlane.f32.xlu0 %v2190
  %v2192 = vpop.xlane.xlu0 %2191
  %vm2193 = vcmp.eq.f32.partialorder %v2190, %v2192
  %v2194 = vsel %vm2193, %v2189, inf
  %2195 = vmin.xlane.f32.xlu0 %v2194
  %v2196 = vpop.xlane.xlu0 %2195
  %v2197 = vcvt.f32.s32 %v2196
  %v2198 = vcvt.f32.s32 %v2192
  %v2199 = vshll.u32 %v2198, 16
  %v2200 = vadd.s32 %v2199, %v2197
  %v2201 = vsel %vm1637, %v2095, 2147483647
  %v2202 = vand.u32 %v2201, 65535
  %v2203 = vshra.s32 %v2201, 16
  %v2204 = vcvt.s32.f32 %v2202
  %v2205 = vcvt.s32.f32 %v2203
  %2206 = vmin.xlane.f32.xlu0 %v2205
  %v2207 = vpop.xlane.xlu0 %2206
  %vm2208 = vcmp.eq.f32.partialorder %v2205, %v2207
  %v2209 = vsel %vm2208, %v2204, inf
  %2210 = vmin.xlane.f32.xlu0 %v2209
  %v2211 = vpop.xlane.xlu0 %2210
  %v2212 = vcvt.f32.s32 %v2211
  %v2213 = vcvt.f32.s32 %v2207
  %v2214 = vshll.u32 %v2213, 16
  %v2215 = vadd.s32 %v2214, %v2212
  %vm2216 = vcmp.gt.f32.partialorder %v1957, 0.5
  %v2218 = vlaneseq
  %v2219 = vshrl.u32 %v2218, 7
  %v2220 = vsub.s32 0, %v2219
  %v2221 = vrot.slane %v1511, %v2220
  %2223 = vbcast.lane.b32.xlu0 %v2221, 256
  %v2224 = vpop.permute.xlu0 %2223
  %v2225 = vlaneseq
  %v2226 = vshrl.u32 %v2225, 7
  %v2227 = vsub.s32 1, %v2226
  %v2228 = vrot.slane %v1511, %v2227
  %2230 = vbcast.lane.b32.xlu0 %v2228, 256
  %v2231 = vpop.permute.xlu0 %2230
  %v2232 = vlaneseq
  %v2233 = vshrl.u32 %v2232, 7
  %v2234 = vsub.s32 2, %v2233
  %v2235 = vrot.slane %v1511, %v2234
  %2237 = vbcast.lane.b32.xlu0 %v2235, 256
  %v2238 = vpop.permute.xlu0 %2237
  %v2239 = vlaneseq
  %v2240 = vshrl.u32 %v2239, 7
  %v2241 = vsub.s32 3, %v2240
  %v2242 = vrot.slane %v1511, %v2241
  %2244 = vbcast.lane.b32.xlu0 %v2242, 256
  %v2245 = vpop.permute.xlu0 %2244
  %v2246 = vlaneseq
  %v2247 = vshrl.u32 %v2246, 7
  %v2248 = vsub.s32 4, %v2247
  %v2249 = vrot.slane %v1511, %v2248
  %2251 = vbcast.lane.b32.xlu0 %v2249, 256
  %v2252 = vpop.permute.xlu0 %2251
  %v2253 = vlaneseq
  %v2254 = vshrl.u32 %v2253, 7
  %v2255 = vsub.s32 5, %v2254
  %v2256 = vrot.slane %v1511, %v2255
  %2258 = vbcast.lane.b32.xlu0 %v2256, 256
  %v2259 = vpop.permute.xlu0 %2258
  %v2260 = vlaneseq
  %v2261 = vshrl.u32 %v2260, 7
  %v2262 = vsub.s32 6, %v2261
  %v2263 = vrot.slane %v1511, %v2262
  %2265 = vbcast.lane.b32.xlu0 %v2263, 256
  %v2266 = vpop.permute.xlu0 %2265
  %v2267 = vlaneseq
  %v2268 = vshrl.u32 %v2267, 7
  %v2269 = vsub.s32 7, %v2268
  %v2270 = vrot.slane %v1511, %v2269
  %2272 = vbcast.lane.b32.xlu0 %v2270, 256
  %v2273 = vpop.permute.xlu0 %2272
  %v2282 = vadd.f32 %v2058, %v2224
  %v2283 = vadd.f32 %v2061, %v2231
  %v2284 = vadd.f32 %v2064, %v2238
  %v2285 = vadd.f32 %v2067, %v2245
  %v2286 = vadd.f32 %v2070, %v2252
  %v2287 = vadd.f32 %v2073, %v2259
  %v2288 = vadd.f32 %v2076, %v2266
  %v2289 = vadd.f32 %v2079, %v2273
  %v2290 = vsel %vm2216, 1, 0
  %2291 = vset.pattern.permute.xlu0 0
  %2292 = vperm.xlu0 %2291, %v2290
  %v2293 = vpop.permute.xlu0 %2292
  %vm2294 = vcmp.eq.s32.totalorder %v2293, 1
  %2303 = vset.pattern.permute.xlu0 0
  %2304 = vperm.xlu0 %2303, %v2282
  %v2305 = vpop.permute.xlu0 %2304
  %2306 = vset.pattern.permute.xlu0 0
  %2307 = vperm.xlu0 %2306, %v2283
  %v2308 = vpop.permute.xlu0 %2307
  %2309 = vset.pattern.permute.xlu0 0
  %2310 = vperm.xlu0 %2309, %v2284
  %v2311 = vpop.permute.xlu0 %2310
  %2312 = vset.pattern.permute.xlu0 0
  %2313 = vperm.xlu0 %2312, %v2285
  %v2314 = vpop.permute.xlu0 %2313
  %2315 = vset.pattern.permute.xlu0 0
  %2316 = vperm.xlu0 %2315, %v2286
  %v2317 = vpop.permute.xlu0 %2316
  %2318 = vset.pattern.permute.xlu0 0
  %2319 = vperm.xlu0 %2318, %v2287
  %v2320 = vpop.permute.xlu0 %2319
  %2321 = vset.pattern.permute.xlu0 0
  %2322 = vperm.xlu0 %2321, %v2288
  %v2323 = vpop.permute.xlu0 %2322
  %2324 = vset.pattern.permute.xlu0 0
  %2325 = vperm.xlu0 %2324, %v2289
  %v2326 = vpop.permute.xlu0 %2325
  %v2327 = vlaneseq
  %v2328 = vshrl.u32 %v2327, 7
  %v2329 = vsub.s32 %v1529, %v2328
  %v2330 = vrot.slane %v2305, %v2329
  %v2331 = vlaneseq
  %v2332 = vshrl.u32 %v2331, 7
  %v2333 = vsub.s32 %v1529, %v2332
  %v2334 = vrot.slane %v2308, %v2333
  %v2335 = vlaneseq
  %v2336 = vshrl.u32 %v2335, 7
  %v2337 = vsub.s32 %v1529, %v2336
  %v2338 = vrot.slane %v2311, %v2337
  %v2339 = vlaneseq
  %v2340 = vshrl.u32 %v2339, 7
  %v2341 = vsub.s32 %v1529, %v2340
  %v2342 = vrot.slane %v2314, %v2341
  %v2343 = vlaneseq
  %v2344 = vshrl.u32 %v2343, 7
  %v2345 = vsub.s32 %v1529, %v2344
  %v2346 = vrot.slane %v2317, %v2345
  %v2347 = vlaneseq
  %v2348 = vshrl.u32 %v2347, 7
  %v2349 = vsub.s32 %v1529, %v2348
  %v2350 = vrot.slane %v2320, %v2349
  %v2351 = vlaneseq
  %v2352 = vshrl.u32 %v2351, 7
  %v2353 = vsub.s32 %v1529, %v2352
  %v2354 = vrot.slane %v2323, %v2353
  %v2355 = vlaneseq
  %v2356 = vshrl.u32 %v2355, 7
  %v2357 = vsub.s32 %v1529, %v2356
  %v2358 = vrot.slane %v2326, %v2357
  %v2359 = vsel %vm1941, %v2334, %v2330
  %v2360 = vsel %vm1943, %v2338, %v2359
  %v2361 = vsel %vm1945, %v2342, %v2360
  %v2362 = vsel %vm1947, %v2346, %v2361
  %v2363 = vsel %vm1949, %v2350, %v2362
  %v2364 = vsel %vm1951, %v2354, %v2363
  %v2365 = vsel %vm1953, %v2358, %v2364
  %v2367 = vsel %vm2294, %v2365, %v1956
  %v2368 = vld [vmem:[%s599] sm:$0xff]
  %v2370 = vcombine.high %v2367, %v2367
  %v2372 = vunpack.c.l.s4 1966171168
  %v2373 = vunpack.c.0.s8 %v2372
  %v2374 = vlaneseq
  %v2375 = vshrl.u32 %v2374, 7
  %v2376 = vsub.s32 %v2373, %v2375
  %v2377 = vrot.slane %v2367, %v2376
  %v2379 = vunpack.c.l.s4 1966171168
  %v2380 = vunpack.c.0.s8 %v2379
  %v2381 = vlaneseq
  %v2382 = vshrl.u32 %v2381, 7
  %v2383 = vsub.s32 %v2380, %v2382
  %v2384 = vrot.slane %v2370, %v2383
  %v2385 = vcombine.high %v2377, %v2377
  %v2386 = vcombine.high %v2384, %v2384
  %v2388 = vunpack.c.l.s4 1966171168
  %v2389 = vunpack.c.0.s8 %v2388
  %v2390 = vlaneseq
  %v2391 = vshrl.u32 %v2390, 7
  %v2392 = vsub.s32 %v2389, %v2391
  %v2393 = vrot.slane %v2377, %v2392
  %v2395 = vunpack.c.l.s4 1966171168
  %v2396 = vunpack.c.0.s8 %v2395
  %v2397 = vlaneseq
  %v2398 = vshrl.u32 %v2397, 7
  %v2399 = vsub.s32 %v2396, %v2398
  %v2400 = vrot.slane %v2384, %v2399
  %v2402 = vunpack.c.l.s4 1966171168
  %v2403 = vunpack.c.0.s8 %v2402
  %v2404 = vlaneseq
  %v2405 = vshrl.u32 %v2404, 7
  %v2406 = vsub.s32 %v2403, %v2405
  %v2407 = vrot.slane %v2385, %v2406
  %v2409 = vunpack.c.l.s4 1966171168
  %v2410 = vunpack.c.0.s8 %v2409
  %v2411 = vlaneseq
  %v2412 = vshrl.u32 %v2411, 7
  %v2413 = vsub.s32 %v2410, %v2412
  %v2414 = vrot.slane %v2386, %v2413
  %v2415 = vcombine.high %v2393, %v2393
  %v2416 = vcombine.high %v2400, %v2400
  %v2417 = vcombine.high %v2407, %v2407
  %v2418 = vcombine.high %v2414, %v2414
  %v2419 = vlaneseq
  %v2420 = vshrl.u32 %v2419, 7
  %v2421 = vsub.s32 0, %v2420
  %v2422 = vrot.slane %v2393, %v2421
  %v2423 = vlaneseq
  %v2424 = vshrl.u32 %v2423, 7
  %v2425 = vsub.s32 0, %v2424
  %v2426 = vrot.slane %v2407, %v2425
  %v2427 = vlaneseq
  %v2428 = vshrl.u32 %v2427, 7
  %v2429 = vsub.s32 0, %v2428
  %v2430 = vrot.slane %v2415, %v2429
  %v2431 = vlaneseq
  %v2432 = vshrl.u32 %v2431, 7
  %v2433 = vsub.s32 0, %v2432
  %v2434 = vrot.slane %v2417, %v2433
  %v2435 = vlaneseq
  %v2436 = vshrl.u32 %v2435, 7
  %v2437 = vsub.s32 0, %v2436
  %v2438 = vrot.slane %v2400, %v2437
  %v2439 = vlaneseq
  %v2440 = vshrl.u32 %v2439, 7
  %v2441 = vsub.s32 0, %v2440
  %v2442 = vrot.slane %v2414, %v2441
  %v2443 = vlaneseq
  %v2444 = vshrl.u32 %v2443, 7
  %v2445 = vsub.s32 0, %v2444
  %v2446 = vrot.slane %v2416, %v2445
  %v2447 = vlaneseq
  %v2448 = vshrl.u32 %v2447, 7
  %v2449 = vsub.s32 0, %v2448
  %v2450 = vrot.slane %v2418, %v2449
  %v2459 = vadd.f32 %v2422, %v1526
  %v2460 = vadd.f32 %v2426, %v1526
  %v2461 = vadd.f32 %v2430, %v1526
  %v2462 = vadd.f32 %v2434, %v1526
  %v2463 = vadd.f32 %v2438, %v1526
  %v2464 = vadd.f32 %v2442, %v1526
  %v2465 = vadd.f32 %v2446, %v1526
  %v2466 = vadd.f32 %v2450, %v1526
  %v2467 = vsel %vm1637, %v2459, -inf
  %2468 = vmax.xlane.f32.xlu0 %v2467
  %v2469 = vpop.xlane.xlu0 %2468
  %v2470 = vsel %vm1637, %v2460, -inf
  %2471 = vmax.xlane.f32.xlu0 %v2470
  %v2472 = vpop.xlane.xlu0 %2471
  %v2473 = vsel %vm1637, %v2461, -inf
  %2474 = vmax.xlane.f32.xlu0 %v2473
  %v2475 = vpop.xlane.xlu0 %2474
  %v2476 = vsel %vm1637, %v2462, -inf
  %2477 = vmax.xlane.f32.xlu0 %v2476
  %v2478 = vpop.xlane.xlu0 %2477
  %v2479 = vsel %vm1637, %v2463, -inf
  %2480 = vmax.xlane.f32.xlu0 %v2479
  %v2481 = vpop.xlane.xlu0 %2480
  %v2482 = vsel %vm1637, %v2464, -inf
  %2483 = vmax.xlane.f32.xlu0 %v2482
  %v2484 = vpop.xlane.xlu0 %2483
  %v2485 = vsel %vm1637, %v2465, -inf
  %2486 = vmax.xlane.f32.xlu0 %v2485
  %v2487 = vpop.xlane.xlu0 %2486
  %v2488 = vsel %vm1637, %v2466, -inf
  %2489 = vmax.xlane.f32.xlu0 %v2488
  %v2490 = vpop.xlane.xlu0 %2489
  %vm2491 = vcmp.ge.f32.partialorder %v2459, %v2469
  %vm2492 = vcmp.ge.f32.partialorder %v2460, %v2472
  %vm2493 = vcmp.ge.f32.partialorder %v2461, %v2475
  %vm2494 = vcmp.ge.f32.partialorder %v2462, %v2478
  %vm2495 = vcmp.ge.f32.partialorder %v2463, %v2481
  %vm2496 = vcmp.ge.f32.partialorder %v2464, %v2484
  %vm2497 = vcmp.ge.f32.partialorder %v2465, %v2487
  %vm2498 = vcmp.ge.f32.partialorder %v2466, %v2490
  %v2499 = vsel %vm2491, %v1529, 5
  %v2500 = vsel %vm2492, %v1529, 5
  %v2501 = vsel %vm2493, %v1529, 5
  %v2502 = vsel %vm2494, %v1529, 5
  %v2503 = vsel %vm2495, %v1529, 5
  %v2504 = vsel %vm2496, %v1529, 5
  %v2505 = vsel %vm2497, %v1529, 5
  %v2506 = vsel %vm2498, %v1529, 5
  %v2507 = vsel %vm1637, %v2499, 2147483647
  %v2508 = vand.u32 %v2507, 65535
  %v2509 = vshra.s32 %v2507, 16
  %v2510 = vcvt.s32.f32 %v2508
  %v2511 = vcvt.s32.f32 %v2509
  %2512 = vmin.xlane.f32.xlu0 %v2511
  %v2513 = vpop.xlane.xlu0 %2512
  %vm2514 = vcmp.eq.f32.partialorder %v2511, %v2513
  %v2515 = vsel %vm2514, %v2510, inf
  %2516 = vmin.xlane.f32.xlu0 %v2515
  %v2517 = vpop.xlane.xlu0 %2516
  %v2518 = vcvt.f32.s32 %v2517
  %v2519 = vcvt.f32.s32 %v2513
  %v2520 = vshll.u32 %v2519, 16
  %v2521 = vadd.s32 %v2520, %v2518
  %v2522 = vsel %vm1637, %v2500, 2147483647
  %v2523 = vand.u32 %v2522, 65535
  %v2524 = vshra.s32 %v2522, 16
  %v2525 = vcvt.s32.f32 %v2523
  %v2526 = vcvt.s32.f32 %v2524
  %2527 = vmin.xlane.f32.xlu0 %v2526
  %v2528 = vpop.xlane.xlu0 %2527
  %vm2529 = vcmp.eq.f32.partialorder %v2526, %v2528
  %v2530 = vsel %vm2529, %v2525, inf
  %2531 = vmin.xlane.f32.xlu0 %v2530
  %v2532 = vpop.xlane.xlu0 %2531
  %v2533 = vcvt.f32.s32 %v2532
  %v2534 = vcvt.f32.s32 %v2528
  %v2535 = vshll.u32 %v2534, 16
  %v2536 = vadd.s32 %v2535, %v2533
  %v2537 = vsel %vm1637, %v2501, 2147483647
  %v2538 = vand.u32 %v2537, 65535
  %v2539 = vshra.s32 %v2537, 16
  %v2540 = vcvt.s32.f32 %v2538
  %v2541 = vcvt.s32.f32 %v2539
  %2542 = vmin.xlane.f32.xlu0 %v2541
  %v2543 = vpop.xlane.xlu0 %2542
  %vm2544 = vcmp.eq.f32.partialorder %v2541, %v2543
  %v2545 = vsel %vm2544, %v2540, inf
  %2546 = vmin.xlane.f32.xlu0 %v2545
  %v2547 = vpop.xlane.xlu0 %2546
  %v2548 = vcvt.f32.s32 %v2547
  %v2549 = vcvt.f32.s32 %v2543
  %v2550 = vshll.u32 %v2549, 16
  %v2551 = vadd.s32 %v2550, %v2548
  %v2552 = vsel %vm1637, %v2502, 2147483647
  %v2553 = vand.u32 %v2552, 65535
  %v2554 = vshra.s32 %v2552, 16
  %v2555 = vcvt.s32.f32 %v2553
  %v2556 = vcvt.s32.f32 %v2554
  %2557 = vmin.xlane.f32.xlu0 %v2556
  %v2558 = vpop.xlane.xlu0 %2557
  %vm2559 = vcmp.eq.f32.partialorder %v2556, %v2558
  %v2560 = vsel %vm2559, %v2555, inf
  %2561 = vmin.xlane.f32.xlu0 %v2560
  %v2562 = vpop.xlane.xlu0 %2561
  %v2563 = vcvt.f32.s32 %v2562
  %v2564 = vcvt.f32.s32 %v2558
  %v2565 = vshll.u32 %v2564, 16
  %v2566 = vadd.s32 %v2565, %v2563
  %v2567 = vsel %vm1637, %v2503, 2147483647
  %v2568 = vand.u32 %v2567, 65535
  %v2569 = vshra.s32 %v2567, 16
  %v2570 = vcvt.s32.f32 %v2568
  %v2571 = vcvt.s32.f32 %v2569
  %2572 = vmin.xlane.f32.xlu0 %v2571
  %v2573 = vpop.xlane.xlu0 %2572
  %vm2574 = vcmp.eq.f32.partialorder %v2571, %v2573
  %v2575 = vsel %vm2574, %v2570, inf
  %2576 = vmin.xlane.f32.xlu0 %v2575
  %v2577 = vpop.xlane.xlu0 %2576
  %v2578 = vcvt.f32.s32 %v2577
  %v2579 = vcvt.f32.s32 %v2573
  %v2580 = vshll.u32 %v2579, 16
  %v2581 = vadd.s32 %v2580, %v2578
  %v2582 = vsel %vm1637, %v2504, 2147483647
  %v2583 = vand.u32 %v2582, 65535
  %v2584 = vshra.s32 %v2582, 16
  %v2585 = vcvt.s32.f32 %v2583
  %v2586 = vcvt.s32.f32 %v2584
  %2587 = vmin.xlane.f32.xlu0 %v2586
  %v2588 = vpop.xlane.xlu0 %2587
  %vm2589 = vcmp.eq.f32.partialorder %v2586, %v2588
  %v2590 = vsel %vm2589, %v2585, inf
  %2591 = vmin.xlane.f32.xlu0 %v2590
  %v2592 = vpop.xlane.xlu0 %2591
  %v2593 = vcvt.f32.s32 %v2592
  %v2594 = vcvt.f32.s32 %v2588
  %v2595 = vshll.u32 %v2594, 16
  %v2596 = vadd.s32 %v2595, %v2593
  %v2597 = vsel %vm1637, %v2505, 2147483647
  %v2598 = vand.u32 %v2597, 65535
  %v2599 = vshra.s32 %v2597, 16
  %v2600 = vcvt.s32.f32 %v2598
  %v2601 = vcvt.s32.f32 %v2599
  %2602 = vmin.xlane.f32.xlu0 %v2601
  %v2603 = vpop.xlane.xlu0 %2602
  %vm2604 = vcmp.eq.f32.partialorder %v2601, %v2603
  %v2605 = vsel %vm2604, %v2600, inf
  %2606 = vmin.xlane.f32.xlu0 %v2605
  %v2607 = vpop.xlane.xlu0 %2606
  %v2608 = vcvt.f32.s32 %v2607
  %v2609 = vcvt.f32.s32 %v2603
  %v2610 = vshll.u32 %v2609, 16
  %v2611 = vadd.s32 %v2610, %v2608
  %v2612 = vsel %vm1637, %v2506, 2147483647
  %v2613 = vand.u32 %v2612, 65535
  %v2614 = vshra.s32 %v2612, 16
  %v2615 = vcvt.s32.f32 %v2613
  %v2616 = vcvt.s32.f32 %v2614
  %2617 = vmin.xlane.f32.xlu0 %v2616
  %v2618 = vpop.xlane.xlu0 %2617
  %vm2619 = vcmp.eq.f32.partialorder %v2616, %v2618
  %v2620 = vsel %vm2619, %v2615, inf
  %2621 = vmin.xlane.f32.xlu0 %v2620
  %v2622 = vpop.xlane.xlu0 %2621
  %v2623 = vcvt.f32.s32 %v2622
  %v2624 = vcvt.f32.s32 %v2618
  %v2625 = vshll.u32 %v2624, 16
  %v2626 = vadd.s32 %v2625, %v2623
  %vm2627 = vcmp.gt.f32.partialorder %v2368, 0.5
  %v2629 = vlaneseq
  %v2630 = vshrl.u32 %v2629, 7
  %v2631 = vsub.s32 0, %v2630
  %v2632 = vrot.slane %v1512, %v2631
  %2634 = vbcast.lane.b32.xlu0 %v2632, 256
  %v2635 = vpop.permute.xlu0 %2634
  %v2636 = vlaneseq
  %v2637 = vshrl.u32 %v2636, 7
  %v2638 = vsub.s32 1, %v2637
  %v2639 = vrot.slane %v1512, %v2638
  %2641 = vbcast.lane.b32.xlu0 %v2639, 256
  %v2642 = vpop.permute.xlu0 %2641
  %v2643 = vlaneseq
  %v2644 = vshrl.u32 %v2643, 7
  %v2645 = vsub.s32 2, %v2644
  %v2646 = vrot.slane %v1512, %v2645
  %2648 = vbcast.lane.b32.xlu0 %v2646, 256
  %v2649 = vpop.permute.xlu0 %2648
  %v2650 = vlaneseq
  %v2651 = vshrl.u32 %v2650, 7
  %v2652 = vsub.s32 3, %v2651
  %v2653 = vrot.slane %v1512, %v2652
  %2655 = vbcast.lane.b32.xlu0 %v2653, 256
  %v2656 = vpop.permute.xlu0 %2655
  %v2657 = vlaneseq
  %v2658 = vshrl.u32 %v2657, 7
  %v2659 = vsub.s32 4, %v2658
  %v2660 = vrot.slane %v1512, %v2659
  %2662 = vbcast.lane.b32.xlu0 %v2660, 256
  %v2663 = vpop.permute.xlu0 %2662
  %v2664 = vlaneseq
  %v2665 = vshrl.u32 %v2664, 7
  %v2666 = vsub.s32 5, %v2665
  %v2667 = vrot.slane %v1512, %v2666
  %2669 = vbcast.lane.b32.xlu0 %v2667, 256
  %v2670 = vpop.permute.xlu0 %2669
  %v2671 = vlaneseq
  %v2672 = vshrl.u32 %v2671, 7
  %v2673 = vsub.s32 6, %v2672
  %v2674 = vrot.slane %v1512, %v2673
  %2676 = vbcast.lane.b32.xlu0 %v2674, 256
  %v2677 = vpop.permute.xlu0 %2676
  %v2678 = vlaneseq
  %v2679 = vshrl.u32 %v2678, 7
  %v2680 = vsub.s32 7, %v2679
  %v2681 = vrot.slane %v1512, %v2680
  %2683 = vbcast.lane.b32.xlu0 %v2681, 256
  %v2684 = vpop.permute.xlu0 %2683
  %v2693 = vadd.f32 %v2469, %v2635
  %v2694 = vadd.f32 %v2472, %v2642
  %v2695 = vadd.f32 %v2475, %v2649
  %v2696 = vadd.f32 %v2478, %v2656
  %v2697 = vadd.f32 %v2481, %v2663
  %v2698 = vadd.f32 %v2484, %v2670
  %v2699 = vadd.f32 %v2487, %v2677
  %v2700 = vadd.f32 %v2490, %v2684
  %v2701 = vsel %vm2627, 1, 0
  %2702 = vset.pattern.permute.xlu0 0
  %2703 = vperm.xlu0 %2702, %v2701
  %v2704 = vpop.permute.xlu0 %2703
  %vm2705 = vcmp.eq.s32.totalorder %v2704, 1
  %2714 = vset.pattern.permute.xlu0 0
  %2715 = vperm.xlu0 %2714, %v2693
  %v2716 = vpop.permute.xlu0 %2715
  %2717 = vset.pattern.permute.xlu0 0
  %2718 = vperm.xlu0 %2717, %v2694
  %v2719 = vpop.permute.xlu0 %2718
  %2720 = vset.pattern.permute.xlu0 0
  %2721 = vperm.xlu0 %2720, %v2695
  %v2722 = vpop.permute.xlu0 %2721
  %2723 = vset.pattern.permute.xlu0 0
  %2724 = vperm.xlu0 %2723, %v2696
  %v2725 = vpop.permute.xlu0 %2724
  %2726 = vset.pattern.permute.xlu0 0
  %2727 = vperm.xlu0 %2726, %v2697
  %v2728 = vpop.permute.xlu0 %2727
  %2729 = vset.pattern.permute.xlu0 0
  %2730 = vperm.xlu0 %2729, %v2698
  %v2731 = vpop.permute.xlu0 %2730
  %2732 = vset.pattern.permute.xlu0 0
  %2733 = vperm.xlu0 %2732, %v2699
  %v2734 = vpop.permute.xlu0 %2733
  %2735 = vset.pattern.permute.xlu0 0
  %2736 = vperm.xlu0 %2735, %v2700
  %v2737 = vpop.permute.xlu0 %2736
  %v2738 = vlaneseq
  %v2739 = vshrl.u32 %v2738, 7
  %v2740 = vsub.s32 %v1529, %v2739
  %v2741 = vrot.slane %v2716, %v2740
  %v2742 = vlaneseq
  %v2743 = vshrl.u32 %v2742, 7
  %v2744 = vsub.s32 %v1529, %v2743
  %v2745 = vrot.slane %v2719, %v2744
  %v2746 = vlaneseq
  %v2747 = vshrl.u32 %v2746, 7
  %v2748 = vsub.s32 %v1529, %v2747
  %v2749 = vrot.slane %v2722, %v2748
  %v2750 = vlaneseq
  %v2751 = vshrl.u32 %v2750, 7
  %v2752 = vsub.s32 %v1529, %v2751
  %v2753 = vrot.slane %v2725, %v2752
  %v2754 = vlaneseq
  %v2755 = vshrl.u32 %v2754, 7
  %v2756 = vsub.s32 %v1529, %v2755
  %v2757 = vrot.slane %v2728, %v2756
  %v2758 = vlaneseq
  %v2759 = vshrl.u32 %v2758, 7
  %v2760 = vsub.s32 %v1529, %v2759
  %v2761 = vrot.slane %v2731, %v2760
  %v2762 = vlaneseq
  %v2763 = vshrl.u32 %v2762, 7
  %v2764 = vsub.s32 %v1529, %v2763
  %v2765 = vrot.slane %v2734, %v2764
  %v2766 = vlaneseq
  %v2767 = vshrl.u32 %v2766, 7
  %v2768 = vsub.s32 %v1529, %v2767
  %v2769 = vrot.slane %v2737, %v2768
  %v2770 = vsel %vm1941, %v2745, %v2741
  %v2771 = vsel %vm1943, %v2749, %v2770
  %v2772 = vsel %vm1945, %v2753, %v2771
  %v2773 = vsel %vm1947, %v2757, %v2772
  %v2774 = vsel %vm1949, %v2761, %v2773
  %v2775 = vsel %vm1951, %v2765, %v2774
  %v2776 = vsel %vm1953, %v2769, %v2775
  %v2778 = vsel %vm2705, %v2776, %v2367
  %v2779 = vld [vmem:[%s602] sm:$0xff]
  %v2781 = vcombine.high %v2778, %v2778
  %v2783 = vunpack.c.l.s4 1966171168
  %v2784 = vunpack.c.0.s8 %v2783
  %v2785 = vlaneseq
  %v2786 = vshrl.u32 %v2785, 7
  %v2787 = vsub.s32 %v2784, %v2786
  %v2788 = vrot.slane %v2778, %v2787
  %v2790 = vunpack.c.l.s4 1966171168
  %v2791 = vunpack.c.0.s8 %v2790
  %v2792 = vlaneseq
  %v2793 = vshrl.u32 %v2792, 7
  %v2794 = vsub.s32 %v2791, %v2793
  %v2795 = vrot.slane %v2781, %v2794
  %v2796 = vcombine.high %v2788, %v2788
  %v2797 = vcombine.high %v2795, %v2795
  %v2799 = vunpack.c.l.s4 1966171168
  %v2800 = vunpack.c.0.s8 %v2799
  %v2801 = vlaneseq
  %v2802 = vshrl.u32 %v2801, 7
  %v2803 = vsub.s32 %v2800, %v2802
  %v2804 = vrot.slane %v2788, %v2803
  %v2806 = vunpack.c.l.s4 1966171168
  %v2807 = vunpack.c.0.s8 %v2806
  %v2808 = vlaneseq
  %v2809 = vshrl.u32 %v2808, 7
  %v2810 = vsub.s32 %v2807, %v2809
  %v2811 = vrot.slane %v2795, %v2810
  %v2813 = vunpack.c.l.s4 1966171168
  %v2814 = vunpack.c.0.s8 %v2813
  %v2815 = vlaneseq
  %v2816 = vshrl.u32 %v2815, 7
  %v2817 = vsub.s32 %v2814, %v2816
  %v2818 = vrot.slane %v2796, %v2817
  %v2820 = vunpack.c.l.s4 1966171168
  %v2821 = vunpack.c.0.s8 %v2820
  %v2822 = vlaneseq
  %v2823 = vshrl.u32 %v2822, 7
  %v2824 = vsub.s32 %v2821, %v2823
  %v2825 = vrot.slane %v2797, %v2824
  %v2826 = vcombine.high %v2804, %v2804
  %v2827 = vcombine.high %v2811, %v2811
  %v2828 = vcombine.high %v2818, %v2818
  %v2829 = vcombine.high %v2825, %v2825
  %v2830 = vlaneseq
  %v2831 = vshrl.u32 %v2830, 7
  %v2832 = vsub.s32 0, %v2831
  %v2833 = vrot.slane %v2804, %v2832
  %v2834 = vlaneseq
  %v2835 = vshrl.u32 %v2834, 7
  %v2836 = vsub.s32 0, %v2835
  %v2837 = vrot.slane %v2818, %v2836
  %v2838 = vlaneseq
  %v2839 = vshrl.u32 %v2838, 7
  %v2840 = vsub.s32 0, %v2839
  %v2841 = vrot.slane %v2826, %v2840
  %v2842 = vlaneseq
  %v2843 = vshrl.u32 %v2842, 7
  %v2844 = vsub.s32 0, %v2843
  %v2845 = vrot.slane %v2828, %v2844
  %v2846 = vlaneseq
  %v2847 = vshrl.u32 %v2846, 7
  %v2848 = vsub.s32 0, %v2847
  %v2849 = vrot.slane %v2811, %v2848
  %v2850 = vlaneseq
  %v2851 = vshrl.u32 %v2850, 7
  %v2852 = vsub.s32 0, %v2851
  %v2853 = vrot.slane %v2825, %v2852
  %v2854 = vlaneseq
  %v2855 = vshrl.u32 %v2854, 7
  %v2856 = vsub.s32 0, %v2855
  %v2857 = vrot.slane %v2827, %v2856
  %v2858 = vlaneseq
  %v2859 = vshrl.u32 %v2858, 7
  %v2860 = vsub.s32 0, %v2859
  %v2861 = vrot.slane %v2829, %v2860
  %v2870 = vadd.f32 %v2833, %v1526
  %v2871 = vadd.f32 %v2837, %v1526
  %v2872 = vadd.f32 %v2841, %v1526
  %v2873 = vadd.f32 %v2845, %v1526
  %v2874 = vadd.f32 %v2849, %v1526
  %v2875 = vadd.f32 %v2853, %v1526
  %v2876 = vadd.f32 %v2857, %v1526
  %v2877 = vadd.f32 %v2861, %v1526
  %v2878 = vsel %vm1637, %v2870, -inf
  %2879 = vmax.xlane.f32.xlu0 %v2878
  %v2880 = vpop.xlane.xlu0 %2879
  %v2881 = vsel %vm1637, %v2871, -inf
  %2882 = vmax.xlane.f32.xlu0 %v2881
  %v2883 = vpop.xlane.xlu0 %2882
  %v2884 = vsel %vm1637, %v2872, -inf
  %2885 = vmax.xlane.f32.xlu0 %v2884
  %v2886 = vpop.xlane.xlu0 %2885
  %v2887 = vsel %vm1637, %v2873, -inf
  %2888 = vmax.xlane.f32.xlu0 %v2887
  %v2889 = vpop.xlane.xlu0 %2888
  %v2890 = vsel %vm1637, %v2874, -inf
  %2891 = vmax.xlane.f32.xlu0 %v2890
  %v2892 = vpop.xlane.xlu0 %2891
  %v2893 = vsel %vm1637, %v2875, -inf
  %2894 = vmax.xlane.f32.xlu0 %v2893
  %v2895 = vpop.xlane.xlu0 %2894
  %v2896 = vsel %vm1637, %v2876, -inf
  %2897 = vmax.xlane.f32.xlu0 %v2896
  %v2898 = vpop.xlane.xlu0 %2897
  %v2899 = vsel %vm1637, %v2877, -inf
  %2900 = vmax.xlane.f32.xlu0 %v2899
  %v2901 = vpop.xlane.xlu0 %2900
  %vm2902 = vcmp.ge.f32.partialorder %v2870, %v2880
  %vm2903 = vcmp.ge.f32.partialorder %v2871, %v2883
  %vm2904 = vcmp.ge.f32.partialorder %v2872, %v2886
  %vm2905 = vcmp.ge.f32.partialorder %v2873, %v2889
  %vm2906 = vcmp.ge.f32.partialorder %v2874, %v2892
  %vm2907 = vcmp.ge.f32.partialorder %v2875, %v2895
  %vm2908 = vcmp.ge.f32.partialorder %v2876, %v2898
  %vm2909 = vcmp.ge.f32.partialorder %v2877, %v2901
  %v2910 = vsel %vm2902, %v1529, 5
  %v2911 = vsel %vm2903, %v1529, 5
  %v2912 = vsel %vm2904, %v1529, 5
  %v2913 = vsel %vm2905, %v1529, 5
  %v2914 = vsel %vm2906, %v1529, 5
  %v2915 = vsel %vm2907, %v1529, 5
  %v2916 = vsel %vm2908, %v1529, 5
  %v2917 = vsel %vm2909, %v1529, 5
  %v2918 = vsel %vm1637, %v2910, 2147483647
  %v2919 = vand.u32 %v2918, 65535
  %v2920 = vshra.s32 %v2918, 16
  %v2921 = vcvt.s32.f32 %v2919
  %v2922 = vcvt.s32.f32 %v2920
  %2923 = vmin.xlane.f32.xlu0 %v2922
  %v2924 = vpop.xlane.xlu0 %2923
  %vm2925 = vcmp.eq.f32.partialorder %v2922, %v2924
  %v2926 = vsel %vm2925, %v2921, inf
  %2927 = vmin.xlane.f32.xlu0 %v2926
  %v2928 = vpop.xlane.xlu0 %2927
  %v2929 = vcvt.f32.s32 %v2928
  %v2930 = vcvt.f32.s32 %v2924
  %v2931 = vshll.u32 %v2930, 16
  %v2932 = vadd.s32 %v2931, %v2929
  %v2933 = vsel %vm1637, %v2911, 2147483647
  %v2934 = vand.u32 %v2933, 65535
  %v2935 = vshra.s32 %v2933, 16
  %v2936 = vcvt.s32.f32 %v2934
  %v2937 = vcvt.s32.f32 %v2935
  %2938 = vmin.xlane.f32.xlu0 %v2937
  %v2939 = vpop.xlane.xlu0 %2938
  %vm2940 = vcmp.eq.f32.partialorder %v2937, %v2939
  %v2941 = vsel %vm2940, %v2936, inf
  %2942 = vmin.xlane.f32.xlu0 %v2941
  %v2943 = vpop.xlane.xlu0 %2942
  %v2944 = vcvt.f32.s32 %v2943
  %v2945 = vcvt.f32.s32 %v2939
  %v2946 = vshll.u32 %v2945, 16
  %v2947 = vadd.s32 %v2946, %v2944
  %v2948 = vsel %vm1637, %v2912, 2147483647
  %v2949 = vand.u32 %v2948, 65535
  %v2950 = vshra.s32 %v2948, 16
  %v2951 = vcvt.s32.f32 %v2949
  %v2952 = vcvt.s32.f32 %v2950
  %2953 = vmin.xlane.f32.xlu0 %v2952
  %v2954 = vpop.xlane.xlu0 %2953
  %vm2955 = vcmp.eq.f32.partialorder %v2952, %v2954
  %v2956 = vsel %vm2955, %v2951, inf
  %2957 = vmin.xlane.f32.xlu0 %v2956
  %v2958 = vpop.xlane.xlu0 %2957
  %v2959 = vcvt.f32.s32 %v2958
  %v2960 = vcvt.f32.s32 %v2954
  %v2961 = vshll.u32 %v2960, 16
  %v2962 = vadd.s32 %v2961, %v2959
  %v2963 = vsel %vm1637, %v2913, 2147483647
  %v2964 = vand.u32 %v2963, 65535
  %v2965 = vshra.s32 %v2963, 16
  %v2966 = vcvt.s32.f32 %v2964
  %v2967 = vcvt.s32.f32 %v2965
  %2968 = vmin.xlane.f32.xlu0 %v2967
  %v2969 = vpop.xlane.xlu0 %2968
  %vm2970 = vcmp.eq.f32.partialorder %v2967, %v2969
  %v2971 = vsel %vm2970, %v2966, inf
  %2972 = vmin.xlane.f32.xlu0 %v2971
  %v2973 = vpop.xlane.xlu0 %2972
  %v2974 = vcvt.f32.s32 %v2973
  %v2975 = vcvt.f32.s32 %v2969
  %v2976 = vshll.u32 %v2975, 16
  %v2977 = vadd.s32 %v2976, %v2974
  %v2978 = vsel %vm1637, %v2914, 2147483647
  %v2979 = vand.u32 %v2978, 65535
  %v2980 = vshra.s32 %v2978, 16
  %v2981 = vcvt.s32.f32 %v2979
  %v2982 = vcvt.s32.f32 %v2980
  %2983 = vmin.xlane.f32.xlu0 %v2982
  %v2984 = vpop.xlane.xlu0 %2983
  %vm2985 = vcmp.eq.f32.partialorder %v2982, %v2984
  %v2986 = vsel %vm2985, %v2981, inf
  %2987 = vmin.xlane.f32.xlu0 %v2986
  %v2988 = vpop.xlane.xlu0 %2987
  %v2989 = vcvt.f32.s32 %v2988
  %v2990 = vcvt.f32.s32 %v2984
  %v2991 = vshll.u32 %v2990, 16
  %v2992 = vadd.s32 %v2991, %v2989
  %v2993 = vsel %vm1637, %v2915, 2147483647
  %v2994 = vand.u32 %v2993, 65535
  %v2995 = vshra.s32 %v2993, 16
  %v2996 = vcvt.s32.f32 %v2994
  %v2997 = vcvt.s32.f32 %v2995
  %2998 = vmin.xlane.f32.xlu0 %v2997
  %v2999 = vpop.xlane.xlu0 %2998
  %vm3000 = vcmp.eq.f32.partialorder %v2997, %v2999
  %v3001 = vsel %vm3000, %v2996, inf
  %3002 = vmin.xlane.f32.xlu0 %v3001
  %v3003 = vpop.xlane.xlu0 %3002
  %v3004 = vcvt.f32.s32 %v3003
  %v3005 = vcvt.f32.s32 %v2999
  %v3006 = vshll.u32 %v3005, 16
  %v3007 = vadd.s32 %v3006, %v3004
  %v3008 = vsel %vm1637, %v2916, 2147483647
  %v3009 = vand.u32 %v3008, 65535
  %v3010 = vshra.s32 %v3008, 16
  %v3011 = vcvt.s32.f32 %v3009
  %v3012 = vcvt.s32.f32 %v3010
  %3013 = vmin.xlane.f32.xlu0 %v3012
  %v3014 = vpop.xlane.xlu0 %3013
  %vm3015 = vcmp.eq.f32.partialorder %v3012, %v3014
  %v3016 = vsel %vm3015, %v3011, inf
  %3017 = vmin.xlane.f32.xlu0 %v3016
  %v3018 = vpop.xlane.xlu0 %3017
  %v3019 = vcvt.f32.s32 %v3018
  %v3020 = vcvt.f32.s32 %v3014
  %v3021 = vshll.u32 %v3020, 16
  %v3022 = vadd.s32 %v3021, %v3019
  %v3023 = vsel %vm1637, %v2917, 2147483647
  %v3024 = vand.u32 %v3023, 65535
  %v3025 = vshra.s32 %v3023, 16
  %v3026 = vcvt.s32.f32 %v3024
  %v3027 = vcvt.s32.f32 %v3025
  %3028 = vmin.xlane.f32.xlu0 %v3027
  %v3029 = vpop.xlane.xlu0 %3028
  %vm3030 = vcmp.eq.f32.partialorder %v3027, %v3029
  %v3031 = vsel %vm3030, %v3026, inf
  %3032 = vmin.xlane.f32.xlu0 %v3031
  %v3033 = vpop.xlane.xlu0 %3032
  %v3034 = vcvt.f32.s32 %v3033
  %v3035 = vcvt.f32.s32 %v3029
  %v3036 = vshll.u32 %v3035, 16
  %v3037 = vadd.s32 %v3036, %v3034
  %vm3038 = vcmp.gt.f32.partialorder %v2779, 0.5
  %v3040 = vlaneseq
  %v3041 = vshrl.u32 %v3040, 7
  %v3042 = vsub.s32 0, %v3041
  %v3043 = vrot.slane %v1513, %v3042
  %3045 = vbcast.lane.b32.xlu0 %v3043, 256
  %v3046 = vpop.permute.xlu0 %3045
  %v3047 = vlaneseq
  %v3048 = vshrl.u32 %v3047, 7
  %v3049 = vsub.s32 1, %v3048
  %v3050 = vrot.slane %v1513, %v3049
  %3052 = vbcast.lane.b32.xlu0 %v3050, 256
  %v3053 = vpop.permute.xlu0 %3052
  %v3054 = vlaneseq
  %v3055 = vshrl.u32 %v3054, 7
  %v3056 = vsub.s32 2, %v3055
  %v3057 = vrot.slane %v1513, %v3056
  %3059 = vbcast.lane.b32.xlu0 %v3057, 256
  %v3060 = vpop.permute.xlu0 %3059
  %v3061 = vlaneseq
  %v3062 = vshrl.u32 %v3061, 7
  %v3063 = vsub.s32 3, %v3062
  %v3064 = vrot.slane %v1513, %v3063
  %3066 = vbcast.lane.b32.xlu0 %v3064, 256
  %v3067 = vpop.permute.xlu0 %3066
  %v3068 = vlaneseq
  %v3069 = vshrl.u32 %v3068, 7
  %v3070 = vsub.s32 4, %v3069
  %v3071 = vrot.slane %v1513, %v3070
  %3073 = vbcast.lane.b32.xlu0 %v3071, 256
  %v3074 = vpop.permute.xlu0 %3073
  %v3075 = vlaneseq
  %v3076 = vshrl.u32 %v3075, 7
  %v3077 = vsub.s32 5, %v3076
  %v3078 = vrot.slane %v1513, %v3077
  %3080 = vbcast.lane.b32.xlu0 %v3078, 256
  %v3081 = vpop.permute.xlu0 %3080
  %v3082 = vlaneseq
  %v3083 = vshrl.u32 %v3082, 7
  %v3084 = vsub.s32 6, %v3083
  %v3085 = vrot.slane %v1513, %v3084
  %3087 = vbcast.lane.b32.xlu0 %v3085, 256
  %v3088 = vpop.permute.xlu0 %3087
  %v3089 = vlaneseq
  %v3090 = vshrl.u32 %v3089, 7
  %v3091 = vsub.s32 7, %v3090
  %v3092 = vrot.slane %v1513, %v3091
  %3094 = vbcast.lane.b32.xlu0 %v3092, 256
  %v3095 = vpop.permute.xlu0 %3094
  %v3104 = vadd.f32 %v2880, %v3046
  %v3105 = vadd.f32 %v2883, %v3053
  %v3106 = vadd.f32 %v2886, %v3060
  %v3107 = vadd.f32 %v2889, %v3067
  %v3108 = vadd.f32 %v2892, %v3074
  %v3109 = vadd.f32 %v2895, %v3081
  %v3110 = vadd.f32 %v2898, %v3088
  %v3111 = vadd.f32 %v2901, %v3095
  %v3112 = vsel %vm3038, 1, 0
  %3113 = vset.pattern.permute.xlu0 0
  %3114 = vperm.xlu0 %3113, %v3112
  %v3115 = vpop.permute.xlu0 %3114
  %vm3116 = vcmp.eq.s32.totalorder %v3115, 1
  %3125 = vset.pattern.permute.xlu0 0
  %3126 = vperm.xlu0 %3125, %v3104
  %v3127 = vpop.permute.xlu0 %3126
  %3128 = vset.pattern.permute.xlu0 0
  %3129 = vperm.xlu0 %3128, %v3105
  %v3130 = vpop.permute.xlu0 %3129
  %3131 = vset.pattern.permute.xlu0 0
  %3132 = vperm.xlu0 %3131, %v3106
  %v3133 = vpop.permute.xlu0 %3132
  %3134 = vset.pattern.permute.xlu0 0
  %3135 = vperm.xlu0 %3134, %v3107
  %v3136 = vpop.permute.xlu0 %3135
  %3137 = vset.pattern.permute.xlu0 0
  %3138 = vperm.xlu0 %3137, %v3108
  %v3139 = vpop.permute.xlu0 %3138
  %3140 = vset.pattern.permute.xlu0 0
  %3141 = vperm.xlu0 %3140, %v3109
  %v3142 = vpop.permute.xlu0 %3141
  %3143 = vset.pattern.permute.xlu0 0
  %3144 = vperm.xlu0 %3143, %v3110
  %v3145 = vpop.permute.xlu0 %3144
  %3146 = vset.pattern.permute.xlu0 0
  %3147 = vperm.xlu0 %3146, %v3111
  %v3148 = vpop.permute.xlu0 %3147
  %v3149 = vlaneseq
  %v3150 = vshrl.u32 %v3149, 7
  %v3151 = vsub.s32 %v1529, %v3150
  %v3152 = vrot.slane %v3127, %v3151
  %v3153 = vlaneseq
  %v3154 = vshrl.u32 %v3153, 7
  %v3155 = vsub.s32 %v1529, %v3154
  %v3156 = vrot.slane %v3130, %v3155
  %v3157 = vlaneseq
  %v3158 = vshrl.u32 %v3157, 7
  %v3159 = vsub.s32 %v1529, %v3158
  %v3160 = vrot.slane %v3133, %v3159
  %v3161 = vlaneseq
  %v3162 = vshrl.u32 %v3161, 7
  %v3163 = vsub.s32 %v1529, %v3162
  %v3164 = vrot.slane %v3136, %v3163
  %v3165 = vlaneseq
  %v3166 = vshrl.u32 %v3165, 7
  %v3167 = vsub.s32 %v1529, %v3166
  %v3168 = vrot.slane %v3139, %v3167
  %v3169 = vlaneseq
  %v3170 = vshrl.u32 %v3169, 7
  %v3171 = vsub.s32 %v1529, %v3170
  %v3172 = vrot.slane %v3142, %v3171
  %v3173 = vlaneseq
  %v3174 = vshrl.u32 %v3173, 7
  %v3175 = vsub.s32 %v1529, %v3174
  %v3176 = vrot.slane %v3145, %v3175
  %v3177 = vlaneseq
  %v3178 = vshrl.u32 %v3177, 7
  %v3179 = vsub.s32 %v1529, %v3178
  %v3180 = vrot.slane %v3148, %v3179
  %v3181 = vsel %vm1941, %v3156, %v3152
  %v3182 = vsel %vm1943, %v3160, %v3181
  %v3183 = vsel %vm1945, %v3164, %v3182
  %v3184 = vsel %vm1947, %v3168, %v3183
  %v3185 = vsel %vm1949, %v3172, %v3184
  %v3186 = vsel %vm1951, %v3176, %v3185
  %v3187 = vsel %vm1953, %v3180, %v3186
  %v3189 = vsel %vm3116, %v3187, %v2778
  %v3190 = vld [vmem:[%s464] sm:$0xff]
  %v3192 = vcombine.high %v3189, %v3189
  %v3194 = vunpack.c.l.s4 1966171168
  %v3195 = vunpack.c.0.s8 %v3194
  %v3196 = vlaneseq
  %v3197 = vshrl.u32 %v3196, 7
  %v3198 = vsub.s32 %v3195, %v3197
  %v3199 = vrot.slane %v3189, %v3198
  %v3201 = vunpack.c.l.s4 1966171168
  %v3202 = vunpack.c.0.s8 %v3201
  %v3203 = vlaneseq
  %v3204 = vshrl.u32 %v3203, 7
  %v3205 = vsub.s32 %v3202, %v3204
  %v3206 = vrot.slane %v3192, %v3205
  %v3207 = vcombine.high %v3199, %v3199
  %v3208 = vcombine.high %v3206, %v3206
  %v3210 = vunpack.c.l.s4 1966171168
  %v3211 = vunpack.c.0.s8 %v3210
  %v3212 = vlaneseq
  %v3213 = vshrl.u32 %v3212, 7
  %v3214 = vsub.s32 %v3211, %v3213
  %v3215 = vrot.slane %v3199, %v3214
  %v3217 = vunpack.c.l.s4 1966171168
  %v3218 = vunpack.c.0.s8 %v3217
  %v3219 = vlaneseq
  %v3220 = vshrl.u32 %v3219, 7
  %v3221 = vsub.s32 %v3218, %v3220
  %v3222 = vrot.slane %v3206, %v3221
  %v3224 = vunpack.c.l.s4 1966171168
  %v3225 = vunpack.c.0.s8 %v3224
  %v3226 = vlaneseq
  %v3227 = vshrl.u32 %v3226, 7
  %v3228 = vsub.s32 %v3225, %v3227
  %v3229 = vrot.slane %v3207, %v3228
  %v3231 = vunpack.c.l.s4 1966171168
  %v3232 = vunpack.c.0.s8 %v3231
  %v3233 = vlaneseq
  %v3234 = vshrl.u32 %v3233, 7
  %v3235 = vsub.s32 %v3232, %v3234
  %v3236 = vrot.slane %v3208, %v3235
  %v3237 = vcombine.high %v3215, %v3215
  %v3238 = vcombine.high %v3222, %v3222
  %v3239 = vcombine.high %v3229, %v3229
  %v3240 = vcombine.high %v3236, %v3236
  %v3241 = vlaneseq
  %v3242 = vshrl.u32 %v3241, 7
  %v3243 = vsub.s32 0, %v3242
  %v3244 = vrot.slane %v3215, %v3243
  %v3245 = vlaneseq
  %v3246 = vshrl.u32 %v3245, 7
  %v3247 = vsub.s32 0, %v3246
  %v3248 = vrot.slane %v3229, %v3247
  %v3249 = vlaneseq
  %v3250 = vshrl.u32 %v3249, 7
  %v3251 = vsub.s32 0, %v3250
  %v3252 = vrot.slane %v3237, %v3251
  %v3253 = vlaneseq
  %v3254 = vshrl.u32 %v3253, 7
  %v3255 = vsub.s32 0, %v3254
  %v3256 = vrot.slane %v3239, %v3255
  %v3257 = vlaneseq
  %v3258 = vshrl.u32 %v3257, 7
  %v3259 = vsub.s32 0, %v3258
  %v3260 = vrot.slane %v3222, %v3259
  %v3261 = vlaneseq
  %v3262 = vshrl.u32 %v3261, 7
  %v3263 = vsub.s32 0, %v3262
  %v3264 = vrot.slane %v3236, %v3263
  %v3265 = vlaneseq
  %v3266 = vshrl.u32 %v3265, 7
  %v3267 = vsub.s32 0, %v3266
  %v3268 = vrot.slane %v3238, %v3267
  %v3269 = vlaneseq
  %v3270 = vshrl.u32 %v3269, 7
  %v3271 = vsub.s32 0, %v3270
  %v3272 = vrot.slane %v3240, %v3271
  %v3281 = vadd.f32 %v3244, %v1526
  %v3282 = vadd.f32 %v3248, %v1526
  %v3283 = vadd.f32 %v3252, %v1526
  %v3284 = vadd.f32 %v3256, %v1526
  %v3285 = vadd.f32 %v3260, %v1526
  %v3286 = vadd.f32 %v3264, %v1526
  %v3287 = vadd.f32 %v3268, %v1526
  %v3288 = vadd.f32 %v3272, %v1526
  %v3289 = vsel %vm1637, %v3281, -inf
  %3290 = vmax.xlane.f32.xlu0 %v3289
  %v3291 = vpop.xlane.xlu0 %3290
  %v3292 = vsel %vm1637, %v3282, -inf
  %3293 = vmax.xlane.f32.xlu0 %v3292
  %v3294 = vpop.xlane.xlu0 %3293
  %v3295 = vsel %vm1637, %v3283, -inf
  %3296 = vmax.xlane.f32.xlu0 %v3295
  %v3297 = vpop.xlane.xlu0 %3296
  %v3298 = vsel %vm1637, %v3284, -inf
  %3299 = vmax.xlane.f32.xlu0 %v3298
  %v3300 = vpop.xlane.xlu0 %3299
  %v3301 = vsel %vm1637, %v3285, -inf
  %3302 = vmax.xlane.f32.xlu0 %v3301
  %v3303 = vpop.xlane.xlu0 %3302
  %v3304 = vsel %vm1637, %v3286, -inf
  %3305 = vmax.xlane.f32.xlu0 %v3304
  %v3306 = vpop.xlane.xlu0 %3305
  %v3307 = vsel %vm1637, %v3287, -inf
  %3308 = vmax.xlane.f32.xlu0 %v3307
  %v3309 = vpop.xlane.xlu0 %3308
  %v3310 = vsel %vm1637, %v3288, -inf
  %3311 = vmax.xlane.f32.xlu0 %v3310
  %v3312 = vpop.xlane.xlu0 %3311
  %vm3313 = vcmp.ge.f32.partialorder %v3281, %v3291
  %vm3314 = vcmp.ge.f32.partialorder %v3282, %v3294
  %vm3315 = vcmp.ge.f32.partialorder %v3283, %v3297
  %vm3316 = vcmp.ge.f32.partialorder %v3284, %v3300
  %vm3317 = vcmp.ge.f32.partialorder %v3285, %v3303
  %vm3318 = vcmp.ge.f32.partialorder %v3286, %v3306
  %vm3319 = vcmp.ge.f32.partialorder %v3287, %v3309
  %vm3320 = vcmp.ge.f32.partialorder %v3288, %v3312
  %v3321 = vsel %vm3313, %v1529, 5
  %v3322 = vsel %vm3314, %v1529, 5
  %v3323 = vsel %vm3315, %v1529, 5
  %v3324 = vsel %vm3316, %v1529, 5
  %v3325 = vsel %vm3317, %v1529, 5
  %v3326 = vsel %vm3318, %v1529, 5
  %v3327 = vsel %vm3319, %v1529, 5
  %v3328 = vsel %vm3320, %v1529, 5
  %v3329 = vsel %vm1637, %v3321, 2147483647
  %v3330 = vand.u32 %v3329, 65535
  %v3331 = vshra.s32 %v3329, 16
  %v3332 = vcvt.s32.f32 %v3330
  %v3333 = vcvt.s32.f32 %v3331
  %3334 = vmin.xlane.f32.xlu0 %v3333
  %v3335 = vpop.xlane.xlu0 %3334
  %vm3336 = vcmp.eq.f32.partialorder %v3333, %v3335
  %v3337 = vsel %vm3336, %v3332, inf
  %3338 = vmin.xlane.f32.xlu0 %v3337
  %v3339 = vpop.xlane.xlu0 %3338
  %v3340 = vcvt.f32.s32 %v3339
  %v3341 = vcvt.f32.s32 %v3335
  %v3342 = vshll.u32 %v3341, 16
  %v3343 = vadd.s32 %v3342, %v3340
  %v3344 = vsel %vm1637, %v3322, 2147483647
  %v3345 = vand.u32 %v3344, 65535
  %v3346 = vshra.s32 %v3344, 16
  %v3347 = vcvt.s32.f32 %v3345
  %v3348 = vcvt.s32.f32 %v3346
  %3349 = vmin.xlane.f32.xlu0 %v3348
  %v3350 = vpop.xlane.xlu0 %3349
  %vm3351 = vcmp.eq.f32.partialorder %v3348, %v3350
  %v3352 = vsel %vm3351, %v3347, inf
  %3353 = vmin.xlane.f32.xlu0 %v3352
  %v3354 = vpop.xlane.xlu0 %3353
  %v3355 = vcvt.f32.s32 %v3354
  %v3356 = vcvt.f32.s32 %v3350
  %v3357 = vshll.u32 %v3356, 16
  %v3358 = vadd.s32 %v3357, %v3355
  %v3359 = vsel %vm1637, %v3323, 2147483647
  %v3360 = vand.u32 %v3359, 65535
  %v3361 = vshra.s32 %v3359, 16
  %v3362 = vcvt.s32.f32 %v3360
  %v3363 = vcvt.s32.f32 %v3361
  %3364 = vmin.xlane.f32.xlu0 %v3363
  %v3365 = vpop.xlane.xlu0 %3364
  %vm3366 = vcmp.eq.f32.partialorder %v3363, %v3365
  %v3367 = vsel %vm3366, %v3362, inf
  %3368 = vmin.xlane.f32.xlu0 %v3367
  %v3369 = vpop.xlane.xlu0 %3368
  %v3370 = vcvt.f32.s32 %v3369
  %v3371 = vcvt.f32.s32 %v3365
  %v3372 = vshll.u32 %v3371, 16
  %v3373 = vadd.s32 %v3372, %v3370
  %v3374 = vsel %vm1637, %v3324, 2147483647
  %v3375 = vand.u32 %v3374, 65535
  %v3376 = vshra.s32 %v3374, 16
  %v3377 = vcvt.s32.f32 %v3375
  %v3378 = vcvt.s32.f32 %v3376
  %3379 = vmin.xlane.f32.xlu0 %v3378
  %v3380 = vpop.xlane.xlu0 %3379
  %vm3381 = vcmp.eq.f32.partialorder %v3378, %v3380
  %v3382 = vsel %vm3381, %v3377, inf
  %3383 = vmin.xlane.f32.xlu0 %v3382
  %v3384 = vpop.xlane.xlu0 %3383
  %v3385 = vcvt.f32.s32 %v3384
  %v3386 = vcvt.f32.s32 %v3380
  %v3387 = vshll.u32 %v3386, 16
  %v3388 = vadd.s32 %v3387, %v3385
  %v3389 = vsel %vm1637, %v3325, 2147483647
  %v3390 = vand.u32 %v3389, 65535
  %v3391 = vshra.s32 %v3389, 16
  %v3392 = vcvt.s32.f32 %v3390
  %v3393 = vcvt.s32.f32 %v3391
  %3394 = vmin.xlane.f32.xlu0 %v3393
  %v3395 = vpop.xlane.xlu0 %3394
  %vm3396 = vcmp.eq.f32.partialorder %v3393, %v3395
  %v3397 = vsel %vm3396, %v3392, inf
  %3398 = vmin.xlane.f32.xlu0 %v3397
  %v3399 = vpop.xlane.xlu0 %3398
  %v3400 = vcvt.f32.s32 %v3399
  %v3401 = vcvt.f32.s32 %v3395
  %v3402 = vshll.u32 %v3401, 16
  %v3403 = vadd.s32 %v3402, %v3400
  %v3404 = vsel %vm1637, %v3326, 2147483647
  %v3405 = vand.u32 %v3404, 65535
  %v3406 = vshra.s32 %v3404, 16
  %v3407 = vcvt.s32.f32 %v3405
  %v3408 = vcvt.s32.f32 %v3406
  %3409 = vmin.xlane.f32.xlu0 %v3408
  %v3410 = vpop.xlane.xlu0 %3409
  %vm3411 = vcmp.eq.f32.partialorder %v3408, %v3410
  %v3412 = vsel %vm3411, %v3407, inf
  %3413 = vmin.xlane.f32.xlu0 %v3412
  %v3414 = vpop.xlane.xlu0 %3413
  %v3415 = vcvt.f32.s32 %v3414
  %v3416 = vcvt.f32.s32 %v3410
  %v3417 = vshll.u32 %v3416, 16
  %v3418 = vadd.s32 %v3417, %v3415
  %v3419 = vsel %vm1637, %v3327, 2147483647
  %v3420 = vand.u32 %v3419, 65535
  %v3421 = vshra.s32 %v3419, 16
  %v3422 = vcvt.s32.f32 %v3420
  %v3423 = vcvt.s32.f32 %v3421
  %3424 = vmin.xlane.f32.xlu0 %v3423
  %v3425 = vpop.xlane.xlu0 %3424
  %vm3426 = vcmp.eq.f32.partialorder %v3423, %v3425
  %v3427 = vsel %vm3426, %v3422, inf
  %3428 = vmin.xlane.f32.xlu0 %v3427
  %v3429 = vpop.xlane.xlu0 %3428
  %v3430 = vcvt.f32.s32 %v3429
  %v3431 = vcvt.f32.s32 %v3425
  %v3432 = vshll.u32 %v3431, 16
  %v3433 = vadd.s32 %v3432, %v3430
  %v3434 = vsel %vm1637, %v3328, 2147483647
  %v3435 = vand.u32 %v3434, 65535
  %v3436 = vshra.s32 %v3434, 16
  %v3437 = vcvt.s32.f32 %v3435
  %v3438 = vcvt.s32.f32 %v3436
  %3439 = vmin.xlane.f32.xlu0 %v3438
  %v3440 = vpop.xlane.xlu0 %3439
  %vm3441 = vcmp.eq.f32.partialorder %v3438, %v3440
  %v3442 = vsel %vm3441, %v3437, inf
  %3443 = vmin.xlane.f32.xlu0 %v3442
  %v3444 = vpop.xlane.xlu0 %3443
  %v3445 = vcvt.f32.s32 %v3444
  %v3446 = vcvt.f32.s32 %v3440
  %v3447 = vshll.u32 %v3446, 16
  %v3448 = vadd.s32 %v3447, %v3445
  %vm3449 = vcmp.gt.f32.partialorder %v3190, 0.5
  %v3451 = vlaneseq
  %v3452 = vshrl.u32 %v3451, 7
  %v3453 = vsub.s32 0, %v3452
  %v3454 = vrot.slane %v1514, %v3453
  %3456 = vbcast.lane.b32.xlu0 %v3454, 256
  %v3457 = vpop.permute.xlu0 %3456
  %v3458 = vlaneseq
  %v3459 = vshrl.u32 %v3458, 7
  %v3460 = vsub.s32 1, %v3459
  %v3461 = vrot.slane %v1514, %v3460
  %3463 = vbcast.lane.b32.xlu0 %v3461, 256
  %v3464 = vpop.permute.xlu0 %3463
  %v3465 = vlaneseq
  %v3466 = vshrl.u32 %v3465, 7
  %v3467 = vsub.s32 2, %v3466
  %v3468 = vrot.slane %v1514, %v3467
  %3470 = vbcast.lane.b32.xlu0 %v3468, 256
  %v3471 = vpop.permute.xlu0 %3470
  %v3472 = vlaneseq
  %v3473 = vshrl.u32 %v3472, 7
  %v3474 = vsub.s32 3, %v3473
  %v3475 = vrot.slane %v1514, %v3474
  %3477 = vbcast.lane.b32.xlu0 %v3475, 256
  %v3478 = vpop.permute.xlu0 %3477
  %v3479 = vlaneseq
  %v3480 = vshrl.u32 %v3479, 7
  %v3481 = vsub.s32 4, %v3480
  %v3482 = vrot.slane %v1514, %v3481
  %3484 = vbcast.lane.b32.xlu0 %v3482, 256
  %v3485 = vpop.permute.xlu0 %3484
  %v3486 = vlaneseq
  %v3487 = vshrl.u32 %v3486, 7
  %v3488 = vsub.s32 5, %v3487
  %v3489 = vrot.slane %v1514, %v3488
  %3491 = vbcast.lane.b32.xlu0 %v3489, 256
  %v3492 = vpop.permute.xlu0 %3491
  %v3493 = vlaneseq
  %v3494 = vshrl.u32 %v3493, 7
  %v3495 = vsub.s32 6, %v3494
  %v3496 = vrot.slane %v1514, %v3495
  %3498 = vbcast.lane.b32.xlu0 %v3496, 256
  %v3499 = vpop.permute.xlu0 %3498
  %v3500 = vlaneseq
  %v3501 = vshrl.u32 %v3500, 7
  %v3502 = vsub.s32 7, %v3501
  %v3503 = vrot.slane %v1514, %v3502
  %3505 = vbcast.lane.b32.xlu0 %v3503, 256
  %v3506 = vpop.permute.xlu0 %3505
  %v3515 = vadd.f32 %v3291, %v3457
  %v3516 = vadd.f32 %v3294, %v3464
  %v3517 = vadd.f32 %v3297, %v3471
  %v3518 = vadd.f32 %v3300, %v3478
  %v3519 = vadd.f32 %v3303, %v3485
  %v3520 = vadd.f32 %v3306, %v3492
  %v3521 = vadd.f32 %v3309, %v3499
  %v3522 = vadd.f32 %v3312, %v3506
  %v3523 = vsel %vm3449, 1, 0
  %3524 = vset.pattern.permute.xlu0 0
  %3525 = vperm.xlu0 %3524, %v3523
  %v3526 = vpop.permute.xlu0 %3525
  %vm3527 = vcmp.eq.s32.totalorder %v3526, 1
  %3536 = vset.pattern.permute.xlu0 0
  %3537 = vperm.xlu0 %3536, %v3515
  %v3538 = vpop.permute.xlu0 %3537
  %3539 = vset.pattern.permute.xlu0 0
  %3540 = vperm.xlu0 %3539, %v3516
  %v3541 = vpop.permute.xlu0 %3540
  %3542 = vset.pattern.permute.xlu0 0
  %3543 = vperm.xlu0 %3542, %v3517
  %v3544 = vpop.permute.xlu0 %3543
  %3545 = vset.pattern.permute.xlu0 0
  %3546 = vperm.xlu0 %3545, %v3518
  %v3547 = vpop.permute.xlu0 %3546
  %3548 = vset.pattern.permute.xlu0 0
  %3549 = vperm.xlu0 %3548, %v3519
  %v3550 = vpop.permute.xlu0 %3549
  %3551 = vset.pattern.permute.xlu0 0
  %3552 = vperm.xlu0 %3551, %v3520
  %v3553 = vpop.permute.xlu0 %3552
  %3554 = vset.pattern.permute.xlu0 0
  %3555 = vperm.xlu0 %3554, %v3521
  %v3556 = vpop.permute.xlu0 %3555
  %3557 = vset.pattern.permute.xlu0 0
  %3558 = vperm.xlu0 %3557, %v3522
  %v3559 = vpop.permute.xlu0 %3558
  %v3560 = vlaneseq
  %v3561 = vshrl.u32 %v3560, 7
  %v3562 = vsub.s32 %v1529, %v3561
  %v3563 = vrot.slane %v3538, %v3562
  %v3564 = vlaneseq
  %v3565 = vshrl.u32 %v3564, 7
  %v3566 = vsub.s32 %v1529, %v3565
  %v3567 = vrot.slane %v3541, %v3566
  %v3568 = vlaneseq
  %v3569 = vshrl.u32 %v3568, 7
  %v3570 = vsub.s32 %v1529, %v3569
  %v3571 = vrot.slane %v3544, %v3570
  %v3572 = vlaneseq
  %v3573 = vshrl.u32 %v3572, 7
  %v3574 = vsub.s32 %v1529, %v3573
  %v3575 = vrot.slane %v3547, %v3574
  %v3576 = vlaneseq
  %v3577 = vshrl.u32 %v3576, 7
  %v3578 = vsub.s32 %v1529, %v3577
  %v3579 = vrot.slane %v3550, %v3578
  %v3580 = vlaneseq
  %v3581 = vshrl.u32 %v3580, 7
  %v3582 = vsub.s32 %v1529, %v3581
  %v3583 = vrot.slane %v3553, %v3582
  %v3584 = vlaneseq
  %v3585 = vshrl.u32 %v3584, 7
  %v3586 = vsub.s32 %v1529, %v3585
  %v3587 = vrot.slane %v3556, %v3586
  %v3588 = vlaneseq
  %v3589 = vshrl.u32 %v3588, 7
  %v3590 = vsub.s32 %v1529, %v3589
  %v3591 = vrot.slane %v3559, %v3590
  %v3592 = vsel %vm1941, %v3567, %v3563
  %v3593 = vsel %vm1943, %v3571, %v3592
  %v3594 = vsel %vm1945, %v3575, %v3593
  %v3595 = vsel %vm1947, %v3579, %v3594
  %v3596 = vsel %vm1949, %v3583, %v3595
  %v3597 = vsel %vm1951, %v3587, %v3596
  %v3598 = vsel %vm1953, %v3591, %v3597
  %v3600 = vsel %vm3527, %v3598, %v3189
  %v3601 = vld [vmem:[%s326] sm:$0xff]
  %v3603 = vcombine.high %v3600, %v3600
  %v3605 = vunpack.c.l.s4 1966171168
  %v3606 = vunpack.c.0.s8 %v3605
  %v3607 = vlaneseq
  %v3608 = vshrl.u32 %v3607, 7
  %v3609 = vsub.s32 %v3606, %v3608
  %v3610 = vrot.slane %v3600, %v3609
  %v3612 = vunpack.c.l.s4 1966171168
  %v3613 = vunpack.c.0.s8 %v3612
  %v3614 = vlaneseq
  %v3615 = vshrl.u32 %v3614, 7
  %v3616 = vsub.s32 %v3613, %v3615
  %v3617 = vrot.slane %v3603, %v3616
  %v3618 = vcombine.high %v3610, %v3610
  %v3619 = vcombine.high %v3617, %v3617
  %v3621 = vunpack.c.l.s4 1966171168
  %v3622 = vunpack.c.0.s8 %v3621
  %v3623 = vlaneseq
  %v3624 = vshrl.u32 %v3623, 7
  %v3625 = vsub.s32 %v3622, %v3624
  %v3626 = vrot.slane %v3610, %v3625
  %v3628 = vunpack.c.l.s4 1966171168
  %v3629 = vunpack.c.0.s8 %v3628
  %v3630 = vlaneseq
  %v3631 = vshrl.u32 %v3630, 7
  %v3632 = vsub.s32 %v3629, %v3631
  %v3633 = vrot.slane %v3617, %v3632
  %v3635 = vunpack.c.l.s4 1966171168
  %v3636 = vunpack.c.0.s8 %v3635
  %v3637 = vlaneseq
  %v3638 = vshrl.u32 %v3637, 7
  %v3639 = vsub.s32 %v3636, %v3638
  %v3640 = vrot.slane %v3618, %v3639
  %v3642 = vunpack.c.l.s4 1966171168
  %v3643 = vunpack.c.0.s8 %v3642
  %v3644 = vlaneseq
  %v3645 = vshrl.u32 %v3644, 7
  %v3646 = vsub.s32 %v3643, %v3645
  %v3647 = vrot.slane %v3619, %v3646
  %v3648 = vcombine.high %v3626, %v3626
  %v3649 = vcombine.high %v3633, %v3633
  %v3650 = vcombine.high %v3640, %v3640
  %v3651 = vcombine.high %v3647, %v3647
  %v3652 = vlaneseq
  %v3653 = vshrl.u32 %v3652, 7
  %v3654 = vsub.s32 0, %v3653
  %v3655 = vrot.slane %v3626, %v3654
  %v3656 = vlaneseq
  %v3657 = vshrl.u32 %v3656, 7
  %v3658 = vsub.s32 0, %v3657
  %v3659 = vrot.slane %v3640, %v3658
  %v3660 = vlaneseq
  %v3661 = vshrl.u32 %v3660, 7
  %v3662 = vsub.s32 0, %v3661
  %v3663 = vrot.slane %v3648, %v3662
  %v3664 = vlaneseq
  %v3665 = vshrl.u32 %v3664, 7
  %v3666 = vsub.s32 0, %v3665
  %v3667 = vrot.slane %v3650, %v3666
  %v3668 = vlaneseq
  %v3669 = vshrl.u32 %v3668, 7
  %v3670 = vsub.s32 0, %v3669
  %v3671 = vrot.slane %v3633, %v3670
  %v3672 = vlaneseq
  %v3673 = vshrl.u32 %v3672, 7
  %v3674 = vsub.s32 0, %v3673
  %v3675 = vrot.slane %v3647, %v3674
  %v3676 = vlaneseq
  %v3677 = vshrl.u32 %v3676, 7
  %v3678 = vsub.s32 0, %v3677
  %v3679 = vrot.slane %v3649, %v3678
  %v3680 = vlaneseq
  %v3681 = vshrl.u32 %v3680, 7
  %v3682 = vsub.s32 0, %v3681
  %v3683 = vrot.slane %v3651, %v3682
  %v3692 = vadd.f32 %v3655, %v1526
  %v3693 = vadd.f32 %v3659, %v1526
  %v3694 = vadd.f32 %v3663, %v1526
  %v3695 = vadd.f32 %v3667, %v1526
  %v3696 = vadd.f32 %v3671, %v1526
  %v3697 = vadd.f32 %v3675, %v1526
  %v3698 = vadd.f32 %v3679, %v1526
  %v3699 = vadd.f32 %v3683, %v1526
  %v3700 = vsel %vm1637, %v3692, -inf
  %3701 = vmax.xlane.f32.xlu0 %v3700
  %v3702 = vpop.xlane.xlu0 %3701
  %v3703 = vsel %vm1637, %v3693, -inf
  %3704 = vmax.xlane.f32.xlu0 %v3703
  %v3705 = vpop.xlane.xlu0 %3704
  %v3706 = vsel %vm1637, %v3694, -inf
  %3707 = vmax.xlane.f32.xlu0 %v3706
  %v3708 = vpop.xlane.xlu0 %3707
  %v3709 = vsel %vm1637, %v3695, -inf
  %3710 = vmax.xlane.f32.xlu0 %v3709
  %v3711 = vpop.xlane.xlu0 %3710
  %v3712 = vsel %vm1637, %v3696, -inf
  %3713 = vmax.xlane.f32.xlu0 %v3712
  %v3714 = vpop.xlane.xlu0 %3713
  %v3715 = vsel %vm1637, %v3697, -inf
  %3716 = vmax.xlane.f32.xlu0 %v3715
  %v3717 = vpop.xlane.xlu0 %3716
  %v3718 = vsel %vm1637, %v3698, -inf
  %3719 = vmax.xlane.f32.xlu0 %v3718
  %v3720 = vpop.xlane.xlu0 %3719
  %v3721 = vsel %vm1637, %v3699, -inf
  %3722 = vmax.xlane.f32.xlu0 %v3721
  %v3723 = vpop.xlane.xlu0 %3722
  %vm3724 = vcmp.ge.f32.partialorder %v3692, %v3702
  %vm3725 = vcmp.ge.f32.partialorder %v3693, %v3705
  %vm3726 = vcmp.ge.f32.partialorder %v3694, %v3708
  %vm3727 = vcmp.ge.f32.partialorder %v3695, %v3711
  %vm3728 = vcmp.ge.f32.partialorder %v3696, %v3714
  %vm3729 = vcmp.ge.f32.partialorder %v3697, %v3717
  %vm3730 = vcmp.ge.f32.partialorder %v3698, %v3720
  %vm3731 = vcmp.ge.f32.partialorder %v3699, %v3723
  %v3732 = vsel %vm3724, %v1529, 5
  %v3733 = vsel %vm3725, %v1529, 5
  %v3734 = vsel %vm3726, %v1529, 5
  %v3735 = vsel %vm3727, %v1529, 5
  %v3736 = vsel %vm3728, %v1529, 5
  %v3737 = vsel %vm3729, %v1529, 5
  %v3738 = vsel %vm3730, %v1529, 5
  %v3739 = vsel %vm3731, %v1529, 5
  %v3740 = vsel %vm1637, %v3732, 2147483647
  %v3741 = vand.u32 %v3740, 65535
  %v3742 = vshra.s32 %v3740, 16
  %v3743 = vcvt.s32.f32 %v3741
  %v3744 = vcvt.s32.f32 %v3742
  %3745 = vmin.xlane.f32.xlu0 %v3744
  %v3746 = vpop.xlane.xlu0 %3745
  %vm3747 = vcmp.eq.f32.partialorder %v3744, %v3746
  %v3748 = vsel %vm3747, %v3743, inf
  %3749 = vmin.xlane.f32.xlu0 %v3748
  %v3750 = vpop.xlane.xlu0 %3749
  %v3751 = vcvt.f32.s32 %v3750
  %v3752 = vcvt.f32.s32 %v3746
  %v3753 = vshll.u32 %v3752, 16
  %v3754 = vadd.s32 %v3753, %v3751
  %v3755 = vsel %vm1637, %v3733, 2147483647
  %v3756 = vand.u32 %v3755, 65535
  %v3757 = vshra.s32 %v3755, 16
  %v3758 = vcvt.s32.f32 %v3756
  %v3759 = vcvt.s32.f32 %v3757
  %3760 = vmin.xlane.f32.xlu0 %v3759
  %v3761 = vpop.xlane.xlu0 %3760
  %vm3762 = vcmp.eq.f32.partialorder %v3759, %v3761
  %v3763 = vsel %vm3762, %v3758, inf
  %3764 = vmin.xlane.f32.xlu0 %v3763
  %v3765 = vpop.xlane.xlu0 %3764
  %v3766 = vcvt.f32.s32 %v3765
  %v3767 = vcvt.f32.s32 %v3761
  %v3768 = vshll.u32 %v3767, 16
  %v3769 = vadd.s32 %v3768, %v3766
  %v3770 = vsel %vm1637, %v3734, 2147483647
  %v3771 = vand.u32 %v3770, 65535
  %v3772 = vshra.s32 %v3770, 16
  %v3773 = vcvt.s32.f32 %v3771
  %v3774 = vcvt.s32.f32 %v3772
  %3775 = vmin.xlane.f32.xlu0 %v3774
  %v3776 = vpop.xlane.xlu0 %3775
  %vm3777 = vcmp.eq.f32.partialorder %v3774, %v3776
  %v3778 = vsel %vm3777, %v3773, inf
  %3779 = vmin.xlane.f32.xlu0 %v3778
  %v3780 = vpop.xlane.xlu0 %3779
  %v3781 = vcvt.f32.s32 %v3780
  %v3782 = vcvt.f32.s32 %v3776
  %v3783 = vshll.u32 %v3782, 16
  %v3784 = vadd.s32 %v3783, %v3781
  %v3785 = vsel %vm1637, %v3735, 2147483647
  %v3786 = vand.u32 %v3785, 65535
  %v3787 = vshra.s32 %v3785, 16
  %v3788 = vcvt.s32.f32 %v3786
  %v3789 = vcvt.s32.f32 %v3787
  %3790 = vmin.xlane.f32.xlu0 %v3789
  %v3791 = vpop.xlane.xlu0 %3790
  %vm3792 = vcmp.eq.f32.partialorder %v3789, %v3791
  %v3793 = vsel %vm3792, %v3788, inf
  %3794 = vmin.xlane.f32.xlu0 %v3793
  %v3795 = vpop.xlane.xlu0 %3794
  %v3796 = vcvt.f32.s32 %v3795
  %v3797 = vcvt.f32.s32 %v3791
  %v3798 = vshll.u32 %v3797, 16
  %v3799 = vadd.s32 %v3798, %v3796
  %v3800 = vsel %vm1637, %v3736, 2147483647
  %v3801 = vand.u32 %v3800, 65535
  %v3802 = vshra.s32 %v3800, 16
  %v3803 = vcvt.s32.f32 %v3801
  %v3804 = vcvt.s32.f32 %v3802
  %3805 = vmin.xlane.f32.xlu0 %v3804
  %v3806 = vpop.xlane.xlu0 %3805
  %vm3807 = vcmp.eq.f32.partialorder %v3804, %v3806
  %v3808 = vsel %vm3807, %v3803, inf
  %3809 = vmin.xlane.f32.xlu0 %v3808
  %v3810 = vpop.xlane.xlu0 %3809
  %v3811 = vcvt.f32.s32 %v3810
  %v3812 = vcvt.f32.s32 %v3806
  %v3813 = vshll.u32 %v3812, 16
  %v3814 = vadd.s32 %v3813, %v3811
  %v3815 = vsel %vm1637, %v3737, 2147483647
  %v3816 = vand.u32 %v3815, 65535
  %v3817 = vshra.s32 %v3815, 16
  %v3818 = vcvt.s32.f32 %v3816
  %v3819 = vcvt.s32.f32 %v3817
  %3820 = vmin.xlane.f32.xlu0 %v3819
  %v3821 = vpop.xlane.xlu0 %3820
  %vm3822 = vcmp.eq.f32.partialorder %v3819, %v3821
  %v3823 = vsel %vm3822, %v3818, inf
  %3824 = vmin.xlane.f32.xlu0 %v3823
  %v3825 = vpop.xlane.xlu0 %3824
  %v3826 = vcvt.f32.s32 %v3825
  %v3827 = vcvt.f32.s32 %v3821
  %v3828 = vshll.u32 %v3827, 16
  %v3829 = vadd.s32 %v3828, %v3826
  %v3830 = vsel %vm1637, %v3738, 2147483647
  %v3831 = vand.u32 %v3830, 65535
  %v3832 = vshra.s32 %v3830, 16
  %v3833 = vcvt.s32.f32 %v3831
  %v3834 = vcvt.s32.f32 %v3832
  %3835 = vmin.xlane.f32.xlu0 %v3834
  %v3836 = vpop.xlane.xlu0 %3835
  %vm3837 = vcmp.eq.f32.partialorder %v3834, %v3836
  %v3838 = vsel %vm3837, %v3833, inf
  %3839 = vmin.xlane.f32.xlu0 %v3838
  %v3840 = vpop.xlane.xlu0 %3839
  %v3841 = vcvt.f32.s32 %v3840
  %v3842 = vcvt.f32.s32 %v3836
  %v3843 = vshll.u32 %v3842, 16
  %v3844 = vadd.s32 %v3843, %v3841
  %v3845 = vsel %vm1637, %v3739, 2147483647
  %v3846 = vand.u32 %v3845, 65535
  %v3847 = vshra.s32 %v3845, 16
  %v3848 = vcvt.s32.f32 %v3846
  %v3849 = vcvt.s32.f32 %v3847
  %3850 = vmin.xlane.f32.xlu0 %v3849
  %v3851 = vpop.xlane.xlu0 %3850
  %vm3852 = vcmp.eq.f32.partialorder %v3849, %v3851
  %v3853 = vsel %vm3852, %v3848, inf
  %3854 = vmin.xlane.f32.xlu0 %v3853
  %v3855 = vpop.xlane.xlu0 %3854
  %v3856 = vcvt.f32.s32 %v3855
  %v3857 = vcvt.f32.s32 %v3851
  %v3858 = vshll.u32 %v3857, 16
  %v3859 = vadd.s32 %v3858, %v3856
  %vm3860 = vcmp.gt.f32.partialorder %v3601, 0.5
  %v3862 = vlaneseq
  %v3863 = vshrl.u32 %v3862, 7
  %v3864 = vsub.s32 0, %v3863
  %v3865 = vrot.slane %v1515, %v3864
  %3867 = vbcast.lane.b32.xlu0 %v3865, 256
  %v3868 = vpop.permute.xlu0 %3867
  %v3869 = vlaneseq
  %v3870 = vshrl.u32 %v3869, 7
  %v3871 = vsub.s32 1, %v3870
  %v3872 = vrot.slane %v1515, %v3871
  %3874 = vbcast.lane.b32.xlu0 %v3872, 256
  %v3875 = vpop.permute.xlu0 %3874
  %v3876 = vlaneseq
  %v3877 = vshrl.u32 %v3876, 7
  %v3878 = vsub.s32 2, %v3877
  %v3879 = vrot.slane %v1515, %v3878
  %3881 = vbcast.lane.b32.xlu0 %v3879, 256
  %v3882 = vpop.permute.xlu0 %3881
  %v3883 = vlaneseq
  %v3884 = vshrl.u32 %v3883, 7
  %v3885 = vsub.s32 3, %v3884
  %v3886 = vrot.slane %v1515, %v3885
  %3888 = vbcast.lane.b32.xlu0 %v3886, 256
  %v3889 = vpop.permute.xlu0 %3888
  %v3890 = vlaneseq
  %v3891 = vshrl.u32 %v3890, 7
  %v3892 = vsub.s32 4, %v3891
  %v3893 = vrot.slane %v1515, %v3892
  %3895 = vbcast.lane.b32.xlu0 %v3893, 256
  %v3896 = vpop.permute.xlu0 %3895
  %v3897 = vlaneseq
  %v3898 = vshrl.u32 %v3897, 7
  %v3899 = vsub.s32 5, %v3898
  %v3900 = vrot.slane %v1515, %v3899
  %3902 = vbcast.lane.b32.xlu0 %v3900, 256
  %v3903 = vpop.permute.xlu0 %3902
  %v3904 = vlaneseq
  %v3905 = vshrl.u32 %v3904, 7
  %v3906 = vsub.s32 6, %v3905
  %v3907 = vrot.slane %v1515, %v3906
  %3909 = vbcast.lane.b32.xlu0 %v3907, 256
  %v3910 = vpop.permute.xlu0 %3909
  %v3911 = vlaneseq
  %v3912 = vshrl.u32 %v3911, 7
  %v3913 = vsub.s32 7, %v3912
  %v3914 = vrot.slane %v1515, %v3913
  %3916 = vbcast.lane.b32.xlu0 %v3914, 256
  %v3917 = vpop.permute.xlu0 %3916
  %v3926 = vadd.f32 %v3702, %v3868
  %v3927 = vadd.f32 %v3705, %v3875
  %v3928 = vadd.f32 %v3708, %v3882
  %v3929 = vadd.f32 %v3711, %v3889
  %v3930 = vadd.f32 %v3714, %v3896
  %v3931 = vadd.f32 %v3717, %v3903
  %v3932 = vadd.f32 %v3720, %v3910
  %v3933 = vadd.f32 %v3723, %v3917
  %v3934 = vsel %vm3860, 1, 0
  %3935 = vset.pattern.permute.xlu0 0
  %3936 = vperm.xlu0 %3935, %v3934
  %v3937 = vpop.permute.xlu0 %3936
  %vm3938 = vcmp.eq.s32.totalorder %v3937, 1
  %3947 = vset.pattern.permute.xlu0 0
  %3948 = vperm.xlu0 %3947, %v3926
  %v3949 = vpop.permute.xlu0 %3948
  %3950 = vset.pattern.permute.xlu0 0
  %3951 = vperm.xlu0 %3950, %v3927
  %v3952 = vpop.permute.xlu0 %3951
  %3953 = vset.pattern.permute.xlu0 0
  %3954 = vperm.xlu0 %3953, %v3928
  %v3955 = vpop.permute.xlu0 %3954
  %3956 = vset.pattern.permute.xlu0 0
  %3957 = vperm.xlu0 %3956, %v3929
  %v3958 = vpop.permute.xlu0 %3957
  %3959 = vset.pattern.permute.xlu0 0
  %3960 = vperm.xlu0 %3959, %v3930
  %v3961 = vpop.permute.xlu0 %3960
  %3962 = vset.pattern.permute.xlu0 0
  %3963 = vperm.xlu0 %3962, %v3931
  %v3964 = vpop.permute.xlu0 %3963
  %3965 = vset.pattern.permute.xlu0 0
  %3966 = vperm.xlu0 %3965, %v3932
  %v3967 = vpop.permute.xlu0 %3966
  %3968 = vset.pattern.permute.xlu0 0
  %3969 = vperm.xlu0 %3968, %v3933
  %v3970 = vpop.permute.xlu0 %3969
  %v3971 = vlaneseq
  %v3972 = vshrl.u32 %v3971, 7
  %v3973 = vsub.s32 %v1529, %v3972
  %v3974 = vrot.slane %v3949, %v3973
  %v3975 = vlaneseq
  %v3976 = vshrl.u32 %v3975, 7
  %v3977 = vsub.s32 %v1529, %v3976
  %v3978 = vrot.slane %v3952, %v3977
  %v3979 = vlaneseq
  %v3980 = vshrl.u32 %v3979, 7
  %v3981 = vsub.s32 %v1529, %v3980
  %v3982 = vrot.slane %v3955, %v3981
  %v3983 = vlaneseq
  %v3984 = vshrl.u32 %v3983, 7
  %v3985 = vsub.s32 %v1529, %v3984
  %v3986 = vrot.slane %v3958, %v3985
  %v3987 = vlaneseq
  %v3988 = vshrl.u32 %v3987, 7
  %v3989 = vsub.s32 %v1529, %v3988
  %v3990 = vrot.slane %v3961, %v3989
  %v3991 = vlaneseq
  %v3992 = vshrl.u32 %v3991, 7
  %v3993 = vsub.s32 %v1529, %v3992
  %v3994 = vrot.slane %v3964, %v3993
  %v3995 = vlaneseq
  %v3996 = vshrl.u32 %v3995, 7
  %v3997 = vsub.s32 %v1529, %v3996
  %v3998 = vrot.slane %v3967, %v3997
  %v3999 = vlaneseq
  %v4000 = vshrl.u32 %v3999, 7
  %v4001 = vsub.s32 %v1529, %v4000
  %v4002 = vrot.slane %v3970, %v4001
  %v4003 = vsel %vm1941, %v3978, %v3974
  %v4004 = vsel %vm1943, %v3982, %v4003
  %v4005 = vsel %vm1945, %v3986, %v4004
  %v4006 = vsel %vm1947, %v3990, %v4005
  %v4007 = vsel %vm1949, %v3994, %v4006
  %v4008 = vsel %vm1951, %v3998, %v4007
  %v4009 = vsel %vm1953, %v4002, %v4008
  %v4011 = vsel %vm3938, %v4009, %v3600
  %v4012 = vld [vmem:[%s196] sm:$0xff]
  %v4014 = vcombine.high %v4011, %v4011
  %v4016 = vunpack.c.l.s4 1966171168
  %v4017 = vunpack.c.0.s8 %v4016
  %v4018 = vlaneseq
  %v4019 = vshrl.u32 %v4018, 7
  %v4020 = vsub.s32 %v4017, %v4019
  %v4021 = vrot.slane %v4011, %v4020
  %v4023 = vunpack.c.l.s4 1966171168
  %v4024 = vunpack.c.0.s8 %v4023
  %v4025 = vlaneseq
  %v4026 = vshrl.u32 %v4025, 7
  %v4027 = vsub.s32 %v4024, %v4026
  %v4028 = vrot.slane %v4014, %v4027
  %v4029 = vcombine.high %v4021, %v4021
  %v4030 = vcombine.high %v4028, %v4028
  %v4032 = vunpack.c.l.s4 1966171168
  %v4033 = vunpack.c.0.s8 %v4032
  %v4034 = vlaneseq
  %v4035 = vshrl.u32 %v4034, 7
  %v4036 = vsub.s32 %v4033, %v4035
  %v4037 = vrot.slane %v4021, %v4036
  %v4039 = vunpack.c.l.s4 1966171168
  %v4040 = vunpack.c.0.s8 %v4039
  %v4041 = vlaneseq
  %v4042 = vshrl.u32 %v4041, 7
  %v4043 = vsub.s32 %v4040, %v4042
  %v4044 = vrot.slane %v4028, %v4043
  %v4046 = vunpack.c.l.s4 1966171168
  %v4047 = vunpack.c.0.s8 %v4046
  %v4048 = vlaneseq
  %v4049 = vshrl.u32 %v4048, 7
  %v4050 = vsub.s32 %v4047, %v4049
  %v4051 = vrot.slane %v4029, %v4050
  %v4053 = vunpack.c.l.s4 1966171168
  %v4054 = vunpack.c.0.s8 %v4053
  %v4055 = vlaneseq
  %v4056 = vshrl.u32 %v4055, 7
  %v4057 = vsub.s32 %v4054, %v4056
  %v4058 = vrot.slane %v4030, %v4057
  %v4059 = vcombine.high %v4037, %v4037
  %v4060 = vcombine.high %v4044, %v4044
  %v4061 = vcombine.high %v4051, %v4051
  %v4062 = vcombine.high %v4058, %v4058
  %v4063 = vlaneseq
  %v4064 = vshrl.u32 %v4063, 7
  %v4065 = vsub.s32 0, %v4064
  %v4066 = vrot.slane %v4037, %v4065
  %v4067 = vlaneseq
  %v4068 = vshrl.u32 %v4067, 7
  %v4069 = vsub.s32 0, %v4068
  %v4070 = vrot.slane %v4051, %v4069
  %v4071 = vlaneseq
  %v4072 = vshrl.u32 %v4071, 7
  %v4073 = vsub.s32 0, %v4072
  %v4074 = vrot.slane %v4059, %v4073
  %v4075 = vlaneseq
  %v4076 = vshrl.u32 %v4075, 7
  %v4077 = vsub.s32 0, %v4076
  %v4078 = vrot.slane %v4061, %v4077
  %v4079 = vlaneseq
  %v4080 = vshrl.u32 %v4079, 7
  %v4081 = vsub.s32 0, %v4080
  %v4082 = vrot.slane %v4044, %v4081
  %v4083 = vlaneseq
  %v4084 = vshrl.u32 %v4083, 7
  %v4085 = vsub.s32 0, %v4084
  %v4086 = vrot.slane %v4058, %v4085
  %v4087 = vlaneseq
  %v4088 = vshrl.u32 %v4087, 7
  %v4089 = vsub.s32 0, %v4088
  %v4090 = vrot.slane %v4060, %v4089
  %v4091 = vlaneseq
  %v4092 = vshrl.u32 %v4091, 7
  %v4093 = vsub.s32 0, %v4092
  %v4094 = vrot.slane %v4062, %v4093
  %v4103 = vadd.f32 %v4066, %v1526
  %v4104 = vadd.f32 %v4070, %v1526
  %v4105 = vadd.f32 %v4074, %v1526
  %v4106 = vadd.f32 %v4078, %v1526
  %v4107 = vadd.f32 %v4082, %v1526
  %v4108 = vadd.f32 %v4086, %v1526
  %v4109 = vadd.f32 %v4090, %v1526
  %v4110 = vadd.f32 %v4094, %v1526
  %v4111 = vsel %vm1637, %v4103, -inf
  %4112 = vmax.xlane.f32.xlu0 %v4111
  %v4113 = vpop.xlane.xlu0 %4112
  %v4114 = vsel %vm1637, %v4104, -inf
  %4115 = vmax.xlane.f32.xlu0 %v4114
  %v4116 = vpop.xlane.xlu0 %4115
  %v4117 = vsel %vm1637, %v4105, -inf
  %4118 = vmax.xlane.f32.xlu0 %v4117
  %v4119 = vpop.xlane.xlu0 %4118
  %v4120 = vsel %vm1637, %v4106, -inf
  %4121 = vmax.xlane.f32.xlu0 %v4120
  %v4122 = vpop.xlane.xlu0 %4121
  %v4123 = vsel %vm1637, %v4107, -inf
  %4124 = vmax.xlane.f32.xlu0 %v4123
  %v4125 = vpop.xlane.xlu0 %4124
  %v4126 = vsel %vm1637, %v4108, -inf
  %4127 = vmax.xlane.f32.xlu0 %v4126
  %v4128 = vpop.xlane.xlu0 %4127
  %v4129 = vsel %vm1637, %v4109, -inf
  %4130 = vmax.xlane.f32.xlu0 %v4129
  %v4131 = vpop.xlane.xlu0 %4130
  %v4132 = vsel %vm1637, %v4110, -inf
  %4133 = vmax.xlane.f32.xlu0 %v4132
  %v4134 = vpop.xlane.xlu0 %4133
  %vm4135 = vcmp.ge.f32.partialorder %v4103, %v4113
  %vm4136 = vcmp.ge.f32.partialorder %v4104, %v4116
  %vm4137 = vcmp.ge.f32.partialorder %v4105, %v4119
  %vm4138 = vcmp.ge.f32.partialorder %v4106, %v4122
  %vm4139 = vcmp.ge.f32.partialorder %v4107, %v4125
  %vm4140 = vcmp.ge.f32.partialorder %v4108, %v4128
  %vm4141 = vcmp.ge.f32.partialorder %v4109, %v4131
  %vm4142 = vcmp.ge.f32.partialorder %v4110, %v4134
  %v4143 = vsel %vm4135, %v1529, 5
  %v4144 = vsel %vm4136, %v1529, 5
  %v4145 = vsel %vm4137, %v1529, 5
  %v4146 = vsel %vm4138, %v1529, 5
  %v4147 = vsel %vm4139, %v1529, 5
  %v4148 = vsel %vm4140, %v1529, 5
  %v4149 = vsel %vm4141, %v1529, 5
  %v4150 = vsel %vm4142, %v1529, 5
  %v4151 = vsel %vm1637, %v4143, 2147483647
  %v4152 = vand.u32 %v4151, 65535
  %v4153 = vshra.s32 %v4151, 16
  %v4154 = vcvt.s32.f32 %v4152
  %v4155 = vcvt.s32.f32 %v4153
  %4156 = vmin.xlane.f32.xlu0 %v4155
  %v4157 = vpop.xlane.xlu0 %4156
  %vm4158 = vcmp.eq.f32.partialorder %v4155, %v4157
  %v4159 = vsel %vm4158, %v4154, inf
  %4160 = vmin.xlane.f32.xlu0 %v4159
  %v4161 = vpop.xlane.xlu0 %4160
  %v4162 = vcvt.f32.s32 %v4161
  %v4163 = vcvt.f32.s32 %v4157
  %v4164 = vshll.u32 %v4163, 16
  %v4165 = vadd.s32 %v4164, %v4162
  %v4166 = vsel %vm1637, %v4144, 2147483647
  %v4167 = vand.u32 %v4166, 65535
  %v4168 = vshra.s32 %v4166, 16
  %v4169 = vcvt.s32.f32 %v4167
  %v4170 = vcvt.s32.f32 %v4168
  %4171 = vmin.xlane.f32.xlu0 %v4170
  %v4172 = vpop.xlane.xlu0 %4171
  %vm4173 = vcmp.eq.f32.partialorder %v4170, %v4172
  %v4174 = vsel %vm4173, %v4169, inf
  %4175 = vmin.xlane.f32.xlu0 %v4174
  %v4176 = vpop.xlane.xlu0 %4175
  %v4177 = vcvt.f32.s32 %v4176
  %v4178 = vcvt.f32.s32 %v4172
  %v4179 = vshll.u32 %v4178, 16
  %v4180 = vadd.s32 %v4179, %v4177
  %v4181 = vsel %vm1637, %v4145, 2147483647
  %v4182 = vand.u32 %v4181, 65535
  %v4183 = vshra.s32 %v4181, 16
  %v4184 = vcvt.s32.f32 %v4182
  %v4185 = vcvt.s32.f32 %v4183
  %4186 = vmin.xlane.f32.xlu0 %v4185
  %v4187 = vpop.xlane.xlu0 %4186
  %vm4188 = vcmp.eq.f32.partialorder %v4185, %v4187
  %v4189 = vsel %vm4188, %v4184, inf
  %4190 = vmin.xlane.f32.xlu0 %v4189
  %v4191 = vpop.xlane.xlu0 %4190
  %v4192 = vcvt.f32.s32 %v4191
  %v4193 = vcvt.f32.s32 %v4187
  %v4194 = vshll.u32 %v4193, 16
  %v4195 = vadd.s32 %v4194, %v4192
  %v4196 = vsel %vm1637, %v4146, 2147483647
  %v4197 = vand.u32 %v4196, 65535
  %v4198 = vshra.s32 %v4196, 16
  %v4199 = vcvt.s32.f32 %v4197
  %v4200 = vcvt.s32.f32 %v4198
  %4201 = vmin.xlane.f32.xlu0 %v4200
  %v4202 = vpop.xlane.xlu0 %4201
  %vm4203 = vcmp.eq.f32.partialorder %v4200, %v4202
  %v4204 = vsel %vm4203, %v4199, inf
  %4205 = vmin.xlane.f32.xlu0 %v4204
  %v4206 = vpop.xlane.xlu0 %4205
  %v4207 = vcvt.f32.s32 %v4206
  %v4208 = vcvt.f32.s32 %v4202
  %v4209 = vshll.u32 %v4208, 16
  %v4210 = vadd.s32 %v4209, %v4207
  %v4211 = vsel %vm1637, %v4147, 2147483647
  %v4212 = vand.u32 %v4211, 65535
  %v4213 = vshra.s32 %v4211, 16
  %v4214 = vcvt.s32.f32 %v4212
  %v4215 = vcvt.s32.f32 %v4213
  %4216 = vmin.xlane.f32.xlu0 %v4215
  %v4217 = vpop.xlane.xlu0 %4216
  %vm4218 = vcmp.eq.f32.partialorder %v4215, %v4217
  %v4219 = vsel %vm4218, %v4214, inf
  %4220 = vmin.xlane.f32.xlu0 %v4219
  %v4221 = vpop.xlane.xlu0 %4220
  %v4222 = vcvt.f32.s32 %v4221
  %v4223 = vcvt.f32.s32 %v4217
  %v4224 = vshll.u32 %v4223, 16
  %v4225 = vadd.s32 %v4224, %v4222
  %v4226 = vsel %vm1637, %v4148, 2147483647
  %v4227 = vand.u32 %v4226, 65535
  %v4228 = vshra.s32 %v4226, 16
  %v4229 = vcvt.s32.f32 %v4227
  %v4230 = vcvt.s32.f32 %v4228
  %4231 = vmin.xlane.f32.xlu0 %v4230
  %v4232 = vpop.xlane.xlu0 %4231
  %vm4233 = vcmp.eq.f32.partialorder %v4230, %v4232
  %v4234 = vsel %vm4233, %v4229, inf
  %4235 = vmin.xlane.f32.xlu0 %v4234
  %v4236 = vpop.xlane.xlu0 %4235
  %v4237 = vcvt.f32.s32 %v4236
  %v4238 = vcvt.f32.s32 %v4232
  %v4239 = vshll.u32 %v4238, 16
  %v4240 = vadd.s32 %v4239, %v4237
  %v4241 = vsel %vm1637, %v4149, 2147483647
  %v4242 = vand.u32 %v4241, 65535
  %v4243 = vshra.s32 %v4241, 16
  %v4244 = vcvt.s32.f32 %v4242
  %v4245 = vcvt.s32.f32 %v4243
  %4246 = vmin.xlane.f32.xlu0 %v4245
  %v4247 = vpop.xlane.xlu0 %4246
  %vm4248 = vcmp.eq.f32.partialorder %v4245, %v4247
  %v4249 = vsel %vm4248, %v4244, inf
  %4250 = vmin.xlane.f32.xlu0 %v4249
  %v4251 = vpop.xlane.xlu0 %4250
  %v4252 = vcvt.f32.s32 %v4251
  %v4253 = vcvt.f32.s32 %v4247
  %v4254 = vshll.u32 %v4253, 16
  %v4255 = vadd.s32 %v4254, %v4252
  %v4256 = vsel %vm1637, %v4150, 2147483647
  %v4257 = vand.u32 %v4256, 65535
  %v4258 = vshra.s32 %v4256, 16
  %v4259 = vcvt.s32.f32 %v4257
  %v4260 = vcvt.s32.f32 %v4258
  %4261 = vmin.xlane.f32.xlu0 %v4260
  %v4262 = vpop.xlane.xlu0 %4261
  %vm4263 = vcmp.eq.f32.partialorder %v4260, %v4262
  %v4264 = vsel %vm4263, %v4259, inf
  %4265 = vmin.xlane.f32.xlu0 %v4264
  %v4266 = vpop.xlane.xlu0 %4265
  %v4267 = vcvt.f32.s32 %v4266
  %v4268 = vcvt.f32.s32 %v4262
  %v4269 = vshll.u32 %v4268, 16
  %v4270 = vadd.s32 %v4269, %v4267
  %vm4271 = vcmp.gt.f32.partialorder %v4012, 0.5
  %v4273 = vlaneseq
  %v4274 = vshrl.u32 %v4273, 7
  %v4275 = vsub.s32 0, %v4274
  %v4276 = vrot.slane %v1516, %v4275
  %4278 = vbcast.lane.b32.xlu0 %v4276, 256
  %v4279 = vpop.permute.xlu0 %4278
  %v4280 = vlaneseq
  %v4281 = vshrl.u32 %v4280, 7
  %v4282 = vsub.s32 1, %v4281
  %v4283 = vrot.slane %v1516, %v4282
  %4285 = vbcast.lane.b32.xlu0 %v4283, 256
  %v4286 = vpop.permute.xlu0 %4285
  %v4287 = vlaneseq
  %v4288 = vshrl.u32 %v4287, 7
  %v4289 = vsub.s32 2, %v4288
  %v4290 = vrot.slane %v1516, %v4289
  %4292 = vbcast.lane.b32.xlu0 %v4290, 256
  %v4293 = vpop.permute.xlu0 %4292
  %v4294 = vlaneseq
  %v4295 = vshrl.u32 %v4294, 7
  %v4296 = vsub.s32 3, %v4295
  %v4297 = vrot.slane %v1516, %v4296
  %4299 = vbcast.lane.b32.xlu0 %v4297, 256
  %v4300 = vpop.permute.xlu0 %4299
  %v4301 = vlaneseq
  %v4302 = vshrl.u32 %v4301, 7
  %v4303 = vsub.s32 4, %v4302
  %v4304 = vrot.slane %v1516, %v4303
  %4306 = vbcast.lane.b32.xlu0 %v4304, 256
  %v4307 = vpop.permute.xlu0 %4306
  %v4308 = vlaneseq
  %v4309 = vshrl.u32 %v4308, 7
  %v4310 = vsub.s32 5, %v4309
  %v4311 = vrot.slane %v1516, %v4310
  %4313 = vbcast.lane.b32.xlu0 %v4311, 256
  %v4314 = vpop.permute.xlu0 %4313
  %v4315 = vlaneseq
  %v4316 = vshrl.u32 %v4315, 7
  %v4317 = vsub.s32 6, %v4316
  %v4318 = vrot.slane %v1516, %v4317
  %4320 = vbcast.lane.b32.xlu0 %v4318, 256
  %v4321 = vpop.permute.xlu0 %4320
  %v4322 = vlaneseq
  %v4323 = vshrl.u32 %v4322, 7
  %v4324 = vsub.s32 7, %v4323
  %v4325 = vrot.slane %v1516, %v4324
  %4327 = vbcast.lane.b32.xlu0 %v4325, 256
  %v4328 = vpop.permute.xlu0 %4327
  %v4337 = vadd.f32 %v4113, %v4279
  %v4338 = vadd.f32 %v4116, %v4286
  %v4339 = vadd.f32 %v4119, %v4293
  %v4340 = vadd.f32 %v4122, %v4300
  %v4341 = vadd.f32 %v4125, %v4307
  %v4342 = vadd.f32 %v4128, %v4314
  %v4343 = vadd.f32 %v4131, %v4321
  %v4344 = vadd.f32 %v4134, %v4328
  %v4345 = vsel %vm4271, 1, 0
  %4346 = vset.pattern.permute.xlu0 0
  %4347 = vperm.xlu0 %4346, %v4345
  %v4348 = vpop.permute.xlu0 %4347
  %vm4349 = vcmp.eq.s32.totalorder %v4348, 1
  %4358 = vset.pattern.permute.xlu0 0
  %4359 = vperm.xlu0 %4358, %v4337
  %v4360 = vpop.permute.xlu0 %4359
  %4361 = vset.pattern.permute.xlu0 0
  %4362 = vperm.xlu0 %4361, %v4338
  %v4363 = vpop.permute.xlu0 %4362
  %4364 = vset.pattern.permute.xlu0 0
  %4365 = vperm.xlu0 %4364, %v4339
  %v4366 = vpop.permute.xlu0 %4365
  %4367 = vset.pattern.permute.xlu0 0
  %4368 = vperm.xlu0 %4367, %v4340
  %v4369 = vpop.permute.xlu0 %4368
  %4370 = vset.pattern.permute.xlu0 0
  %4371 = vperm.xlu0 %4370, %v4341
  %v4372 = vpop.permute.xlu0 %4371
  %4373 = vset.pattern.permute.xlu0 0
  %4374 = vperm.xlu0 %4373, %v4342
  %v4375 = vpop.permute.xlu0 %4374
  %4376 = vset.pattern.permute.xlu0 0
  %4377 = vperm.xlu0 %4376, %v4343
  %v4378 = vpop.permute.xlu0 %4377
  %4379 = vset.pattern.permute.xlu0 0
  %4380 = vperm.xlu0 %4379, %v4344
  %v4381 = vpop.permute.xlu0 %4380
  %v4382 = vlaneseq
  %v4383 = vshrl.u32 %v4382, 7
  %v4384 = vsub.s32 %v1529, %v4383
  %v4385 = vrot.slane %v4360, %v4384
  %v4386 = vlaneseq
  %v4387 = vshrl.u32 %v4386, 7
  %v4388 = vsub.s32 %v1529, %v4387
  %v4389 = vrot.slane %v4363, %v4388
  %v4390 = vlaneseq
  %v4391 = vshrl.u32 %v4390, 7
  %v4392 = vsub.s32 %v1529, %v4391
  %v4393 = vrot.slane %v4366, %v4392
  %v4394 = vlaneseq
  %v4395 = vshrl.u32 %v4394, 7
  %v4396 = vsub.s32 %v1529, %v4395
  %v4397 = vrot.slane %v4369, %v4396
  %v4398 = vlaneseq
  %v4399 = vshrl.u32 %v4398, 7
  %v4400 = vsub.s32 %v1529, %v4399
  %v4401 = vrot.slane %v4372, %v4400
  %v4402 = vlaneseq
  %v4403 = vshrl.u32 %v4402, 7
  %v4404 = vsub.s32 %v1529, %v4403
  %v4405 = vrot.slane %v4375, %v4404
  %v4406 = vlaneseq
  %v4407 = vshrl.u32 %v4406, 7
  %v4408 = vsub.s32 %v1529, %v4407
  %v4409 = vrot.slane %v4378, %v4408
  %v4410 = vlaneseq
  %v4411 = vshrl.u32 %v4410, 7
  %v4412 = vsub.s32 %v1529, %v4411
  %v4413 = vrot.slane %v4381, %v4412
  %v4414 = vsel %vm1941, %v4389, %v4385
  %v4415 = vsel %vm1943, %v4393, %v4414
  %v4416 = vsel %vm1945, %v4397, %v4415
  %v4417 = vsel %vm1947, %v4401, %v4416
  %v4418 = vsel %vm1949, %v4405, %v4417
  %v4419 = vsel %vm1951, %v4409, %v4418
  %v4420 = vsel %vm1953, %v4413, %v4419
  %v4422 = vsel %vm4349, %v4420, %v4011
  %v4423 = vld [vmem:[%s10] sm:$0x1]
  %v4425 = vlaneseq
  %v4426 = vshrl.u32 %v4425, 7
  %v4427 = vsub.s32 0, %v4426
  %v4428 = vrot.slane %v4423, %v4427
  %v4430 = vadd.f32 %v4422, %v4428
  %v4431 = vsel %vm1517, %v4430, -inf
  %4432 = vmax.xlane.f32.xlu0 %v4431
  %v4433 = vpop.xlane.xlu0 %4432
  %vm4434 = vcmp.ge.f32.partialorder %v4430, %v4433
  %v4435 = vsel %vm4434, %v1529, 5
  %v4436 = vsel %vm1517, %v4435, 2147483647
  %v4437 = vand.u32 %v4436, 65535
  %v4438 = vshra.s32 %v4436, 16
  %v4439 = vcvt.s32.f32 %v4437
  %v4440 = vcvt.s32.f32 %v4438
  %4441 = vmin.xlane.f32.xlu0 %v4440
  %v4442 = vpop.xlane.xlu0 %4441
  %vm4443 = vcmp.eq.f32.partialorder %v4440, %v4442
  %v4444 = vsel %vm4443, %v4439, inf
  %4445 = vmin.xlane.f32.xlu0 %v4444
  %v4446 = vpop.xlane.xlu0 %4445
  %v4447 = vcvt.f32.s32 %v4446
  %v4448 = vcvt.f32.s32 %v4442
  %v4449 = vshll.u32 %v4448, 16
  %v4450 = vadd.s32 %v4449, %v4447
  %vm4451 = vcmp.eq.s32.totalorder %v1527, 7
  %v4452 = vsel %vm4451, %v4450, 4294967295
  %4453 = vset.pattern.permute.xlu0 0
  %4454 = vperm.xlu0 %4453, %v4452
  %v4455 = vpop.permute.xlu0 %4454
  %vm4456 = vcmp.eq.s32.totalorder %v1529, %v4455
  %v4457 = vlaneseq
  %v4458 = vshrl.u32 %v4457, 7
  %v4459 = vsub.s32 %v1529, %v4458
  %v4460 = vrot.slane %v4165, %v4459
  %v4461 = vlaneseq
  %v4462 = vshrl.u32 %v4461, 7
  %v4463 = vsub.s32 %v1529, %v4462
  %v4464 = vrot.slane %v4180, %v4463
  %v4465 = vlaneseq
  %v4466 = vshrl.u32 %v4465, 7
  %v4467 = vsub.s32 %v1529, %v4466
  %v4468 = vrot.slane %v4195, %v4467
  %v4469 = vlaneseq
  %v4470 = vshrl.u32 %v4469, 7
  %v4471 = vsub.s32 %v1529, %v4470
  %v4472 = vrot.slane %v4210, %v4471
  %v4473 = vlaneseq
  %v4474 = vshrl.u32 %v4473, 7
  %v4475 = vsub.s32 %v1529, %v4474
  %v4476 = vrot.slane %v4225, %v4475
  %v4477 = vlaneseq
  %v4478 = vshrl.u32 %v4477, 7
  %v4479 = vsub.s32 %v1529, %v4478
  %v4480 = vrot.slane %v4240, %v4479
  %v4481 = vlaneseq
  %v4482 = vshrl.u32 %v4481, 7
  %v4483 = vsub.s32 %v1529, %v4482
  %v4484 = vrot.slane %v4255, %v4483
  %v4485 = vlaneseq
  %v4486 = vshrl.u32 %v4485, 7
  %v4487 = vsub.s32 %v1529, %v4486
  %v4488 = vrot.slane %v4270, %v4487
  %v4489 = vsel %vm1941, %v4464, %v4460
  %v4490 = vsel %vm1943, %v4468, %v4489
  %v4491 = vsel %vm1945, %v4472, %v4490
  %v4492 = vsel %vm1947, %v4476, %v4491
  %v4493 = vsel %vm1949, %v4480, %v4492
  %v4494 = vsel %vm1951, %v4484, %v4493
  %v4495 = vsel %vm1953, %v4488, %v4494
  %v4496 = vsel %vm4456, %v4495, 0
  %v4497 = vsel %vm1517, %v4496, 0
  %v4498 = vand.u32 %v4497, 65535
  %v4499 = vshrl.u32 %v4497, 16
  %v4500 = vcvt.s32.f32 %v4498
  %v4501 = vcvt.s32.f32 %v4499
  %4502 = vadd.xlane.f32.xlu0 %v4500
  %v4503 = vpop.xlane.xlu0 %4502
  %4504 = vadd.xlane.f32.xlu0 %v4501
  %v4505 = vpop.xlane.xlu0 %4504
  %v4506 = vcvt.f32.s32 %v4503
  %v4507 = vcvt.f32.s32 %v4505
  %v4508 = vshll.u32 %v4507, 16
  %v4509 = vadd.s32 %v4508, %v4506
  %vm4510 = vcmp.eq.s32.totalorder %v1527, 6
  %vm4511 = vcmp.gt.s32.totalorder %v1527, 6
  %v4512 = vsel %vm4511, %v4509, 4294967295
  %v4513 = vsel %vm4510, %v4450, %v4512
  %4514 = vset.pattern.permute.xlu0 0
  %4515 = vperm.xlu0 %4514, %v4513
  %v4516 = vpop.permute.xlu0 %4515
  %vm4517 = vcmp.eq.s32.totalorder %v1529, %v4516
  %v4518 = vlaneseq
  %v4519 = vshrl.u32 %v4518, 7
  %v4520 = vsub.s32 %v1529, %v4519
  %v4521 = vrot.slane %v3754, %v4520
  %v4522 = vlaneseq
  %v4523 = vshrl.u32 %v4522, 7
  %v4524 = vsub.s32 %v1529, %v4523
  %v4525 = vrot.slane %v3769, %v4524
  %v4526 = vlaneseq
  %v4527 = vshrl.u32 %v4526, 7
  %v4528 = vsub.s32 %v1529, %v4527
  %v4529 = vrot.slane %v3784, %v4528
  %v4530 = vlaneseq
  %v4531 = vshrl.u32 %v4530, 7
  %v4532 = vsub.s32 %v1529, %v4531
  %v4533 = vrot.slane %v3799, %v4532
  %v4534 = vlaneseq
  %v4535 = vshrl.u32 %v4534, 7
  %v4536 = vsub.s32 %v1529, %v4535
  %v4537 = vrot.slane %v3814, %v4536
  %v4538 = vlaneseq
  %v4539 = vshrl.u32 %v4538, 7
  %v4540 = vsub.s32 %v1529, %v4539
  %v4541 = vrot.slane %v3829, %v4540
  %v4542 = vlaneseq
  %v4543 = vshrl.u32 %v4542, 7
  %v4544 = vsub.s32 %v1529, %v4543
  %v4545 = vrot.slane %v3844, %v4544
  %v4546 = vlaneseq
  %v4547 = vshrl.u32 %v4546, 7
  %v4548 = vsub.s32 %v1529, %v4547
  %v4549 = vrot.slane %v3859, %v4548
  %v4550 = vsel %vm1941, %v4525, %v4521
  %v4551 = vsel %vm1943, %v4529, %v4550
  %v4552 = vsel %vm1945, %v4533, %v4551
  %v4553 = vsel %vm1947, %v4537, %v4552
  %v4554 = vsel %vm1949, %v4541, %v4553
  %v4555 = vsel %vm1951, %v4545, %v4554
  %v4556 = vsel %vm1953, %v4549, %v4555
  %v4557 = vsel %vm4517, %v4556, 0
  %v4558 = vsel %vm1517, %v4557, 0
  %v4559 = vand.u32 %v4558, 65535
  %v4560 = vshrl.u32 %v4558, 16
  %v4561 = vcvt.s32.f32 %v4559
  %v4562 = vcvt.s32.f32 %v4560
  %4563 = vadd.xlane.f32.xlu0 %v4561
  %v4564 = vpop.xlane.xlu0 %4563
  %4565 = vadd.xlane.f32.xlu0 %v4562
  %v4566 = vpop.xlane.xlu0 %4565
  %v4567 = vcvt.f32.s32 %v4564
  %v4568 = vcvt.f32.s32 %v4566
  %v4569 = vshll.u32 %v4568, 16
  %v4570 = vadd.s32 %v4569, %v4567
  %vm4571 = vcmp.eq.s32.totalorder %v1527, 5
  %vm4572 = vcmp.gt.s32.totalorder %v1527, 5
  %v4573 = vsel %vm4572, %v4570, 4294967295
  %v4574 = vsel %vm4571, %v4450, %v4573
  %4575 = vset.pattern.permute.xlu0 0
  %4576 = vperm.xlu0 %4575, %v4574
  %v4577 = vpop.permute.xlu0 %4576
  %vm4578 = vcmp.eq.s32.totalorder %v1529, %v4577
  %v4579 = vlaneseq
  %v4580 = vshrl.u32 %v4579, 7
  %v4581 = vsub.s32 %v1529, %v4580
  %v4582 = vrot.slane %v3343, %v4581
  %v4583 = vlaneseq
  %v4584 = vshrl.u32 %v4583, 7
  %v4585 = vsub.s32 %v1529, %v4584
  %v4586 = vrot.slane %v3358, %v4585
  %v4587 = vlaneseq
  %v4588 = vshrl.u32 %v4587, 7
  %v4589 = vsub.s32 %v1529, %v4588
  %v4590 = vrot.slane %v3373, %v4589
  %v4591 = vlaneseq
  %v4592 = vshrl.u32 %v4591, 7
  %v4593 = vsub.s32 %v1529, %v4592
  %v4594 = vrot.slane %v3388, %v4593
  %v4595 = vlaneseq
  %v4596 = vshrl.u32 %v4595, 7
  %v4597 = vsub.s32 %v1529, %v4596
  %v4598 = vrot.slane %v3403, %v4597
  %v4599 = vlaneseq
  %v4600 = vshrl.u32 %v4599, 7
  %v4601 = vsub.s32 %v1529, %v4600
  %v4602 = vrot.slane %v3418, %v4601
  %v4603 = vlaneseq
  %v4604 = vshrl.u32 %v4603, 7
  %v4605 = vsub.s32 %v1529, %v4604
  %v4606 = vrot.slane %v3433, %v4605
  %v4607 = vlaneseq
  %v4608 = vshrl.u32 %v4607, 7
  %v4609 = vsub.s32 %v1529, %v4608
  %v4610 = vrot.slane %v3448, %v4609
  %v4611 = vsel %vm1941, %v4586, %v4582
  %v4612 = vsel %vm1943, %v4590, %v4611
  %v4613 = vsel %vm1945, %v4594, %v4612
  %v4614 = vsel %vm1947, %v4598, %v4613
  %v4615 = vsel %vm1949, %v4602, %v4614
  %v4616 = vsel %vm1951, %v4606, %v4615
  %v4617 = vsel %vm1953, %v4610, %v4616
  %v4618 = vsel %vm4578, %v4617, 0
  %v4619 = vsel %vm1517, %v4618, 0
  %v4620 = vand.u32 %v4619, 65535
  %v4621 = vshrl.u32 %v4619, 16
  %v4622 = vcvt.s32.f32 %v4620
  %v4623 = vcvt.s32.f32 %v4621
  %4624 = vadd.xlane.f32.xlu0 %v4622
  %v4625 = vpop.xlane.xlu0 %4624
  %4626 = vadd.xlane.f32.xlu0 %v4623
  %v4627 = vpop.xlane.xlu0 %4626
  %v4628 = vcvt.f32.s32 %v4625
  %v4629 = vcvt.f32.s32 %v4627
  %v4630 = vshll.u32 %v4629, 16
  %v4631 = vadd.s32 %v4630, %v4628
  %vm4632 = vcmp.eq.s32.totalorder %v1527, 4
  %vm4633 = vcmp.gt.s32.totalorder %v1527, 4
  %v4634 = vsel %vm4633, %v4631, 4294967295
  %v4635 = vsel %vm4632, %v4450, %v4634
  %4636 = vset.pattern.permute.xlu0 0
  %4637 = vperm.xlu0 %4636, %v4635
  %v4638 = vpop.permute.xlu0 %4637
  %vm4639 = vcmp.eq.s32.totalorder %v1529, %v4638
  %v4640 = vlaneseq
  %v4641 = vshrl.u32 %v4640, 7
  %v4642 = vsub.s32 %v1529, %v4641
  %v4643 = vrot.slane %v2932, %v4642
  %v4644 = vlaneseq
  %v4645 = vshrl.u32 %v4644, 7
  %v4646 = vsub.s32 %v1529, %v4645
  %v4647 = vrot.slane %v2947, %v4646
  %v4648 = vlaneseq
  %v4649 = vshrl.u32 %v4648, 7
  %v4650 = vsub.s32 %v1529, %v4649
  %v4651 = vrot.slane %v2962, %v4650
  %v4652 = vlaneseq
  %v4653 = vshrl.u32 %v4652, 7
  %v4654 = vsub.s32 %v1529, %v4653
  %v4655 = vrot.slane %v2977, %v4654
  %v4656 = vlaneseq
  %v4657 = vshrl.u32 %v4656, 7
  %v4658 = vsub.s32 %v1529, %v4657
  %v4659 = vrot.slane %v2992, %v4658
  %v4660 = vlaneseq
  %v4661 = vshrl.u32 %v4660, 7
  %v4662 = vsub.s32 %v1529, %v4661
  %v4663 = vrot.slane %v3007, %v4662
  %v4664 = vlaneseq
  %v4665 = vshrl.u32 %v4664, 7
  %v4666 = vsub.s32 %v1529, %v4665
  %v4667 = vrot.slane %v3022, %v4666
  %v4668 = vlaneseq
  %v4669 = vshrl.u32 %v4668, 7
  %v4670 = vsub.s32 %v1529, %v4669
  %v4671 = vrot.slane %v3037, %v4670
  %v4672 = vsel %vm1941, %v4647, %v4643
  %v4673 = vsel %vm1943, %v4651, %v4672
  %v4674 = vsel %vm1945, %v4655, %v4673
  %v4675 = vsel %vm1947, %v4659, %v4674
  %v4676 = vsel %vm1949, %v4663, %v4675
  %v4677 = vsel %vm1951, %v4667, %v4676
  %v4678 = vsel %vm1953, %v4671, %v4677
  %v4679 = vsel %vm4639, %v4678, 0
  %v4680 = vsel %vm1517, %v4679, 0
  %v4681 = vand.u32 %v4680, 65535
  %v4682 = vshrl.u32 %v4680, 16
  %v4683 = vcvt.s32.f32 %v4681
  %v4684 = vcvt.s32.f32 %v4682
  %4685 = vadd.xlane.f32.xlu0 %v4683
  %v4686 = vpop.xlane.xlu0 %4685
  %4687 = vadd.xlane.f32.xlu0 %v4684
  %v4688 = vpop.xlane.xlu0 %4687
  %v4689 = vcvt.f32.s32 %v4686
  %v4690 = vcvt.f32.s32 %v4688
  %v4691 = vshll.u32 %v4690, 16
  %v4692 = vadd.s32 %v4691, %v4689
  %vm4693 = vcmp.eq.s32.totalorder %v1527, 3
  %vm4694 = vcmp.gt.s32.totalorder %v1527, 3
  %v4695 = vsel %vm4694, %v4692, 4294967295
  %v4696 = vsel %vm4693, %v4450, %v4695
  %4697 = vset.pattern.permute.xlu0 0
  %4698 = vperm.xlu0 %4697, %v4696
  %v4699 = vpop.permute.xlu0 %4698
  %vm4700 = vcmp.eq.s32.totalorder %v1529, %v4699
  %v4701 = vlaneseq
  %v4702 = vshrl.u32 %v4701, 7
  %v4703 = vsub.s32 %v1529, %v4702
  %v4704 = vrot.slane %v2521, %v4703
  %v4705 = vlaneseq
  %v4706 = vshrl.u32 %v4705, 7
  %v4707 = vsub.s32 %v1529, %v4706
  %v4708 = vrot.slane %v2536, %v4707
  %v4709 = vlaneseq
  %v4710 = vshrl.u32 %v4709, 7
  %v4711 = vsub.s32 %v1529, %v4710
  %v4712 = vrot.slane %v2551, %v4711
  %v4713 = vlaneseq
  %v4714 = vshrl.u32 %v4713, 7
  %v4715 = vsub.s32 %v1529, %v4714
  %v4716 = vrot.slane %v2566, %v4715
  %v4717 = vlaneseq
  %v4718 = vshrl.u32 %v4717, 7
  %v4719 = vsub.s32 %v1529, %v4718
  %v4720 = vrot.slane %v2581, %v4719
  %v4721 = vlaneseq
  %v4722 = vshrl.u32 %v4721, 7
  %v4723 = vsub.s32 %v1529, %v4722
  %v4724 = vrot.slane %v2596, %v4723
  %v4725 = vlaneseq
  %v4726 = vshrl.u32 %v4725, 7
  %v4727 = vsub.s32 %v1529, %v4726
  %v4728 = vrot.slane %v2611, %v4727
  %v4729 = vlaneseq
  %v4730 = vshrl.u32 %v4729, 7
  %v4731 = vsub.s32 %v1529, %v4730
  %v4732 = vrot.slane %v2626, %v4731
  %v4733 = vsel %vm1941, %v4708, %v4704
  %v4734 = vsel %vm1943, %v4712, %v4733
  %v4735 = vsel %vm1945, %v4716, %v4734
  %v4736 = vsel %vm1947, %v4720, %v4735
  %v4737 = vsel %vm1949, %v4724, %v4736
  %v4738 = vsel %vm1951, %v4728, %v4737
  %v4739 = vsel %vm1953, %v4732, %v4738
  %v4740 = vsel %vm4700, %v4739, 0
  %v4741 = vsel %vm1517, %v4740, 0
  %v4742 = vand.u32 %v4741, 65535
  %v4743 = vshrl.u32 %v4741, 16
  %v4744 = vcvt.s32.f32 %v4742
  %v4745 = vcvt.s32.f32 %v4743
  %4746 = vadd.xlane.f32.xlu0 %v4744
  %v4747 = vpop.xlane.xlu0 %4746
  %4748 = vadd.xlane.f32.xlu0 %v4745
  %v4749 = vpop.xlane.xlu0 %4748
  %v4750 = vcvt.f32.s32 %v4747
  %v4751 = vcvt.f32.s32 %v4749
  %v4752 = vshll.u32 %v4751, 16
  %v4753 = vadd.s32 %v4752, %v4750
  %vm4754 = vcmp.eq.s32.totalorder %v1527, 2
  %vm4755 = vcmp.gt.s32.totalorder %v1527, 2
  %v4756 = vsel %vm4755, %v4753, 4294967295
  %v4757 = vsel %vm4754, %v4450, %v4756
  %4758 = vset.pattern.permute.xlu0 0
  %4759 = vperm.xlu0 %4758, %v4757
  %v4760 = vpop.permute.xlu0 %4759
  %vm4761 = vcmp.eq.s32.totalorder %v1529, %v4760
  %v4762 = vlaneseq
  %v4763 = vshrl.u32 %v4762, 7
  %v4764 = vsub.s32 %v1529, %v4763
  %v4765 = vrot.slane %v2110, %v4764
  %v4766 = vlaneseq
  %v4767 = vshrl.u32 %v4766, 7
  %v4768 = vsub.s32 %v1529, %v4767
  %v4769 = vrot.slane %v2125, %v4768
  %v4770 = vlaneseq
  %v4771 = vshrl.u32 %v4770, 7
  %v4772 = vsub.s32 %v1529, %v4771
  %v4773 = vrot.slane %v2140, %v4772
  %v4774 = vlaneseq
  %v4775 = vshrl.u32 %v4774, 7
  %v4776 = vsub.s32 %v1529, %v4775
  %v4777 = vrot.slane %v2155, %v4776
  %v4778 = vlaneseq
  %v4779 = vshrl.u32 %v4778, 7
  %v4780 = vsub.s32 %v1529, %v4779
  %v4781 = vrot.slane %v2170, %v4780
  %v4782 = vlaneseq
  %v4783 = vshrl.u32 %v4782, 7
  %v4784 = vsub.s32 %v1529, %v4783
  %v4785 = vrot.slane %v2185, %v4784
  %v4786 = vlaneseq
  %v4787 = vshrl.u32 %v4786, 7
  %v4788 = vsub.s32 %v1529, %v4787
  %v4789 = vrot.slane %v2200, %v4788
  %v4790 = vlaneseq
  %v4791 = vshrl.u32 %v4790, 7
  %v4792 = vsub.s32 %v1529, %v4791
  %v4793 = vrot.slane %v2215, %v4792
  %v4794 = vsel %vm1941, %v4769, %v4765
  %v4795 = vsel %vm1943, %v4773, %v4794
  %v4796 = vsel %vm1945, %v4777, %v4795
  %v4797 = vsel %vm1947, %v4781, %v4796
  %v4798 = vsel %vm1949, %v4785, %v4797
  %v4799 = vsel %vm1951, %v4789, %v4798
  %v4800 = vsel %vm1953, %v4793, %v4799
  %v4801 = vsel %vm4761, %v4800, 0
  %v4802 = vsel %vm1517, %v4801, 0
  %v4803 = vand.u32 %v4802, 65535
  %v4804 = vshrl.u32 %v4802, 16
  %v4805 = vcvt.s32.f32 %v4803
  %v4806 = vcvt.s32.f32 %v4804
  %4807 = vadd.xlane.f32.xlu0 %v4805
  %v4808 = vpop.xlane.xlu0 %4807
  %4809 = vadd.xlane.f32.xlu0 %v4806
  %v4810 = vpop.xlane.xlu0 %4809
  %v4811 = vcvt.f32.s32 %v4808
  %v4812 = vcvt.f32.s32 %v4810
  %v4813 = vshll.u32 %v4812, 16
  %v4814 = vadd.s32 %v4813, %v4811
  %vm4815 = vcmp.eq.s32.totalorder %v1527, 1
  %vm4816 = vcmp.gt.s32.totalorder %v1527, 1
  %v4817 = vsel %vm4816, %v4814, 4294967295
  %v4818 = vsel %vm4815, %v4450, %v4817
  %4819 = vset.pattern.permute.xlu0 0
  %4820 = vperm.xlu0 %4819, %v4818
  %v4821 = vpop.permute.xlu0 %4820
  %vm4822 = vcmp.eq.s32.totalorder %v1529, %v4821
  %v4823 = vlaneseq
  %v4824 = vshrl.u32 %v4823, 7
  %v4825 = vsub.s32 %v1529, %v4824
  %v4826 = vrot.slane %v1692, %v4825
  %v4827 = vlaneseq
  %v4828 = vshrl.u32 %v4827, 7
  %v4829 = vsub.s32 %v1529, %v4828
  %v4830 = vrot.slane %v1707, %v4829
  %v4831 = vlaneseq
  %v4832 = vshrl.u32 %v4831, 7
  %v4833 = vsub.s32 %v1529, %v4832
  %v4834 = vrot.slane %v1722, %v4833
  %v4835 = vlaneseq
  %v4836 = vshrl.u32 %v4835, 7
  %v4837 = vsub.s32 %v1529, %v4836
  %v4838 = vrot.slane %v1737, %v4837
  %v4839 = vlaneseq
  %v4840 = vshrl.u32 %v4839, 7
  %v4841 = vsub.s32 %v1529, %v4840
  %v4842 = vrot.slane %v1752, %v4841
  %v4843 = vlaneseq
  %v4844 = vshrl.u32 %v4843, 7
  %v4845 = vsub.s32 %v1529, %v4844
  %v4846 = vrot.slane %v1767, %v4845
  %v4847 = vlaneseq
  %v4848 = vshrl.u32 %v4847, 7
  %v4849 = vsub.s32 %v1529, %v4848
  %v4850 = vrot.slane %v1782, %v4849
  %v4851 = vlaneseq
  %v4852 = vshrl.u32 %v4851, 7
  %v4853 = vsub.s32 %v1529, %v4852
  %v4854 = vrot.slane %v1797, %v4853
  %v4855 = vsel %vm1941, %v4830, %v4826
  %v4856 = vsel %vm1943, %v4834, %v4855
  %v4857 = vsel %vm1945, %v4838, %v4856
  %v4858 = vsel %vm1947, %v4842, %v4857
  %v4859 = vsel %vm1949, %v4846, %v4858
  %v4860 = vsel %vm1951, %v4850, %v4859
  %v4861 = vsel %vm1953, %v4854, %v4860
  %v4862 = vsel %vm4822, %v4861, 0
  %v4863 = vsel %vm1517, %v4862, 0
  %v4864 = vand.u32 %v4863, 65535
  %v4865 = vshrl.u32 %v4863, 16
  %v4866 = vcvt.s32.f32 %v4864
  %v4867 = vcvt.s32.f32 %v4865
  %4868 = vadd.xlane.f32.xlu0 %v4866
  %v4869 = vpop.xlane.xlu0 %4868
  %4870 = vadd.xlane.f32.xlu0 %v4867
  %v4871 = vpop.xlane.xlu0 %4870
  %v4872 = vcvt.f32.s32 %v4869
  %v4873 = vcvt.f32.s32 %v4871
  %v4874 = vshll.u32 %v4873, 16
  %v4875 = vadd.s32 %v4874, %v4872
  %vm4876 = vcmp.eq.s32.totalorder %v1527, 0
  %vm4877 = vcmp.gt.s32.totalorder %v1527, 0
  %v4878 = vsel %vm4877, %v4875, 4294967295
  %v4879 = vsel %vm4876, %v4450, %v4878
  %4880 = vrot.lane.b32.xlu0 %v4818, 1
  %v4881 = vpop.permute.xlu0 %4880
  %4882 = vrot.lane.b32.xlu0 %v4757, 2
  %v4883 = vpop.permute.xlu0 %4882
  %4884 = vrot.lane.b32.xlu0 %v4696, 3
  %v4885 = vpop.permute.xlu0 %4884
  %4886 = vrot.lane.b32.xlu0 %v4635, 4
  %v4887 = vpop.permute.xlu0 %4886
  %4888 = vrot.lane.b32.xlu0 %v4574, 5
  %v4889 = vpop.permute.xlu0 %4888
  %4890 = vrot.lane.b32.xlu0 %v4513, 6
  %v4891 = vpop.permute.xlu0 %4890
  %4892 = vrot.lane.b32.xlu0 %v4452, 7
  %v4893 = vpop.permute.xlu0 %4892
  %vm4894 = vcmask 7168
  %v4895 = vsel %vm4894, %v4879, %v4881
  %vm4896 = vcmask 15360
  %v4897 = vsel %vm4896, %v4895, %v4883
  %vm4898 = vcmask 23552
  %v4899 = vsel %vm4898, %v4897, %v4885
  %vm4900 = vcmask 31744
  %v4901 = vsel %vm4900, %v4899, %v4887
  %v4902 = vsel %vm1517, %v4901, %v4889
  %vm4903 = vcmask 48128
  %v4904 = vsel %vm4903, %v4902, %v4891
  %vm4905 = vcmask 56320
  %v4906 = vsel %vm4905, %v4904, %v4893
  %vm4907 = vcmask 64512
  %4908 = vst.msk [vmem:[%s13] sm:$0xff] %vm4907, %v4906
  // Predicated region
  $region50: #{bilstm_crf_forward.1} parent=0 // pred_check
    _
  $region51: #{bilstm_crf_forward.1} parent=0 // pred_check_branch
    %4910 = sbr.rel (0) target = $region53
  $region52: #{bilstm_crf_forward.1} parent=0 // pred_region
    _
  $region53: #{bilstm_crf_forward.1} parent=0 // pred_fallthru
    _
  // Predicated region
  $region54: #{bilstm_crf_forward.1} parent=0 // pred_check
    _
  $region55: #{bilstm_crf_forward.1} parent=0 // pred_check_branch
    %4912 = sbr.rel (0) target = $region57
  $region56: #{bilstm_crf_forward.1} parent=0 // pred_region
    _
  $region57: #{bilstm_crf_forward.1} parent=0 // pred_fallthru
    _
  // Predicated region
  $region58: #{bilstm_crf_forward.1} parent=0 // pred_check
    _
  $region59: #{bilstm_crf_forward.1} parent=0 // pred_check_branch
    %4914 = sbr.rel (0) target = $region61
  $region60: #{bilstm_crf_forward.1} parent=0 // pred_region
    _
  $region61: #{bilstm_crf_forward.1} parent=0 // pred_fallthru
    _
  // Predicated region
  $region62: #{bilstm_crf_forward.1} parent=0 // pred_check
    _
  $region63: #{bilstm_crf_forward.1} parent=0 // pred_check_branch
    %4916 = sbr.rel (0) target = $region65
  $region64: #{bilstm_crf_forward.1} parent=0 // pred_region
    _
  $region65: #{bilstm_crf_forward.1} parent=0 // pred_fallthru
    _

</llo_original>
